<compile_context>
chip_gen: v7x
topology: tpu7x:2x2x1
jax: 0.10.0
libtpu: 0.0.40
codegen_flags: <defaults>
</compile_context>

<pallas_src>
import functools

import numpy as np
import jax
import jax.numpy as jnp
from jax import lax
from jax.experimental import pallas as pl
from jax.experimental.pallas import tpu as pltpu

# Deterministic in-script "PARAMS" (mirrors PARAMS['HD_IGNORE_CLASS_INDEX'],
# PARAMS['IGNORE_FAILED_HD'] in the module __init__).
IGNORE_CLASS_INDEX = 0
IGNORE_FAILED_HD = False

_BIG = 1e30  # added to non-target rows of d^2 before the min-reduce


# ----------------------------- Pallas kernel ------------------------------ #
def _hausdorff_kernel(rows_ref, pen_ref, out_ref, acc_ref, *,
                      C, HW, TQ, n_chunks, ignore_class_index, fallback):
    """Per batch element: standard + modified Hausdorff distance for C classes.

    rows_ref : (4*C + 2, HW)  lane-dense rows: per class [a, b, bnd_a, bnd_b],
               then pixel row-coordinate and col-coordinate rows.
    pen_ref  : (HW, 2*C + 2)  sublane-major: per class [pen_bb, pen_ba]
               (0 on target pixels, BIG elsewhere), then row/col coordinate
               columns.
    out_ref  : (C, 128)       lane 0 = standard HD, lane 1 = modified HD.
    acc_ref  : (2*C, HW)      running min of d^2 to each class's target sets.
    """
    f32 = jnp.float32

    # Re-init running-min accumulators (scratch persists across grid steps).
    acc_ref[...] = jnp.full(acc_ref.shape, _BIG, dtype=f32)

    # Source-pixel coordinates, lane-dense (1, HW) (precomputed, no div/mod).
    row_p = rows_ref[4 * C:4 * C + 1, :]
    col_p = rows_ref[4 * C + 1:4 * C + 2, :]

    def do_chunk(q0):
        # Target-pixel penalty + coordinate columns for this chunk, (TQ, 2C+2).
        pen_chunk = pen_ref[pl.ds(q0, TQ), :]
        row_q = pen_chunk[:, 2 * C:2 * C + 1]          # (TQ, 1)
        col_q = pen_chunk[:, 2 * C + 1:2 * C + 2]      # (TQ, 1)

        # d2[q, p]: q = target pixel (sublanes), p = source pixel (lanes).
        # Generated once per chunk, reused for both target sets of all classes.
        dr = row_q - row_p                              # (TQ, HW)
        dc = col_q - col_p
        d2 = dr * dr + dc * dc

        for c in range(C):
            if c == ignore_class_index:
                continue
            # Penalty columns are 0 on target pixels, BIG elsewhere; the add
            # broadcasts down lanes and feeds straight into the sublane min.
            m_bb = jnp.min(d2 + pen_chunk[:, 2 * c:2 * c + 1],
                           axis=0, keepdims=True)       # (1, HW)
            m_ba = jnp.min(d2 + pen_chunk[:, 2 * c + 1:2 * c + 2],
                           axis=0, keepdims=True)
            acc_ref[2 * c:2 * c + 1, :] = jnp.minimum(
                acc_ref[2 * c:2 * c + 1, :], m_bb)
            acc_ref[2 * c + 1:2 * c + 2, :] = jnp.minimum(
                acc_ref[2 * c + 1:2 * c + 2, :], m_ba)

    if n_chunks == 1:
        do_chunk(0)
    else:
        def body(step, carry):
            do_chunk(pl.multiple_of(step * TQ, TQ))
            return carry
        lax.fori_loop(0, n_chunks, body, 0)

    # Lane-dense output rows: lane 0 = standard HD, lane 1 (..127) = modified.
    lane = lax.broadcasted_iota(jnp.int32, (1, 128), 1)

    for c in range(C):
        if c == ignore_class_index:
            out_ref[c:c + 1, :] = jnp.zeros((1, 128), dtype=out_ref.dtype)
            continue

        a = rows_ref[4 * c + 0:4 * c + 1, :]        # (1, HW) prediction one-hot
        b = rows_ref[4 * c + 1:4 * c + 2, :]        # (1, HW) label one-hot
        bnd_a = rows_ref[4 * c + 2:4 * c + 3, :]    # (1, HW) get_boundary(a)
        bnd_b = rows_ref[4 * c + 3:4 * c + 4, :]    # (1, HW) get_boundary(b)

        # sqrt deferred to the two (1, HW) min vectors (EUP, cheap).
        dmin_bb = jnp.sqrt(acc_ref[2 * c:2 * c + 1, :])
        dmin_ba = jnp.sqrt(acc_ref[2 * c + 1:2 * c + 2, :])

        # Point-set masks (== np.argwhere(... != 0) in the reference).
        s1 = (bnd_a * (1.0 - b)) != 0.0     # std HD sources: boundary(a)*(1-b)
        s2 = (a * (1.0 - b)) != 0.0         # modified HD fwd sources
        s3 = (b * (1.0 - a)) != 0.0         # modified HD bwd sources

        def count(mask):
            return jnp.sum(mask.astype(f32), axis=1, keepdims=True)   # (1, 1)

        cnt_s1, cnt_s2, cnt_s3 = count(s1), count(s2), count(s3)
        cnt_tb = count(bnd_b != 0.0)
        cnt_ta = count(bnd_a != 0.0)
        cnt_a = count(a != 0.0)
        cnt_b = count(b != 0.0)

        # Standard Hausdorff: max over sources of min distance to targets.
        std_raw = jnp.max(jnp.where(s1, dmin_bb, -1.0), axis=1, keepdims=True)
        std_val = jnp.where(jnp.logical_and(cnt_s1 > 0, cnt_tb > 0),
                            std_raw, fallback)

        # Modified Hausdorff: mean(min dist)*|src|/|img| == sum(min dist)/|img|.
        fwd_sum = jnp.sum(jnp.where(s2, dmin_bb, 0.0), axis=1, keepdims=True)
        bwd_sum = jnp.sum(jnp.where(s3, dmin_ba, 0.0), axis=1, keepdims=True)
        fwd = jnp.where(jnp.logical_and(cnt_s2 > 0, cnt_tb > 0),
                        fwd_sum / jnp.maximum(cnt_a, 1.0), 0.0)
        bwd = jnp.where(jnp.logical_and(cnt_s3 > 0, cnt_ta > 0),
                        bwd_sum / jnp.maximum(cnt_b, 1.0), 0.0)
        mod_val = jnp.where(cnt_a > 0, jnp.maximum(fwd, bwd), fallback)

        out_ref[c:c + 1, :] = jnp.where(lane == 0, std_val,
                                        mod_val).astype(out_ref.dtype)


# ------------------------------ JAX wrapper -------------------------------- #
def _get_boundary_nchw(img):
    """get_boundary() of the reference, vectorized over (N, C, H, W) (H == W)."""
    down = jnp.pad(img[..., 1:, :], ((0, 0), (0, 0), (0, 1), (0, 0)))
    up = jnp.pad(img[..., :-1, :], ((0, 0), (0, 0), (1, 0), (0, 0)))
    right = jnp.pad(img[..., :, 1:], ((0, 0), (0, 0), (0, 0), (0, 1)))
    left = jnp.pad(img[..., :, :-1], ((0, 0), (0, 0), (0, 0), (1, 0)))
    new = img + down + up + right + left
    return img * (5.0 - new)


def _pick_chunk(hw, dense_cap=512, chunk_cap=128):
    """Target-pixel chunk size: whole image if small, else a divisor of HW
    (preferring multiples of 8) no bigger than chunk_cap — bounds the live
    (TQ, HW) temporaries so large images fit v7x's 64 MiB VMEM."""
    if hw <= dense_cap:
        return hw
    best = None
    for t in range(min(chunk_cap, hw), 0, -1):
        if hw % t == 0:
            if t % 8 == 0:
                return t
            if best is None:
                best = t
    return best if best is not None else hw


def all_hausdorff_distances_binary_image(masks_pred, masks_true,
                                         ignore_class_index=IGNORE_CLASS_INDEX,
                                         ignore_failed_hd=IGNORE_FAILED_HD):
    """Equivalent of All_Hausdorff_Distances_Binary_Image.forward.

    masks_pred: (N, C, H, W) float logits/probs; masks_true: (N, C, H, W) one-hot.
    Returns [total_HD] with total_HD of shape (N, 2, C + 2) float32.
    """
    N, C, H, W = masks_pred.shape
    # get_boundary() in the reference uses img.shape[0] for both axes -> square only.
    assert H == W, "reference get_boundary assumes square images"
    HW = H * W

    pred_lbl = jnp.argmax(masks_pred, axis=1)                               # (N, H, W)
    A = jnp.transpose(jax.nn.one_hot(pred_lbl, C, dtype=jnp.float32), (0, 3, 1, 2))
    B = masks_true.astype(jnp.float32)

    bnd_A = _get_boundary_nchw(A)
    bnd_B = _get_boundary_nchw(B)

    # Pixel coordinates (exact in f32 for integer offsets).
    pix = jnp.arange(HW, dtype=jnp.int32)
    row_coord = (pix // W).astype(jnp.float32)
    col_coord = (pix % W).astype(jnp.float32)
    coords = jnp.stack([row_coord, col_coord], axis=0)                      # (2, HW)
    coords_n = jnp.broadcast_to(coords[None], (N, 2, HW))

    # Packed lane-dense rows: per class [a, b, bnd_a, bnd_b] then coord rows.
    rows4 = jnp.stack([A.reshape(N, C, HW), B.reshape(N, C, HW),
                       bnd_A.reshape(N, C, HW), bnd_B.reshape(N, C, HW)],
                      axis=2).reshape(N, 4 * C, HW)
    rows_packed = jnp.concatenate([rows4, coords_n], axis=1)                # (N, 4C+2, HW)

    # Packed sublane-major columns: per class [pen_bb, pen_ba] then coord cols.
    pen_bb = jnp.where(bnd_B != 0.0, 0.0, _BIG).reshape(N, C, HW)
    pen_ba = jnp.where(bnd_A != 0.0, 0.0, _BIG).reshape(N, C, HW)
    pen_rows = jnp.stack([pen_bb, pen_ba], axis=2).reshape(N, 2 * C, HW)
    pen_packed = jnp.transpose(jnp.concatenate([pen_rows, coords_n], axis=1),
                               (0, 2, 1))                                   # (N, HW, 2C+2)

    TQ = _pick_chunk(HW)
    n_chunks = HW // TQ

    fallback = float("nan") if ignore_failed_hd else (H + W) / 4.0
    kernel = functools.partial(_hausdorff_kernel,
                               C=C, HW=HW, TQ=TQ, n_chunks=n_chunks,
                               ignore_class_index=ignore_class_index,
                               fallback=fallback)

    # VMEM budget: double-buffered packed inputs/outputs (with sublane/lane
    # padding), running-min scratch, and live (TQ, HW) chunk temporaries.
    def rup(x, m):
        return (x + m - 1) // m * m
    vmem_est = (2 * (rup(4 * C + 2, 8) * HW * 4            # rows block x2 bufs
                     + HW * rup(2 * C + 2, 128) * 4        # pen block x2 bufs
                     + rup(C, 8) * 128 * 4)                # out block x2 bufs
                + rup(2 * C, 8) * HW * 4                   # accumulator scratch
                + 8 * TQ * HW * 4                          # chunk temporaries
                + (2 << 20))                               # headroom
    cp_kwargs = dict(dimension_semantics=("parallel",))
    if vmem_est > (16 << 20):
        try:
            cap = int(pltpu.get_tpu_info().vmem_capacity_bytes)
        except Exception:
            cap = 64 << 20                                  # conservative (v7x)
        cp_kwargs["vmem_limit_bytes"] = int(
            min(vmem_est, max(cap - (6 << 20), 16 << 20)))
    compiler_params = pltpu.CompilerParams(**cp_kwargs)

    per_class = pl.pallas_call(
        kernel,
        out_shape=jax.ShapeDtypeStruct((N, C, 128), jnp.float32),
        grid=(N,),
        in_specs=[
            pl.BlockSpec((None, 4 * C + 2, HW), lambda i: (i, 0, 0)),
            pl.BlockSpec((None, HW, 2 * C + 2), lambda i: (i, 0, 0)),
        ],
        out_specs=pl.BlockSpec((None, C, 128), lambda i: (i, 0, 0)),
        scratch_shapes=[pltpu.VMEM((2 * C, HW), jnp.float32)],
        compiler_params=compiler_params,
    )(rows_packed, pen_packed)

    hd_cls = per_class[:, :, 0]          # (N, C) standard HD per class
    mhd_cls = per_class[:, :, 1]         # (N, C) modified HD per class

    def with_means(x):                   # append HD[:, -2] and HD[:, -1] columns
        m_all = jnp.mean(x, axis=1, keepdims=True)                # mean of all C cols
        m_front = jnp.mean(x[:, : C - 1], axis=1, keepdims=True)  # mean of first C-1
        return jnp.concatenate([x, m_all, m_front], axis=1)       # (N, C+2)

    HD = with_means(hd_cls)
    mod_HD = with_means(mhd_cls)
    total_HD = jnp.stack([HD, mod_HD], axis=1)                    # (N, 2, C+2)
    return [total_HD]


# --------------------------- NumPy reference ------------------------------- #
def _np_get_boundary(img):
    new = np.copy(img)
    new[:img.shape[0] - 1, :] += img[1:, :]
    new[1:, :] += img[:img.shape[0] - 1, :]
    new[:, :img.shape[0] - 1] += img[:, 1:]
    new[:, 1:] += img[:, :img.shape[0] - 1]
    return img * (5 - new)


def _np_cdist(a, b):
    d = a[:, None, :].astype(np.float64) - b[None, :, :].astype(np.float64)
    return np.sqrt((d ** 2).sum(-1))


def _np_all_hausdorff(masks_pred, masks_true, ignore_class_index, ignore_failed_hd):
    N, C, H, W = masks_pred.shape
    lbl = np.argmax(masks_pred, axis=1)
    A = np.transpose(np.eye(C, dtype=np.float32)[lbl], (0, 3, 1, 2))
    B = masks_true.astype(np.float32)

    def std_hd():
        HD = np.zeros((N, C + 2), np.float32)
        for i in range(N):
            for j in range(C):
                if j == ignore_class_index:
                    continue
                a, b = A[i, j], B[i, j]
                ba = _np_get_boundary(a) * (1 - b)
                bb = _np_get_boundary(b)
                la, lb = np.argwhere(ba), np.argwhere(bb)
                if len(la) > 0 and len(lb) > 0:
                    HD[i, j] = np.max(np.min(_np_cdist(la, lb), axis=1))
                elif ignore_failed_hd:
                    HD[i, j] = np.nan
                else:
                    HD[i, j] = (H + W) / 4
        HD[:, -2] = np.mean(HD[:, :-2], axis=1)
        HD[:, -1] = np.mean(HD[:, :-3], axis=1)
        return HD

    def mod_hd():
        HD = np.zeros((N, C + 2), np.float32)
        for i in range(N):
            for j in range(C):
                if j == ignore_class_index:
                    continue
                a, b = A[i, j], B[i, j]
                if not np.any(a):
                    HD[i, j] = np.nan if ignore_failed_hd else (H + W) / 4
                    continue
                laf = np.argwhere(a * (1 - b))
                lbf = np.argwhere(_np_get_boundary(b))
                lbb = np.argwhere(b * (1 - a))
                lab = np.argwhere(_np_get_boundary(a))
                if len(laf) > 0 and len(lbf) > 0:
                    fwd = (np.mean(np.min(_np_cdist(laf, lbf), axis=1)) *
                           len(laf) / len(np.argwhere(a)))
                else:
                    fwd = 0.0
                if len(lbb) > 0 and len(lab) > 0:
                    bwd = (np.mean(np.min(_np_cdist(lbb, lab), axis=1)) *
                           len(lbb) / len(np.argwhere(b)))
                else:
                    bwd = 0.0
                HD[i, j] = max(fwd, bwd)
        HD[:, -2] = np.mean(HD[:, :-2], axis=1)
        HD[:, -1] = np.mean(HD[:, :-3], axis=1)
        return HD

    return np.stack([std_hd(), mod_hd()], axis=1)


# --------------------------------- main ------------------------------------ #
if __name__ == "__main__":
    key = jax.random.PRNGKey(0)
    k1, k2, k3 = jax.random.split(key, 3)
    N, C, H, W = 2, 4, 16, 16

    masks_pred = jax.random.normal(k1, (N, C, H, W), dtype=jnp.float32)
    # Batch 0 ground truth deliberately misses class C-1 to exercise fallbacks.
    lbl0 = jax.random.randint(k2, (1, H, W), 0, C - 1)
    lbl1 = jax.random.randint(k3, (1, H, W), 0, C)
    labels = jnp.concatenate([lbl0, lbl1], axis=0)
    masks_true = jnp.transpose(jax.nn.one_hot(labels, C, dtype=jnp.float32),
                               (0, 3, 1, 2))

    total_HD = all_hausdorff_distances_binary_image(masks_pred, masks_true)[0]
    total_HD = jax.block_until_ready(total_HD)

    ref = _np_all_hausdorff(np.asarray(masks_pred), np.asarray(masks_true),
                            IGNORE_CLASS_INDEX, IGNORE_FAILED_HD)
    assert total_HD.shape == (N, 2, C + 2)
    np.testing.assert_allclose(np.asarray(total_HD), ref, rtol=1e-4, atol=1e-4)
    print("KERNEL_OK")
</pallas_src>

<mosaic_0001>
module attributes {stable_mosaic.version = 11 : i64} {
  func.func @_hausdorff_kernel(%arg0: i32, %arg1: memref<1x18x256xf32, #tpu.memory_space<vmem>>, %arg2: memref<1x256x10xf32, #tpu.memory_space<vmem>>, %arg3: memref<1x4x128xf32, #tpu.memory_space<vmem>>, %arg4: memref<8x256xf32, #tpu.memory_space<vmem>>) attributes {dimension_semantics = [#tpu.dimension_semantics<parallel>], iteration_bounds = array<i64: 2>, scalar_prefetch = 0 : i64, scratch_operands = 1 : i64, tpu.core_type = #tpu.core_type<tc>, window_params = [{transform_indices = @transform_0, window_bounds = array<i64: 1, 18, 256>}, {transform_indices = @transform_1, window_bounds = array<i64: 1, 256, 10>}, {transform_indices = @transform_2, window_bounds = array<i64: 1, 4, 128>}]} {
    %cst = arith.constant 1.000000e+30 : f32
    %0 = vector.broadcast %cst : f32 to vector<8x256xf32>
    %c0 = arith.constant 0 : index
    %c0_0 = arith.constant 0 : index
    %1 = vector.load %arg4[%c0, %c0_0] : memref<8x256xf32, #tpu.memory_space<vmem>>, vector<8x256xf32>
    tpu.vector_store %arg4[%c0, %c0_0], %0 {strides = array<i32>} : memref<8x256xf32, #tpu.memory_space<vmem>>, vector<8x256xf32>,
    %c0_1 = arith.constant 0 : index
    %c16 = arith.constant 16 : index
    %c0_2 = arith.constant 0 : index
    %2 = vector.load %arg1[%c0_1, %c16, %c0_2] : memref<1x18x256xf32, #tpu.memory_space<vmem>>, vector<1x1x256xf32>
    %3 = vector.shape_cast %2 : vector<1x1x256xf32> to vector<1x256xf32>
    %c0_3 = arith.constant 0 : index
    %c17 = arith.constant 17 : index
    %c0_4 = arith.constant 0 : index
    %4 = vector.load %arg1[%c0_3, %c17, %c0_4] : memref<1x18x256xf32, #tpu.memory_space<vmem>>, vector<1x1x256xf32>
    %5 = vector.shape_cast %4 : vector<1x1x256xf32> to vector<1x256xf32>
    %c0_5 = arith.constant 0 : index
    %c0_6 = arith.constant 0 : index
    %c0_7 = arith.constant 0 : index
    %6 = vector.load %arg2[%c0_5, %c0_6, %c0_7] : memref<1x256x10xf32, #tpu.memory_space<vmem>>, vector<1x256x10xf32>
    %7 = vector.shape_cast %6 : vector<1x256x10xf32> to vector<256x10xf32>
    %8 = vector.extract_strided_slice %7 {offsets = [0, 8], sizes = [256, 1], strides = [1, 1]} : vector<256x10xf32> to vector<256x1xf32>
    %9 = vector.extract_strided_slice %7 {offsets = [0, 9], sizes = [256, 1], strides = [1, 1]} : vector<256x10xf32> to vector<256x1xf32>
    %10 = vector.broadcast %8 : vector<256x1xf32> to vector<256x256xf32>
    %11 = vector.broadcast %3 : vector<1x256xf32> to vector<256x256xf32>
    %12 = arith.subf %10, %11 : vector<256x256xf32>
    %13 = vector.broadcast %9 : vector<256x1xf32> to vector<256x256xf32>
    %14 = vector.broadcast %5 : vector<1x256xf32> to vector<256x256xf32>
    %15 = arith.subf %13, %14 : vector<256x256xf32>
    %16 = arith.mulf %12, %12 : vector<256x256xf32>
    %17 = arith.mulf %15, %15 : vector<256x256xf32>
    %18 = arith.addf %16, %17 : vector<256x256xf32>
    %19 = vector.extract_strided_slice %7 {offsets = [0, 2], sizes = [256, 1], strides = [1, 1]} : vector<256x10xf32> to vector<256x1xf32>
    %20 = vector.broadcast %19 : vector<256x1xf32> to vector<256x256xf32>
    %21 = arith.addf %18, %20 : vector<256x256xf32>
    %cst_8 = arith.constant dense<0x7F800000> : vector<256xf32>
    %22 = vector.multi_reduction <minimumf>, %21, %cst_8 [0] : vector<256x256xf32> to vector<256xf32>
    %23 = vector.shape_cast %22 : vector<256xf32> to vector<1x256xf32>
    %24 = vector.extract_strided_slice %7 {offsets = [0, 3], sizes = [256, 1], strides = [1, 1]} : vector<256x10xf32> to vector<256x1xf32>
    %25 = vector.broadcast %24 : vector<256x1xf32> to vector<256x256xf32>
    %26 = arith.addf %18, %25 : vector<256x256xf32>
    %cst_9 = arith.constant dense<0x7F800000> : vector<256xf32>
    %27 = vector.multi_reduction <minimumf>, %26, %cst_9 [0] : vector<256x256xf32> to vector<256xf32>
    %28 = vector.shape_cast %27 : vector<256xf32> to vector<1x256xf32>
    %c2 = arith.constant 2 : index
    %c0_10 = arith.constant 0 : index
    %29 = vector.load %arg4[%c2, %c0_10] : memref<8x256xf32, #tpu.memory_space<vmem>>, vector<1x256xf32>
    %30 = arith.minimumf %29, %23 : vector<1x256xf32>
    %c2_11 = arith.constant 2 : index
    %c0_12 = arith.constant 0 : index
    %31 = vector.load %arg4[%c2_11, %c0_12] : memref<8x256xf32, #tpu.memory_space<vmem>>, vector<1x256xf32>
    tpu.vector_store %arg4[%c2_11, %c0_12], %30 {strides = array<i32>} : memref<8x256xf32, #tpu.memory_space<vmem>>, vector<1x256xf32>,
    %c3 = arith.constant 3 : index
    %c0_13 = arith.constant 0 : index
    %32 = vector.load %arg4[%c3, %c0_13] : memref<8x256xf32, #tpu.memory_space<vmem>>, vector<1x256xf32>
    %33 = arith.minimumf %32, %28 : vector<1x256xf32>
    %c3_14 = arith.constant 3 : index
    %c0_15 = arith.constant 0 : index
    %34 = vector.load %arg4[%c3_14, %c0_15] : memref<8x256xf32, #tpu.memory_space<vmem>>, vector<1x256xf32>
    tpu.vector_store %arg4[%c3_14, %c0_15], %33 {strides = array<i32>} : memref<8x256xf32, #tpu.memory_space<vmem>>, vector<1x256xf32>,
    %35 = vector.extract_strided_slice %7 {offsets = [0, 4], sizes = [256, 1], strides = [1, 1]} : vector<256x10xf32> to vector<256x1xf32>
    %36 = vector.broadcast %35 : vector<256x1xf32> to vector<256x256xf32>
    %37 = arith.addf %18, %36 : vector<256x256xf32>
    %cst_16 = arith.constant dense<0x7F800000> : vector<256xf32>
    %38 = vector.multi_reduction <minimumf>, %37, %cst_16 [0] : vector<256x256xf32> to vector<256xf32>
    %39 = vector.shape_cast %38 : vector<256xf32> to vector<1x256xf32>
    %40 = vector.extract_strided_slice %7 {offsets = [0, 5], sizes = [256, 1], strides = [1, 1]} : vector<256x10xf32> to vector<256x1xf32>
    %41 = vector.broadcast %40 : vector<256x1xf32> to vector<256x256xf32>
    %42 = arith.addf %18, %41 : vector<256x256xf32>
    %cst_17 = arith.constant dense<0x7F800000> : vector<256xf32>
    %43 = vector.multi_reduction <minimumf>, %42, %cst_17 [0] : vector<256x256xf32> to vector<256xf32>
    %44 = vector.shape_cast %43 : vector<256xf32> to vector<1x256xf32>
    %c4 = arith.constant 4 : index
    %c0_18 = arith.constant 0 : index
    %45 = vector.load %arg4[%c4, %c0_18] : memref<8x256xf32, #tpu.memory_space<vmem>>, vector<1x256xf32>
    %46 = arith.minimumf %45, %39 : vector<1x256xf32>
    %c4_19 = arith.constant 4 : index
    %c0_20 = arith.constant 0 : index
    %47 = vector.load %arg4[%c4_19, %c0_20] : memref<8x256xf32, #tpu.memory_space<vmem>>, vector<1x256xf32>
    tpu.vector_store %arg4[%c4_19, %c0_20], %46 {strides = array<i32>} : memref<8x256xf32, #tpu.memory_space<vmem>>, vector<1x256xf32>,
    %c5 = arith.constant 5 : index
    %c0_21 = arith.constant 0 : index
    %48 = vector.load %arg4[%c5, %c0_21] : memref<8x256xf32, #tpu.memory_space<vmem>>, vector<1x256xf32>
    %49 = arith.minimumf %48, %44 : vector<1x256xf32>
    %c5_22 = arith.constant 5 : index
    %c0_23 = arith.constant 0 : index
    %50 = vector.load %arg4[%c5_22, %c0_23] : memref<8x256xf32, #tpu.memory_space<vmem>>, vector<1x256xf32>
    tpu.vector_store %arg4[%c5_22, %c0_23], %49 {strides = array<i32>} : memref<8x256xf32, #tpu.memory_space<vmem>>, vector<1x256xf32>,
    %51 = vector.extract_strided_slice %7 {offsets = [0, 6], sizes = [256, 1], strides = [1, 1]} : vector<256x10xf32> to vector<256x1xf32>
    %52 = vector.broadcast %51 : vector<256x1xf32> to vector<256x256xf32>
    %53 = arith.addf %18, %52 : vector<256x256xf32>
    %cst_24 = arith.constant dense<0x7F800000> : vector<256xf32>
    %54 = vector.multi_reduction <minimumf>, %53, %cst_24 [0] : vector<256x256xf32> to vector<256xf32>
    %55 = vector.shape_cast %54 : vector<256xf32> to vector<1x256xf32>
    %56 = vector.extract_strided_slice %7 {offsets = [0, 7], sizes = [256, 1], strides = [1, 1]} : vector<256x10xf32> to vector<256x1xf32>
    %57 = vector.broadcast %56 : vector<256x1xf32> to vector<256x256xf32>
    %58 = arith.addf %18, %57 : vector<256x256xf32>
    %cst_25 = arith.constant dense<0x7F800000> : vector<256xf32>
    %59 = vector.multi_reduction <minimumf>, %58, %cst_25 [0] : vector<256x256xf32> to vector<256xf32>
    %60 = vector.shape_cast %59 : vector<256xf32> to vector<1x256xf32>
    %c6 = arith.constant 6 : index
    %c0_26 = arith.constant 0 : index
    %61 = vector.load %arg4[%c6, %c0_26] : memref<8x256xf32, #tpu.memory_space<vmem>>, vector<1x256xf32>
    %62 = arith.minimumf %61, %55 : vector<1x256xf32>
    %c6_27 = arith.constant 6 : index
    %c0_28 = arith.constant 0 : index
    %63 = vector.load %arg4[%c6_27, %c0_28] : memref<8x256xf32, #tpu.memory_space<vmem>>, vector<1x256xf32>
    tpu.vector_store %arg4[%c6_27, %c0_28], %62 {strides = array<i32>} : memref<8x256xf32, #tpu.memory_space<vmem>>, vector<1x256xf32>,
    %c7 = arith.constant 7 : index
    %c0_29 = arith.constant 0 : index
    %64 = vector.load %arg4[%c7, %c0_29] : memref<8x256xf32, #tpu.memory_space<vmem>>, vector<1x256xf32>
    %65 = arith.minimumf %64, %60 : vector<1x256xf32>
    %c7_30 = arith.constant 7 : index
    %c0_31 = arith.constant 0 : index
    %66 = vector.load %arg4[%c7_30, %c0_31] : memref<8x256xf32, #tpu.memory_space<vmem>>, vector<1x256xf32>
    tpu.vector_store %arg4[%c7_30, %c0_31], %65 {strides = array<i32>} : memref<8x256xf32, #tpu.memory_space<vmem>>, vector<1x256xf32>,
    %67 = tpu.iota {dimensions = array<i32: 1>} : vector<1x128xi32>
    %cst_32 = arith.constant 0.000000e+00 : f32
    %68 = vector.broadcast %cst_32 : f32 to vector<1x128xf32>
    %c0_33 = arith.constant 0 : index
    %c0_34 = arith.constant 0 : index
    %c0_35 = arith.constant 0 : index
    %69 = vector.load %arg3[%c0_33, %c0_34, %c0_35] : memref<1x4x128xf32, #tpu.memory_space<vmem>>, vector<1x1x128xf32>
    %70 = vector.shape_cast %69 : vector<1x1x128xf32> to vector<1x128xf32>
    %71 = vector.shape_cast %68 : vector<1x128xf32> to vector<1x1x128xf32>
    tpu.vector_store %arg3[%c0_33, %c0_34, %c0_35], %71 {strides = array<i32>} : memref<1x4x128xf32, #tpu.memory_space<vmem>>, vector<1x1x128xf32>,
    %c0_36 = arith.constant 0 : index
    %c4_37 = arith.constant 4 : index
    %c0_38 = arith.constant 0 : index
    %72 = vector.load %arg1[%c0_36, %c4_37, %c0_38] : memref<1x18x256xf32, #tpu.memory_space<vmem>>, vector<1x1x256xf32>
    %73 = vector.shape_cast %72 : vector<1x1x256xf32> to vector<1x256xf32>
    %c0_39 = arith.constant 0 : index
    %c5_40 = arith.constant 5 : index
    %c0_41 = arith.constant 0 : index
    %74 = vector.load %arg1[%c0_39, %c5_40, %c0_41] : memref<1x18x256xf32, #tpu.memory_space<vmem>>, vector<1x1x256xf32>
    %75 = vector.shape_cast %74 : vector<1x1x256xf32> to vector<1x256xf32>
    %c0_42 = arith.constant 0 : index
    %c6_43 = arith.constant 6 : index
    %c0_44 = arith.constant 0 : index
    %76 = vector.load %arg1[%c0_42, %c6_43, %c0_44] : memref<1x18x256xf32, #tpu.memory_space<vmem>>, vector<1x1x256xf32>
    %77 = vector.shape_cast %76 : vector<1x1x256xf32> to vector<1x256xf32>
    %c0_45 = arith.constant 0 : index
    %c7_46 = arith.constant 7 : index
    %c0_47 = arith.constant 0 : index
    %78 = vector.load %arg1[%c0_45, %c7_46, %c0_47] : memref<1x18x256xf32, #tpu.memory_space<vmem>>, vector<1x1x256xf32>
    %79 = vector.shape_cast %78 : vector<1x1x256xf32> to vector<1x256xf32>
    %c2_48 = arith.constant 2 : index
    %c0_49 = arith.constant 0 : index
    %80 = vector.load %arg4[%c2_48, %c0_49] : memref<8x256xf32, #tpu.memory_space<vmem>>, vector<1x256xf32>
    %81 = math.sqrt %80 : vector<1x256xf32>
    %c3_50 = arith.constant 3 : index
    %c0_51 = arith.constant 0 : index
    %82 = vector.load %arg4[%c3_50, %c0_51] : memref<8x256xf32, #tpu.memory_space<vmem>>, vector<1x256xf32>
    %83 = math.sqrt %82 : vector<1x256xf32>
    %cst_52 = arith.constant 1.000000e+00 : f32
    %84 = vector.broadcast %cst_52 : f32 to vector<1x256xf32>
    %85 = arith.subf %84, %75 : vector<1x256xf32>
    %86 = arith.mulf %77, %85 : vector<1x256xf32>
    %cst_53 = arith.constant 0.000000e+00 : f32
    %87 = vector.broadcast %cst_53 : f32 to vector<1x256xf32>
    %88 = arith.cmpf one, %86, %87 : vector<1x256xf32>
    %cst_54 = arith.constant 1.000000e+00 : f32
    %89 = vector.broadcast %cst_54 : f32 to vector<1x256xf32>
    %90 = arith.subf %89, %75 : vector<1x256xf32>
    %91 = arith.mulf %73, %90 : vector<1x256xf32>
    %cst_55 = arith.constant 0.000000e+00 : f32
    %92 = vector.broadcast %cst_55 : f32 to vector<1x256xf32>
    %93 = arith.cmpf one, %91, %92 : vector<1x256xf32>
    %cst_56 = arith.constant 1.000000e+00 : f32
    %94 = vector.broadcast %cst_56 : f32 to vector<1x256xf32>
    %95 = arith.subf %94, %73 : vector<1x256xf32>
    %96 = arith.mulf %75, %95 : vector<1x256xf32>
    %cst_57 = arith.constant 0.000000e+00 : f32
    %97 = vector.broadcast %cst_57 : f32 to vector<1x256xf32>
    %98 = arith.cmpf one, %96, %97 : vector<1x256xf32>
    %99 = arith.extui %88 : vector<1x256xi1> to vector<1x256xi32>
    %100 = arith.sitofp %99 : vector<1x256xi32> to vector<1x256xf32>
    %cst_58 = arith.constant dense<0.000000e+00> : vector<1xf32>
    %101 = vector.multi_reduction <add>, %100, %cst_58 [1] : vector<1x256xf32> to vector<1xf32>
    %102 = vector.shape_cast %101 : vector<1xf32> to vector<1x1xf32>
    %103 = arith.extui %93 : vector<1x256xi1> to vector<1x256xi32>
    %104 = arith.sitofp %103 : vector<1x256xi32> to vector<1x256xf32>
    %cst_59 = arith.constant dense<0.000000e+00> : vector<1xf32>
    %105 = vector.multi_reduction <add>, %104, %cst_59 [1] : vector<1x256xf32> to vector<1xf32>
    %106 = vector.shape_cast %105 : vector<1xf32> to vector<1x1xf32>
    %107 = arith.extui %98 : vector<1x256xi1> to vector<1x256xi32>
    %108 = arith.sitofp %107 : vector<1x256xi32> to vector<1x256xf32>
    %cst_60 = arith.constant dense<0.000000e+00> : vector<1xf32>
    %109 = vector.multi_reduction <add>, %108, %cst_60 [1] : vector<1x256xf32> to vector<1xf32>
    %110 = vector.shape_cast %109 : vector<1xf32> to vector<1x1xf32>
    %cst_61 = arith.constant 0.000000e+00 : f32
    %111 = vector.broadcast %cst_61 : f32 to vector<1x256xf32>
    %112 = arith.cmpf one, %79, %111 : vector<1x256xf32>
    %113 = arith.extui %112 : vector<1x256xi1> to vector<1x256xi32>
    %114 = arith.sitofp %113 : vector<1x256xi32> to vector<1x256xf32>
    %cst_62 = arith.constant dense<0.000000e+00> : vector<1xf32>
    %115 = vector.multi_reduction <add>, %114, %cst_62 [1] : vector<1x256xf32> to vector<1xf32>
    %116 = vector.shape_cast %115 : vector<1xf32> to vector<1x1xf32>
    %cst_63 = arith.constant 0.000000e+00 : f32
    %117 = vector.broadcast %cst_63 : f32 to vector<1x256xf32>
    %118 = arith.cmpf one, %77, %117 : vector<1x256xf32>
    %119 = arith.extui %118 : vector<1x256xi1> to vector<1x256xi32>
    %120 = arith.sitofp %119 : vector<1x256xi32> to vector<1x256xf32>
    %cst_64 = arith.constant dense<0.000000e+00> : vector<1xf32>
    %121 = vector.multi_reduction <add>, %120, %cst_64 [1] : vector<1x256xf32> to vector<1xf32>
    %122 = vector.shape_cast %121 : vector<1xf32> to vector<1x1xf32>
    %cst_65 = arith.constant 0.000000e+00 : f32
    %123 = vector.broadcast %cst_65 : f32 to vector<1x256xf32>
    %124 = arith.cmpf one, %73, %123 : vector<1x256xf32>
    %125 = arith.extui %124 : vector<1x256xi1> to vector<1x256xi32>
    %126 = arith.sitofp %125 : vector<1x256xi32> to vector<1x256xf32>
    %cst_66 = arith.constant dense<0.000000e+00> : vector<1xf32>
    %127 = vector.multi_reduction <add>, %126, %cst_66 [1] : vector<1x256xf32> to vector<1xf32>
    %128 = vector.shape_cast %127 : vector<1xf32> to vector<1x1xf32>
    %cst_67 = arith.constant 0.000000e+00 : f32
    %129 = vector.broadcast %cst_67 : f32 to vector<1x256xf32>
    %130 = arith.cmpf one, %75, %129 : vector<1x256xf32>
    %131 = arith.extui %130 : vector<1x256xi1> to vector<1x256xi32>
    %132 = arith.sitofp %131 : vector<1x256xi32> to vector<1x256xf32>
    %cst_68 = arith.constant dense<0.000000e+00> : vector<1xf32>
    %133 = vector.multi_reduction <add>, %132, %cst_68 [1] : vector<1x256xf32> to vector<1xf32>
    %134 = vector.shape_cast %133 : vector<1xf32> to vector<1x1xf32>
    %cst_69 = arith.constant -1.000000e+00 : f32
    %135 = vector.broadcast %cst_69 : f32 to vector<1x256xf32>
    %136 = arith.select %88, %81, %135 : vector<1x256xi1>, vector<1x256xf32>
    %cst_70 = arith.constant dense<0xFF800000> : vector<1xf32>
    %137 = vector.multi_reduction <maximumf>, %136, %cst_70 [1] : vector<1x256xf32> to vector<1xf32>
    %138 = vector.shape_cast %137 : vector<1xf32> to vector<1x1xf32>
    %cst_71 = arith.constant 0.000000e+00 : f32
    %139 = vector.broadcast %cst_71 : f32 to vector<1x1xf32>
    %140 = arith.cmpf ogt, %102, %139 : vector<1x1xf32>
    %cst_72 = arith.constant 0.000000e+00 : f32
    %141 = vector.broadcast %cst_72 : f32 to vector<1x1xf32>
    %142 = arith.cmpf ogt, %116, %141 : vector<1x1xf32>
    %143 = arith.andi %140, %142 : vector<1x1xi1>
    %cst_73 = arith.constant 8.000000e+00 : f32
    %144 = vector.broadcast %cst_73 : f32 to vector<1x1xf32>
    %145 = arith.select %143, %138, %144 : vector<1x1xi1>, vector<1x1xf32>
    %cst_74 = arith.constant 0.000000e+00 : f32
    %146 = vector.broadcast %cst_74 : f32 to vector<1x256xf32>
    %147 = arith.select %93, %81, %146 : vector<1x256xi1>, vector<1x256xf32>
    %cst_75 = arith.constant dense<0.000000e+00> : vector<1xf32>
    %148 = vector.multi_reduction <add>, %147, %cst_75 [1] : vector<1x256xf32> to vector<1xf32>
    %149 = vector.shape_cast %148 : vector<1xf32> to vector<1x1xf32>
    %cst_76 = arith.constant 0.000000e+00 : f32
    %150 = vector.broadcast %cst_76 : f32 to vector<1x256xf32>
    %151 = arith.select %98, %83, %150 : vector<1x256xi1>, vector<1x256xf32>
    %cst_77 = arith.constant dense<0.000000e+00> : vector<1xf32>
    %152 = vector.multi_reduction <add>, %151, %cst_77 [1] : vector<1x256xf32> to vector<1xf32>
    %153 = vector.shape_cast %152 : vector<1xf32> to vector<1x1xf32>
    %cst_78 = arith.constant 0.000000e+00 : f32
    %154 = vector.broadcast %cst_78 : f32 to vector<1x1xf32>
    %155 = arith.cmpf ogt, %106, %154 : vector<1x1xf32>
    %cst_79 = arith.constant 0.000000e+00 : f32
    %156 = vector.broadcast %cst_79 : f32 to vector<1x1xf32>
    %157 = arith.cmpf ogt, %116, %156 : vector<1x1xf32>
    %158 = arith.andi %155, %157 : vector<1x1xi1>
    %cst_80 = arith.constant 1.000000e+00 : f32
    %159 = vector.broadcast %cst_80 : f32 to vector<1x1xf32>
    %160 = arith.maximumf %128, %159 : vector<1x1xf32>
    %161 = arith.divf %149, %160 : vector<1x1xf32>
    %cst_81 = arith.constant 0.000000e+00 : f32
    %162 = vector.broadcast %cst_81 : f32 to vector<1x1xf32>
    %163 = arith.select %158, %161, %162 : vector<1x1xi1>, vector<1x1xf32>
    %cst_82 = arith.constant 0.000000e+00 : f32
    %164 = vector.broadcast %cst_82 : f32 to vector<1x1xf32>
    %165 = arith.cmpf ogt, %110, %164 : vector<1x1xf32>
    %cst_83 = arith.constant 0.000000e+00 : f32
    %166 = vector.broadcast %cst_83 : f32 to vector<1x1xf32>
    %167 = arith.cmpf ogt, %122, %166 : vector<1x1xf32>
    %168 = arith.andi %165, %167 : vector<1x1xi1>
    %cst_84 = arith.constant 1.000000e+00 : f32
    %169 = vector.broadcast %cst_84 : f32 to vector<1x1xf32>
    %170 = arith.maximumf %134, %169 : vector<1x1xf32>
    %171 = arith.divf %153, %170 : vector<1x1xf32>
    %cst_85 = arith.constant 0.000000e+00 : f32
    %172 = vector.broadcast %cst_85 : f32 to vector<1x1xf32>
    %173 = arith.select %168, %171, %172 : vector<1x1xi1>, vector<1x1xf32>
    %cst_86 = arith.constant 0.000000e+00 : f32
    %174 = vector.broadcast %cst_86 : f32 to vector<1x1xf32>
    %175 = arith.cmpf ogt, %128, %174 : vector<1x1xf32>
    %176 = arith.maximumf %163, %173 : vector<1x1xf32>
    %cst_87 = arith.constant 8.000000e+00 : f32
    %177 = vector.broadcast %cst_87 : f32 to vector<1x1xf32>
    %178 = arith.select %175, %176, %177 : vector<1x1xi1>, vector<1x1xf32>
    %c0_i32 = arith.constant 0 : i32
    %179 = vector.broadcast %c0_i32 : i32 to vector<1x128xi32>
    %180 = arith.cmpi eq, %67, %179 : vector<1x128xi32>
    %181 = vector.shape_cast %145 : vector<1x1xf32> to vector<1x1xf32>
    %182 = vector.broadcast %181 : vector<1x1xf32> to vector<1x128xf32>
    %183 = vector.shape_cast %178 : vector<1x1xf32> to vector<1x1xf32>
    %184 = vector.broadcast %183 : vector<1x1xf32> to vector<1x128xf32>
    %185 = arith.select %180, %182, %184 : vector<1x128xi1>, vector<1x128xf32>
    %c0_88 = arith.constant 0 : index
    %c1 = arith.constant 1 : index
    %c0_89 = arith.constant 0 : index
    %186 = vector.load %arg3[%c0_88, %c1, %c0_89] : memref<1x4x128xf32, #tpu.memory_space<vmem>>, vector<1x1x128xf32>
    %187 = vector.shape_cast %186 : vector<1x1x128xf32> to vector<1x128xf32>
    %188 = vector.shape_cast %185 : vector<1x128xf32> to vector<1x1x128xf32>
    tpu.vector_store %arg3[%c0_88, %c1, %c0_89], %188 {strides = array<i32>} : memref<1x4x128xf32, #tpu.memory_space<vmem>>, vector<1x1x128xf32>,
    %c0_90 = arith.constant 0 : index
    %c8 = arith.constant 8 : index
    %c0_91 = arith.constant 0 : index
    %189 = vector.load %arg1[%c0_90, %c8, %c0_91] : memref<1x18x256xf32, #tpu.memory_space<vmem>>, vector<1x1x256xf32>
    %190 = vector.shape_cast %189 : vector<1x1x256xf32> to vector<1x256xf32>
    %c0_92 = arith.constant 0 : index
    %c9 = arith.constant 9 : index
    %c0_93 = arith.constant 0 : index
    %191 = vector.load %arg1[%c0_92, %c9, %c0_93] : memref<1x18x256xf32, #tpu.memory_space<vmem>>, vector<1x1x256xf32>
    %192 = vector.shape_cast %191 : vector<1x1x256xf32> to vector<1x256xf32>
    %c0_94 = arith.constant 0 : index
    %c10 = arith.constant 10 : index
    %c0_95 = arith.constant 0 : index
    %193 = vector.load %arg1[%c0_94, %c10, %c0_95] : memref<1x18x256xf32, #tpu.memory_space<vmem>>, vector<1x1x256xf32>
    %194 = vector.shape_cast %193 : vector<1x1x256xf32> to vector<1x256xf32>
    %c0_96 = arith.constant 0 : index
    %c11 = arith.constant 11 : index
    %c0_97 = arith.constant 0 : index
    %195 = vector.load %arg1[%c0_96, %c11, %c0_97] : memref<1x18x256xf32, #tpu.memory_space<vmem>>, vector<1x1x256xf32>
    %196 = vector.shape_cast %195 : vector<1x1x256xf32> to vector<1x256xf32>
    %c4_98 = arith.constant 4 : index
    %c0_99 = arith.constant 0 : index
    %197 = vector.load %arg4[%c4_98, %c0_99] : memref<8x256xf32, #tpu.memory_space<vmem>>, vector<1x256xf32>
    %198 = math.sqrt %197 : vector<1x256xf32>
    %c5_100 = arith.constant 5 : index
    %c0_101 = arith.constant 0 : index
    %199 = vector.load %arg4[%c5_100, %c0_101] : memref<8x256xf32, #tpu.memory_space<vmem>>, vector<1x256xf32>
    %200 = math.sqrt %199 : vector<1x256xf32>
    %cst_102 = arith.constant 1.000000e+00 : f32
    %201 = vector.broadcast %cst_102 : f32 to vector<1x256xf32>
    %202 = arith.subf %201, %192 : vector<1x256xf32>
    %203 = arith.mulf %194, %202 : vector<1x256xf32>
    %cst_103 = arith.constant 0.000000e+00 : f32
    %204 = vector.broadcast %cst_103 : f32 to vector<1x256xf32>
    %205 = arith.cmpf one, %203, %204 : vector<1x256xf32>
    %cst_104 = arith.constant 1.000000e+00 : f32
    %206 = vector.broadcast %cst_104 : f32 to vector<1x256xf32>
    %207 = arith.subf %206, %192 : vector<1x256xf32>
    %208 = arith.mulf %190, %207 : vector<1x256xf32>
    %cst_105 = arith.constant 0.000000e+00 : f32
    %209 = vector.broadcast %cst_105 : f32 to vector<1x256xf32>
    %210 = arith.cmpf one, %208, %209 : vector<1x256xf32>
    %cst_106 = arith.constant 1.000000e+00 : f32
    %211 = vector.broadcast %cst_106 : f32 to vector<1x256xf32>
    %212 = arith.subf %211, %190 : vector<1x256xf32>
    %213 = arith.mulf %192, %212 : vector<1x256xf32>
    %cst_107 = arith.constant 0.000000e+00 : f32
    %214 = vector.broadcast %cst_107 : f32 to vector<1x256xf32>
    %215 = arith.cmpf one, %213, %214 : vector<1x256xf32>
    %216 = arith.extui %205 : vector<1x256xi1> to vector<1x256xi32>
    %217 = arith.sitofp %216 : vector<1x256xi32> to vector<1x256xf32>
    %cst_108 = arith.constant dense<0.000000e+00> : vector<1xf32>
    %218 = vector.multi_reduction <add>, %217, %cst_108 [1] : vector<1x256xf32> to vector<1xf32>
    %219 = vector.shape_cast %218 : vector<1xf32> to vector<1x1xf32>
    %220 = arith.extui %210 : vector<1x256xi1> to vector<1x256xi32>
    %221 = arith.sitofp %220 : vector<1x256xi32> to vector<1x256xf32>
    %cst_109 = arith.constant dense<0.000000e+00> : vector<1xf32>
    %222 = vector.multi_reduction <add>, %221, %cst_109 [1] : vector<1x256xf32> to vector<1xf32>
    %223 = vector.shape_cast %222 : vector<1xf32> to vector<1x1xf32>
    %224 = arith.extui %215 : vector<1x256xi1> to vector<1x256xi32>
    %225 = arith.sitofp %224 : vector<1x256xi32> to vector<1x256xf32>
    %cst_110 = arith.constant dense<0.000000e+00> : vector<1xf32>
    %226 = vector.multi_reduction <add>, %225, %cst_110 [1] : vector<1x256xf32> to vector<1xf32>
    %227 = vector.shape_cast %226 : vector<1xf32> to vector<1x1xf32>
    %cst_111 = arith.constant 0.000000e+00 : f32
    %228 = vector.broadcast %cst_111 : f32 to vector<1x256xf32>
    %229 = arith.cmpf one, %196, %228 : vector<1x256xf32>
    %230 = arith.extui %229 : vector<1x256xi1> to vector<1x256xi32>
    %231 = arith.sitofp %230 : vector<1x256xi32> to vector<1x256xf32>
    %cst_112 = arith.constant dense<0.000000e+00> : vector<1xf32>
    %232 = vector.multi_reduction <add>, %231, %cst_112 [1] : vector<1x256xf32> to vector<1xf32>
    %233 = vector.shape_cast %232 : vector<1xf32> to vector<1x1xf32>
    %cst_113 = arith.constant 0.000000e+00 : f32
    %234 = vector.broadcast %cst_113 : f32 to vector<1x256xf32>
    %235 = arith.cmpf one, %194, %234 : vector<1x256xf32>
    %236 = arith.extui %235 : vector<1x256xi1> to vector<1x256xi32>
    %237 = arith.sitofp %236 : vector<1x256xi32> to vector<1x256xf32>
    %cst_114 = arith.constant dense<0.000000e+00> : vector<1xf32>
    %238 = vector.multi_reduction <add>, %237, %cst_114 [1] : vector<1x256xf32> to vector<1xf32>
    %239 = vector.shape_cast %238 : vector<1xf32> to vector<1x1xf32>
    %cst_115 = arith.constant 0.000000e+00 : f32
    %240 = vector.broadcast %cst_115 : f32 to vector<1x256xf32>
    %241 = arith.cmpf one, %190, %240 : vector<1x256xf32>
    %242 = arith.extui %241 : vector<1x256xi1> to vector<1x256xi32>
    %243 = arith.sitofp %242 : vector<1x256xi32> to vector<1x256xf32>
    %cst_116 = arith.constant dense<0.000000e+00> : vector<1xf32>
    %244 = vector.multi_reduction <add>, %243, %cst_116 [1] : vector<1x256xf32> to vector<1xf32>
    %245 = vector.shape_cast %244 : vector<1xf32> to vector<1x1xf32>
    %cst_117 = arith.constant 0.000000e+00 : f32
    %246 = vector.broadcast %cst_117 : f32 to vector<1x256xf32>
    %247 = arith.cmpf one, %192, %246 : vector<1x256xf32>
    %248 = arith.extui %247 : vector<1x256xi1> to vector<1x256xi32>
    %249 = arith.sitofp %248 : vector<1x256xi32> to vector<1x256xf32>
    %cst_118 = arith.constant dense<0.000000e+00> : vector<1xf32>
    %250 = vector.multi_reduction <add>, %249, %cst_118 [1] : vector<1x256xf32> to vector<1xf32>
    %251 = vector.shape_cast %250 : vector<1xf32> to vector<1x1xf32>
    %cst_119 = arith.constant -1.000000e+00 : f32
    %252 = vector.broadcast %cst_119 : f32 to vector<1x256xf32>
    %253 = arith.select %205, %198, %252 : vector<1x256xi1>, vector<1x256xf32>
    %cst_120 = arith.constant dense<0xFF800000> : vector<1xf32>
    %254 = vector.multi_reduction <maximumf>, %253, %cst_120 [1] : vector<1x256xf32> to vector<1xf32>
    %255 = vector.shape_cast %254 : vector<1xf32> to vector<1x1xf32>
    %cst_121 = arith.constant 0.000000e+00 : f32
    %256 = vector.broadcast %cst_121 : f32 to vector<1x1xf32>
    %257 = arith.cmpf ogt, %219, %256 : vector<1x1xf32>
    %cst_122 = arith.constant 0.000000e+00 : f32
    %258 = vector.broadcast %cst_122 : f32 to vector<1x1xf32>
    %259 = arith.cmpf ogt, %233, %258 : vector<1x1xf32>
    %260 = arith.andi %257, %259 : vector<1x1xi1>
    %cst_123 = arith.constant 8.000000e+00 : f32
    %261 = vector.broadcast %cst_123 : f32 to vector<1x1xf32>
    %262 = arith.select %260, %255, %261 : vector<1x1xi1>, vector<1x1xf32>
    %cst_124 = arith.constant 0.000000e+00 : f32
    %263 = vector.broadcast %cst_124 : f32 to vector<1x256xf32>
    %264 = arith.select %210, %198, %263 : vector<1x256xi1>, vector<1x256xf32>
    %cst_125 = arith.constant dense<0.000000e+00> : vector<1xf32>
    %265 = vector.multi_reduction <add>, %264, %cst_125 [1] : vector<1x256xf32> to vector<1xf32>
    %266 = vector.shape_cast %265 : vector<1xf32> to vector<1x1xf32>
    %cst_126 = arith.constant 0.000000e+00 : f32
    %267 = vector.broadcast %cst_126 : f32 to vector<1x256xf32>
    %268 = arith.select %215, %200, %267 : vector<1x256xi1>, vector<1x256xf32>
    %cst_127 = arith.constant dense<0.000000e+00> : vector<1xf32>
    %269 = vector.multi_reduction <add>, %268, %cst_127 [1] : vector<1x256xf32> to vector<1xf32>
    %270 = vector.shape_cast %269 : vector<1xf32> to vector<1x1xf32>
    %cst_128 = arith.constant 0.000000e+00 : f32
    %271 = vector.broadcast %cst_128 : f32 to vector<1x1xf32>
    %272 = arith.cmpf ogt, %223, %271 : vector<1x1xf32>
    %cst_129 = arith.constant 0.000000e+00 : f32
    %273 = vector.broadcast %cst_129 : f32 to vector<1x1xf32>
    %274 = arith.cmpf ogt, %233, %273 : vector<1x1xf32>
    %275 = arith.andi %272, %274 : vector<1x1xi1>
    %cst_130 = arith.constant 1.000000e+00 : f32
    %276 = vector.broadcast %cst_130 : f32 to vector<1x1xf32>
    %277 = arith.maximumf %245, %276 : vector<1x1xf32>
    %278 = arith.divf %266, %277 : vector<1x1xf32>
    %cst_131 = arith.constant 0.000000e+00 : f32
    %279 = vector.broadcast %cst_131 : f32 to vector<1x1xf32>
    %280 = arith.select %275, %278, %279 : vector<1x1xi1>, vector<1x1xf32>
    %cst_132 = arith.constant 0.000000e+00 : f32
    %281 = vector.broadcast %cst_132 : f32 to vector<1x1xf32>
    %282 = arith.cmpf ogt, %227, %281 : vector<1x1xf32>
    %cst_133 = arith.constant 0.000000e+00 : f32
    %283 = vector.broadcast %cst_133 : f32 to vector<1x1xf32>
    %284 = arith.cmpf ogt, %239, %283 : vector<1x1xf32>
    %285 = arith.andi %282, %284 : vector<1x1xi1>
    %cst_134 = arith.constant 1.000000e+00 : f32
    %286 = vector.broadcast %cst_134 : f32 to vector<1x1xf32>
    %287 = arith.maximumf %251, %286 : vector<1x1xf32>
    %288 = arith.divf %270, %287 : vector<1x1xf32>
    %cst_135 = arith.constant 0.000000e+00 : f32
    %289 = vector.broadcast %cst_135 : f32 to vector<1x1xf32>
    %290 = arith.select %285, %288, %289 : vector<1x1xi1>, vector<1x1xf32>
    %cst_136 = arith.constant 0.000000e+00 : f32
    %291 = vector.broadcast %cst_136 : f32 to vector<1x1xf32>
    %292 = arith.cmpf ogt, %245, %291 : vector<1x1xf32>
    %293 = arith.maximumf %280, %290 : vector<1x1xf32>
    %cst_137 = arith.constant 8.000000e+00 : f32
    %294 = vector.broadcast %cst_137 : f32 to vector<1x1xf32>
    %295 = arith.select %292, %293, %294 : vector<1x1xi1>, vector<1x1xf32>
    %c0_i32_138 = arith.constant 0 : i32
    %296 = vector.broadcast %c0_i32_138 : i32 to vector<1x128xi32>
    %297 = arith.cmpi eq, %67, %296 : vector<1x128xi32>
    %298 = vector.shape_cast %262 : vector<1x1xf32> to vector<1x1xf32>
    %299 = vector.broadcast %298 : vector<1x1xf32> to vector<1x128xf32>
    %300 = vector.shape_cast %295 : vector<1x1xf32> to vector<1x1xf32>
    %301 = vector.broadcast %300 : vector<1x1xf32> to vector<1x128xf32>
    %302 = arith.select %297, %299, %301 : vector<1x128xi1>, vector<1x128xf32>
    %c0_139 = arith.constant 0 : index
    %c2_140 = arith.constant 2 : index
    %c0_141 = arith.constant 0 : index
    %303 = vector.load %arg3[%c0_139, %c2_140, %c0_141] : memref<1x4x128xf32, #tpu.memory_space<vmem>>, vector<1x1x128xf32>
    %304 = vector.shape_cast %303 : vector<1x1x128xf32> to vector<1x128xf32>
    %305 = vector.shape_cast %302 : vector<1x128xf32> to vector<1x1x128xf32>
    tpu.vector_store %arg3[%c0_139, %c2_140, %c0_141], %305 {strides = array<i32>} : memref<1x4x128xf32, #tpu.memory_space<vmem>>, vector<1x1x128xf32>,
    %c0_142 = arith.constant 0 : index
    %c12 = arith.constant 12 : index
    %c0_143 = arith.constant 0 : index
    %306 = vector.load %arg1[%c0_142, %c12, %c0_143] : memref<1x18x256xf32, #tpu.memory_space<vmem>>, vector<1x1x256xf32>
    %307 = vector.shape_cast %306 : vector<1x1x256xf32> to vector<1x256xf32>
    %c0_144 = arith.constant 0 : index
    %c13 = arith.constant 13 : index
    %c0_145 = arith.constant 0 : index
    %308 = vector.load %arg1[%c0_144, %c13, %c0_145] : memref<1x18x256xf32, #tpu.memory_space<vmem>>, vector<1x1x256xf32>
    %309 = vector.shape_cast %308 : vector<1x1x256xf32> to vector<1x256xf32>
    %c0_146 = arith.constant 0 : index
    %c14 = arith.constant 14 : index
    %c0_147 = arith.constant 0 : index
    %310 = vector.load %arg1[%c0_146, %c14, %c0_147] : memref<1x18x256xf32, #tpu.memory_space<vmem>>, vector<1x1x256xf32>
    %311 = vector.shape_cast %310 : vector<1x1x256xf32> to vector<1x256xf32>
    %c0_148 = arith.constant 0 : index
    %c15 = arith.constant 15 : index
    %c0_149 = arith.constant 0 : index
    %312 = vector.load %arg1[%c0_148, %c15, %c0_149] : memref<1x18x256xf32, #tpu.memory_space<vmem>>, vector<1x1x256xf32>
    %313 = vector.shape_cast %312 : vector<1x1x256xf32> to vector<1x256xf32>
    %c6_150 = arith.constant 6 : index
    %c0_151 = arith.constant 0 : index
    %314 = vector.load %arg4[%c6_150, %c0_151] : memref<8x256xf32, #tpu.memory_space<vmem>>, vector<1x256xf32>
    %315 = math.sqrt %314 : vector<1x256xf32>
    %c7_152 = arith.constant 7 : index
    %c0_153 = arith.constant 0 : index
    %316 = vector.load %arg4[%c7_152, %c0_153] : memref<8x256xf32, #tpu.memory_space<vmem>>, vector<1x256xf32>
    %317 = math.sqrt %316 : vector<1x256xf32>
    %cst_154 = arith.constant 1.000000e+00 : f32
    %318 = vector.broadcast %cst_154 : f32 to vector<1x256xf32>
    %319 = arith.subf %318, %309 : vector<1x256xf32>
    %320 = arith.mulf %311, %319 : vector<1x256xf32>
    %cst_155 = arith.constant 0.000000e+00 : f32
    %321 = vector.broadcast %cst_155 : f32 to vector<1x256xf32>
    %322 = arith.cmpf one, %320, %321 : vector<1x256xf32>
    %cst_156 = arith.constant 1.000000e+00 : f32
    %323 = vector.broadcast %cst_156 : f32 to vector<1x256xf32>
    %324 = arith.subf %323, %309 : vector<1x256xf32>
    %325 = arith.mulf %307, %324 : vector<1x256xf32>
    %cst_157 = arith.constant 0.000000e+00 : f32
    %326 = vector.broadcast %cst_157 : f32 to vector<1x256xf32>
    %327 = arith.cmpf one, %325, %326 : vector<1x256xf32>
    %cst_158 = arith.constant 1.000000e+00 : f32
    %328 = vector.broadcast %cst_158 : f32 to vector<1x256xf32>
    %329 = arith.subf %328, %307 : vector<1x256xf32>
    %330 = arith.mulf %309, %329 : vector<1x256xf32>
    %cst_159 = arith.constant 0.000000e+00 : f32
    %331 = vector.broadcast %cst_159 : f32 to vector<1x256xf32>
    %332 = arith.cmpf one, %330, %331 : vector<1x256xf32>
    %333 = arith.extui %322 : vector<1x256xi1> to vector<1x256xi32>
    %334 = arith.sitofp %333 : vector<1x256xi32> to vector<1x256xf32>
    %cst_160 = arith.constant dense<0.000000e+00> : vector<1xf32>
    %335 = vector.multi_reduction <add>, %334, %cst_160 [1] : vector<1x256xf32> to vector<1xf32>
    %336 = vector.shape_cast %335 : vector<1xf32> to vector<1x1xf32>
    %337 = arith.extui %327 : vector<1x256xi1> to vector<1x256xi32>
    %338 = arith.sitofp %337 : vector<1x256xi32> to vector<1x256xf32>
    %cst_161 = arith.constant dense<0.000000e+00> : vector<1xf32>
    %339 = vector.multi_reduction <add>, %338, %cst_161 [1] : vector<1x256xf32> to vector<1xf32>
    %340 = vector.shape_cast %339 : vector<1xf32> to vector<1x1xf32>
    %341 = arith.extui %332 : vector<1x256xi1> to vector<1x256xi32>
    %342 = arith.sitofp %341 : vector<1x256xi32> to vector<1x256xf32>
    %cst_162 = arith.constant dense<0.000000e+00> : vector<1xf32>
    %343 = vector.multi_reduction <add>, %342, %cst_162 [1] : vector<1x256xf32> to vector<1xf32>
    %344 = vector.shape_cast %343 : vector<1xf32> to vector<1x1xf32>
    %cst_163 = arith.constant 0.000000e+00 : f32
    %345 = vector.broadcast %cst_163 : f32 to vector<1x256xf32>
    %346 = arith.cmpf one, %313, %345 : vector<1x256xf32>
    %347 = arith.extui %346 : vector<1x256xi1> to vector<1x256xi32>
    %348 = arith.sitofp %347 : vector<1x256xi32> to vector<1x256xf32>
    %cst_164 = arith.constant dense<0.000000e+00> : vector<1xf32>
    %349 = vector.multi_reduction <add>, %348, %cst_164 [1] : vector<1x256xf32> to vector<1xf32>
    %350 = vector.shape_cast %349 : vector<1xf32> to vector<1x1xf32>
    %cst_165 = arith.constant 0.000000e+00 : f32
    %351 = vector.broadcast %cst_165 : f32 to vector<1x256xf32>
    %352 = arith.cmpf one, %311, %351 : vector<1x256xf32>
    %353 = arith.extui %352 : vector<1x256xi1> to vector<1x256xi32>
    %354 = arith.sitofp %353 : vector<1x256xi32> to vector<1x256xf32>
    %cst_166 = arith.constant dense<0.000000e+00> : vector<1xf32>
    %355 = vector.multi_reduction <add>, %354, %cst_166 [1] : vector<1x256xf32> to vector<1xf32>
    %356 = vector.shape_cast %355 : vector<1xf32> to vector<1x1xf32>
    %cst_167 = arith.constant 0.000000e+00 : f32
    %357 = vector.broadcast %cst_167 : f32 to vector<1x256xf32>
    %358 = arith.cmpf one, %307, %357 : vector<1x256xf32>
    %359 = arith.extui %358 : vector<1x256xi1> to vector<1x256xi32>
    %360 = arith.sitofp %359 : vector<1x256xi32> to vector<1x256xf32>
    %cst_168 = arith.constant dense<0.000000e+00> : vector<1xf32>
    %361 = vector.multi_reduction <add>, %360, %cst_168 [1] : vector<1x256xf32> to vector<1xf32>
    %362 = vector.shape_cast %361 : vector<1xf32> to vector<1x1xf32>
    %cst_169 = arith.constant 0.000000e+00 : f32
    %363 = vector.broadcast %cst_169 : f32 to vector<1x256xf32>
    %364 = arith.cmpf one, %309, %363 : vector<1x256xf32>
    %365 = arith.extui %364 : vector<1x256xi1> to vector<1x256xi32>
    %366 = arith.sitofp %365 : vector<1x256xi32> to vector<1x256xf32>
    %cst_170 = arith.constant dense<0.000000e+00> : vector<1xf32>
    %367 = vector.multi_reduction <add>, %366, %cst_170 [1] : vector<1x256xf32> to vector<1xf32>
    %368 = vector.shape_cast %367 : vector<1xf32> to vector<1x1xf32>
    %cst_171 = arith.constant -1.000000e+00 : f32
    %369 = vector.broadcast %cst_171 : f32 to vector<1x256xf32>
    %370 = arith.select %322, %315, %369 : vector<1x256xi1>, vector<1x256xf32>
    %cst_172 = arith.constant dense<0xFF800000> : vector<1xf32>
    %371 = vector.multi_reduction <maximumf>, %370, %cst_172 [1] : vector<1x256xf32> to vector<1xf32>
    %372 = vector.shape_cast %371 : vector<1xf32> to vector<1x1xf32>
    %cst_173 = arith.constant 0.000000e+00 : f32
    %373 = vector.broadcast %cst_173 : f32 to vector<1x1xf32>
    %374 = arith.cmpf ogt, %336, %373 : vector<1x1xf32>
    %cst_174 = arith.constant 0.000000e+00 : f32
    %375 = vector.broadcast %cst_174 : f32 to vector<1x1xf32>
    %376 = arith.cmpf ogt, %350, %375 : vector<1x1xf32>
    %377 = arith.andi %374, %376 : vector<1x1xi1>
    %cst_175 = arith.constant 8.000000e+00 : f32
    %378 = vector.broadcast %cst_175 : f32 to vector<1x1xf32>
    %379 = arith.select %377, %372, %378 : vector<1x1xi1>, vector<1x1xf32>
    %cst_176 = arith.constant 0.000000e+00 : f32
    %380 = vector.broadcast %cst_176 : f32 to vector<1x256xf32>
    %381 = arith.select %327, %315, %380 : vector<1x256xi1>, vector<1x256xf32>
    %cst_177 = arith.constant dense<0.000000e+00> : vector<1xf32>
    %382 = vector.multi_reduction <add>, %381, %cst_177 [1] : vector<1x256xf32> to vector<1xf32>
    %383 = vector.shape_cast %382 : vector<1xf32> to vector<1x1xf32>
    %cst_178 = arith.constant 0.000000e+00 : f32
    %384 = vector.broadcast %cst_178 : f32 to vector<1x256xf32>
    %385 = arith.select %332, %317, %384 : vector<1x256xi1>, vector<1x256xf32>
    %cst_179 = arith.constant dense<0.000000e+00> : vector<1xf32>
    %386 = vector.multi_reduction <add>, %385, %cst_179 [1] : vector<1x256xf32> to vector<1xf32>
    %387 = vector.shape_cast %386 : vector<1xf32> to vector<1x1xf32>
    %cst_180 = arith.constant 0.000000e+00 : f32
    %388 = vector.broadcast %cst_180 : f32 to vector<1x1xf32>
    %389 = arith.cmpf ogt, %340, %388 : vector<1x1xf32>
    %cst_181 = arith.constant 0.000000e+00 : f32
    %390 = vector.broadcast %cst_181 : f32 to vector<1x1xf32>
    %391 = arith.cmpf ogt, %350, %390 : vector<1x1xf32>
    %392 = arith.andi %389, %391 : vector<1x1xi1>
    %cst_182 = arith.constant 1.000000e+00 : f32
    %393 = vector.broadcast %cst_182 : f32 to vector<1x1xf32>
    %394 = arith.maximumf %362, %393 : vector<1x1xf32>
    %395 = arith.divf %383, %394 : vector<1x1xf32>
    %cst_183 = arith.constant 0.000000e+00 : f32
    %396 = vector.broadcast %cst_183 : f32 to vector<1x1xf32>
    %397 = arith.select %392, %395, %396 : vector<1x1xi1>, vector<1x1xf32>
    %cst_184 = arith.constant 0.000000e+00 : f32
    %398 = vector.broadcast %cst_184 : f32 to vector<1x1xf32>
    %399 = arith.cmpf ogt, %344, %398 : vector<1x1xf32>
    %cst_185 = arith.constant 0.000000e+00 : f32
    %400 = vector.broadcast %cst_185 : f32 to vector<1x1xf32>
    %401 = arith.cmpf ogt, %356, %400 : vector<1x1xf32>
    %402 = arith.andi %399, %401 : vector<1x1xi1>
    %cst_186 = arith.constant 1.000000e+00 : f32
    %403 = vector.broadcast %cst_186 : f32 to vector<1x1xf32>
    %404 = arith.maximumf %368, %403 : vector<1x1xf32>
    %405 = arith.divf %387, %404 : vector<1x1xf32>
    %cst_187 = arith.constant 0.000000e+00 : f32
    %406 = vector.broadcast %cst_187 : f32 to vector<1x1xf32>
    %407 = arith.select %402, %405, %406 : vector<1x1xi1>, vector<1x1xf32>
    %cst_188 = arith.constant 0.000000e+00 : f32
    %408 = vector.broadcast %cst_188 : f32 to vector<1x1xf32>
    %409 = arith.cmpf ogt, %362, %408 : vector<1x1xf32>
    %410 = arith.maximumf %397, %407 : vector<1x1xf32>
    %cst_189 = arith.constant 8.000000e+00 : f32
    %411 = vector.broadcast %cst_189 : f32 to vector<1x1xf32>
    %412 = arith.select %409, %410, %411 : vector<1x1xi1>, vector<1x1xf32>
    %c0_i32_190 = arith.constant 0 : i32
    %413 = vector.broadcast %c0_i32_190 : i32 to vector<1x128xi32>
    %414 = arith.cmpi eq, %67, %413 : vector<1x128xi32>
    %415 = vector.shape_cast %379 : vector<1x1xf32> to vector<1x1xf32>
    %416 = vector.broadcast %415 : vector<1x1xf32> to vector<1x128xf32>
    %417 = vector.shape_cast %412 : vector<1x1xf32> to vector<1x1xf32>
    %418 = vector.broadcast %417 : vector<1x1xf32> to vector<1x128xf32>
    %419 = arith.select %414, %416, %418 : vector<1x128xi1>, vector<1x128xf32>
    %c0_191 = arith.constant 0 : index
    %c3_192 = arith.constant 3 : index
    %c0_193 = arith.constant 0 : index
    %420 = vector.load %arg3[%c0_191, %c3_192, %c0_193] : memref<1x4x128xf32, #tpu.memory_space<vmem>>, vector<1x1x128xf32>
    %421 = vector.shape_cast %420 : vector<1x1x128xf32> to vector<1x128xf32>
    %422 = vector.shape_cast %419 : vector<1x128xf32> to vector<1x1x128xf32>
    tpu.vector_store %arg3[%c0_191, %c3_192, %c0_193], %422 {strides = array<i32>} : memref<1x4x128xf32, #tpu.memory_space<vmem>>, vector<1x1x128xf32>,
    return
  }
  func.func @transform_0(%arg0: i32) -> (i32, i32, i32) {
    %c0_i32 = arith.constant 0 : i32
    %c0_i32_0 = arith.constant 0 : i32
    %c0_i32_1 = arith.constant 0 : i32
    return %arg0, %c0_i32, %c0_i32_0 : i32, i32, i32
  }
  func.func @transform_1(%arg0: i32) -> (i32, i32, i32) {
    %c0_i32 = arith.constant 0 : i32
    %c0_i32_0 = arith.constant 0 : i32
    %c0_i32_1 = arith.constant 0 : i32
    return %arg0, %c0_i32, %c0_i32_0 : i32, i32, i32
  }
  func.func @transform_2(%arg0: i32) -> (i32, i32, i32) {
    %c0_i32 = arith.constant 0 : i32
    %c0_i32_0 = arith.constant 0 : i32
    %c0_i32_1 = arith.constant 0 : i32
    return %arg0, %c0_i32, %c0_i32_0 : i32, i32, i32
  }
}

</mosaic_0001>

<llo_original>
// kernel: tpu_custom_call.1
$region0: #{tpu_custom_call.1}
  #allocation0 [shape = 'u32[]', space=smem, size = 0x4, offset = 0x4, fixed_abs, tag = 'smem constant byte address 0x4 - core index']
  #allocation1 [shape = 'u32[144,128]{1,0:T(1,128)}', space=vmem, size = 0x12000, scoped, tag = 'internal scratch']
  #allocation2 [shape = 'f32[8,256]{1,0:T(8,128)}', space=vmem, size = 0x2000, scoped, tag = 'scratch operand']
  %s0 = inlined_call_operand.vmem [shape: f32[2,18,256], index: 0, kind: input, shape index: {}]
  %s1 = inlined_call_operand.vmem [shape: f32[2,256,10], index: 1, kind: input, shape index: {}]
  %s2 = inlined_call_operand.hbm [shape: f32[2,4,128], index: 2, kind: output, shape index: {}]
  %s3 = sld [smem:[#allocation0]]
  $region41: #{tpu_custom_call.1} parent=0
    _
  %s5 = ssub.s32 1, %s3
  %s6 = scalar_select 0, %s5, %s3
  $region1: #{tpu_custom_call.1} parent=0
    #allocation3 [shape = 'u8[4096]{0}', space=vmem, size = 0x1000, scoped, tag = 'output window, operand 0']
    #allocation4 [shape = 's32[2]{0}', space=sflag, size = 0x8, scoped, tag = 'scoped memory for tpu_custom_call.1']
    %7 = vsyncpa [#allocation4], 0
    %s8 = scalar_lea.sflag [#allocation4], 1
    %9 = vsyncpa %s8, 0
    loop: start=0, step=1, limit=4
    $region2: #{tpu_custom_call.1} parent=1 // loop_pre_header
      _
    $region3: #{tpu_custom_call.1} parent=1 // loop_header
      %s11 = sphi 0, %s15
      %p12 = scmp.ge.s32.totalorder %s11, 4
      %s21 = sphi 0, %s23
      %s24 = sphi 0, %s21
      %s25 = sphi 0, %s24
      %s41 = sphi 0, %s25
      %s47 = sphi 0, %s49
      %s50 = sphi 0, %s47
      %s51 = sphi 0, %s50
      %s67 = sphi 0, %s51
      %s73 = sphi 0, %s75
      %s76 = sphi 0, %s73
      %s77 = sphi 0, %s76
      %s93 = sphi 0, %s77
    $region4: #{tpu_custom_call.1} parent=1 // loop_header_branch
      %14 = sbr.rel (%p12) target = $region8
    $region5: #{tpu_custom_call.1} parent=1 // loop_body
      %s16 = ssub.s32 %s11, 1
      %s17 = ssub.s32 %s11, 2
      %s18 = sadd.s32 %s11, 1
      %s19 = ssub.s32 %s11, %s18
      %p20 = scmp.eq.s32.totalorder %s19, 0
      %s22 = sadd.s32 %s21, 1
      %s23 = scalar_select %p20, %s21, %s22
      %p26 = pneg %p20
      %p27 = scmp.eq.s32.totalorder %s11, 1
      %p28 = por %p26, %p27
      %p29 = scmp.ne.s32.totalorder %s21, %s24
      %p30 = scmp.eq.s32.totalorder %s11, 0
      %p31 = por %p29, %p30
      %p32 = scmp.ne.s32.totalorder %s21, %s24
      %p33 = scmp.eq.s32.totalorder %s16, 1
      %p34 = por %p32, %p33
      %p35 = scmp.ne.s32.totalorder %s24, %s25
      %p36 = scmp.eq.s32.totalorder %s16, 0
      %p37 = por %p35, %p36
      %p38 = scmp.ne.s32.totalorder %s24, %s25
      %p39 = scmp.eq.s32.totalorder %s17, 1
      %p40 = por %p38, %p39
      %p42 = scmp.ne.s32.totalorder %s25, %s41
      %p43 = scmp.eq.s32.totalorder %s17, 0
      %p44 = por %p42, %p43
      %s45 = ssub.s32 %s11, %s18
      %p46 = scmp.eq.s32.totalorder %s45, 0
      %s48 = sadd.s32 %s47, 1
      %s49 = scalar_select %p46, %s47, %s48
      %p52 = pneg %p46
      %p53 = scmp.eq.s32.totalorder %s11, 1
      %p54 = por %p52, %p53
      %p55 = scmp.ne.s32.totalorder %s47, %s50
      %p56 = scmp.eq.s32.totalorder %s11, 0
      %p57 = por %p55, %p56
      %p58 = scmp.ne.s32.totalorder %s47, %s50
      %p59 = scmp.eq.s32.totalorder %s16, 1
      %p60 = por %p58, %p59
      %p61 = scmp.ne.s32.totalorder %s50, %s51
      %p62 = scmp.eq.s32.totalorder %s16, 0
      %p63 = por %p61, %p62
      %p64 = scmp.ne.s32.totalorder %s50, %s51
      %p65 = scmp.eq.s32.totalorder %s17, 1
      %p66 = por %p64, %p65
      %p68 = scmp.ne.s32.totalorder %s51, %s67
      %p69 = scmp.eq.s32.totalorder %s17, 0
      %p70 = por %p68, %p69
      %s71 = ssub.s32 %s11, %s18
      %p72 = scmp.eq.s32.totalorder %s71, 0
      %s74 = sadd.s32 %s73, 1
      %s75 = scalar_select %p72, %s73, %s74
      %p78 = pneg %p72
      %p79 = scmp.eq.s32.totalorder %s11, 1
      %p80 = por %p78, %p79
      %p81 = scmp.ne.s32.totalorder %s73, %s76
      %p82 = scmp.eq.s32.totalorder %s11, 0
      %p83 = por %p81, %p82
      %p84 = scmp.ne.s32.totalorder %s73, %s76
      %p85 = scmp.eq.s32.totalorder %s16, 1
      %p86 = por %p84, %p85
      %p87 = scmp.ne.s32.totalorder %s76, %s77
      %p88 = scmp.eq.s32.totalorder %s16, 0
      %p89 = por %p87, %p88
      %p90 = scmp.ne.s32.totalorder %s76, %s77
      %p91 = scmp.eq.s32.totalorder %s17, 1
      %p92 = por %p90, %p91
      %p94 = scmp.ne.s32.totalorder %s77, %s93
      %p95 = scmp.eq.s32.totalorder %s17, 0
      %p96 = por %p94, %p95
      %p97 = scmp.le.s32.totalorder 1, %s11
      %p98 = scmp.lt.s32.totalorder %s11, 3
      %p99 = pnand %p97, %p98
      %p100 = pneg %p99
      // Predicated region
      $region9: #{tpu_custom_call.1} parent=5 // pred_check
        _
      $region10: #{tpu_custom_call.1} parent=5 // pred_check_branch
        %102 = sbr.rel (%p99) target = $region12
      $region11: #{tpu_custom_call.1} parent=5 // pred_region
        %s103 = ssub.s32 %s11, 1
      $region12: #{tpu_custom_call.1} parent=5 // pred_fallthru
        _
      %p104 = scmp.lt.s32.totalorder %s11, 2
      // Predicated region
      $region13: #{tpu_custom_call.1} parent=5 // pred_check
        %p105 = pneg %p104
      $region14: #{tpu_custom_call.1} parent=5 // pred_check_branch
        %107 = sbr.rel (%p105) target = $region16
      $region15: #{tpu_custom_call.1} parent=5 // pred_region
        // Predicated region
        $region17: #{tpu_custom_call.1} parent=15 // pred_check
          %p108 = pneg %p31
        $region18: #{tpu_custom_call.1} parent=15 // pred_check_branch
          %110 = sbr.rel (%p108) target = $region20
        $region19: #{tpu_custom_call.1} parent=15 // pred_region
          %p111 = scmp.lt.s32.totalorder %s11, 1
          %s112 = scalar_select %p111, %s11, 1
          %s113 = smul.addr %s112, 6
          %s114 = smul.addr %s113, 8
          %s115 = scalar_lea.vmem %s0, %s114
        $region20: #{tpu_custom_call.1} parent=15 // pred_fallthru
          _
        // Predicated region
        $region21: #{tpu_custom_call.1} parent=15 // pred_check
          %p116 = pneg %p57
        $region22: #{tpu_custom_call.1} parent=15 // pred_check_branch
          %118 = sbr.rel (%p116) target = $region24
        $region23: #{tpu_custom_call.1} parent=15 // pred_region
          %p119 = scmp.lt.s32.totalorder %s11, 1
          %s120 = scalar_select %p119, %s11, 1
          %s121 = smul.addr %s120, 32
          %s122 = smul.addr %s121, 8
          %s123 = scalar_lea.vmem %s1, %s122
        $region24: #{tpu_custom_call.1} parent=15 // pred_fallthru
          _
      $region16: #{tpu_custom_call.1} parent=5 // pred_fallthru
        _
      %p124 = scmp.le.s32.totalorder 1, %s11
      %p125 = scmp.lt.s32.totalorder %s11, 3
      %p126 = pnand %p124, %p125
      %p127 = pneg %p126
      // Predicated region
      $region25: #{tpu_custom_call.1} parent=5 // pred_check
        _
      $region26: #{tpu_custom_call.1} parent=5 // pred_check_branch
        %129 = sbr.rel (%p126) target = $region28
      $region27: #{tpu_custom_call.1} parent=5 // pred_region
        %s130 = ssub.s32 %s11, 1
        %p131 = scmp.lt.s32.totalorder %s16, 1
        %s132 = scalar_select %p131, %s16, 1
        %s133 = smul.addr %s132, 6
        %s134 = smul.addr %s133, 8
        %s135 = scalar_lea.vmem %s0, %s134
        %p136 = pneg %p37
        %p137 = pneg %p34
        %p138 = scmp.lt.s32.totalorder %s16, 1
        %s139 = scalar_select %p138, %s16, 1
        %s140 = smul.addr %s139, 32
        %s141 = smul.addr %s140, 8
        %s142 = scalar_lea.vmem %s1, %s141
        %p143 = pneg %p63
        %p144 = pneg %p60
        %p145 = pneg %p89
        %p146 = pneg %p86
        %s147 = sand.u32 %s76, 1
        %s148 = scalar_lea.sflag [#allocation4], %s147
        %s149 = sand.u32 %s76, 1
        %s150 = smul.addr %s149, 4
        %s151 = scalar_lea.vmem [#allocation3], %s150
        %p152 = scmp.lt.s32.totalorder %s16, 1
        %s153 = scalar_select %p152, %s16, 1
        %s154 = smul.addr %s153, 6
        %s155 = smul.addr %s154, 8
        %s156 = scalar_lea.vmem %s0, %s155
        %p157 = scmp.lt.s32.totalorder %s16, 1
        %s158 = scalar_select %p157, %s16, 1
        %s159 = smul.addr %s158, 32
        %s160 = smul.addr %s159, 8
        %s161 = scalar_lea.vmem %s1, %s160
        %162 = vst [vmem:[#allocation2] sm:$0xff] 1e+30
        %163 = vst [vmem:[#allocation2 + $0x8] sm:$0xff] 1e+30
        %s164 = scalar_lea.vmem %s156, 32
        %v165 = vld [vmem:[%s164] ss:$8 sm:$0x3]
        %s166 = scalar_lea.vmem %s156, 33
        %v167 = vld [vmem:[%s166] ss:$8 sm:$0x3]
        %v168 = vld [vmem:[%s161] sm:$0xff]
        %v169 = vld [vmem:[%s161 + $0x8] sm:$0xff]
        %v170 = vld [vmem:[%s161 + $0x10] sm:$0xff]
        %v171 = vld [vmem:[%s161 + $0x18] sm:$0xff]
        %v172 = vld [vmem:[%s161 + $0x20] sm:$0xff]
        %v173 = vld [vmem:[%s161 + $0x28] sm:$0xff]
        %v174 = vld [vmem:[%s161 + $0x30] sm:$0xff]
        %v175 = vld [vmem:[%s161 + $0x38] sm:$0xff]
        %v176 = vld [vmem:[%s161 + $0x40] sm:$0xff]
        %v177 = vld [vmem:[%s161 + $0x48] sm:$0xff]
        %v178 = vld [vmem:[%s161 + $0x50] sm:$0xff]
        %v179 = vld [vmem:[%s161 + $0x58] sm:$0xff]
        %v180 = vld [vmem:[%s161 + $0x60] sm:$0xff]
        %v181 = vld [vmem:[%s161 + $0x68] sm:$0xff]
        %v182 = vld [vmem:[%s161 + $0x70] sm:$0xff]
        %v183 = vld [vmem:[%s161 + $0x78] sm:$0xff]
        %v184 = vld [vmem:[%s161 + $0x80] sm:$0xff]
        %v185 = vld [vmem:[%s161 + $0x88] sm:$0xff]
        %v186 = vld [vmem:[%s161 + $0x90] sm:$0xff]
        %v187 = vld [vmem:[%s161 + $0x98] sm:$0xff]
        %v188 = vld [vmem:[%s161 + $0xa0] sm:$0xff]
        %v189 = vld [vmem:[%s161 + $0xa8] sm:$0xff]
        %v190 = vld [vmem:[%s161 + $0xb0] sm:$0xff]
        %v191 = vld [vmem:[%s161 + $0xb8] sm:$0xff]
        %v192 = vld [vmem:[%s161 + $0xc0] sm:$0xff]
        %v193 = vld [vmem:[%s161 + $0xc8] sm:$0xff]
        %v194 = vld [vmem:[%s161 + $0xd0] sm:$0xff]
        %v195 = vld [vmem:[%s161 + $0xd8] sm:$0xff]
        %v196 = vld [vmem:[%s161 + $0xe0] sm:$0xff]
        %v197 = vld [vmem:[%s161 + $0xe8] sm:$0xff]
        %v198 = vld [vmem:[%s161 + $0xf0] sm:$0xff]
        %v199 = vld [vmem:[%s161 + $0xf8] sm:$0xff]
        %201 = vset.pattern.permute.xlu0 8
        %202 = vperm.xlu0 %201, %v168
        %v203 = vpop.permute.xlu0 %202
        %206 = vset.pattern.permute.xlu0 8
        %207 = vperm.xlu0 %206, %v169
        %v208 = vpop.permute.xlu0 %207
        %211 = vset.pattern.permute.xlu0 8
        %212 = vperm.xlu0 %211, %v170
        %v213 = vpop.permute.xlu0 %212
        %216 = vset.pattern.permute.xlu0 8
        %217 = vperm.xlu0 %216, %v171
        %v218 = vpop.permute.xlu0 %217
        %221 = vset.pattern.permute.xlu0 8
        %222 = vperm.xlu0 %221, %v172
        %v223 = vpop.permute.xlu0 %222
        %226 = vset.pattern.permute.xlu0 8
        %227 = vperm.xlu0 %226, %v173
        %v228 = vpop.permute.xlu0 %227
        %231 = vset.pattern.permute.xlu0 8
        %232 = vperm.xlu0 %231, %v174
        %v233 = vpop.permute.xlu0 %232
        %236 = vset.pattern.permute.xlu0 8
        %237 = vperm.xlu0 %236, %v175
        %v238 = vpop.permute.xlu0 %237
        %241 = vset.pattern.permute.xlu0 8
        %242 = vperm.xlu0 %241, %v176
        %v243 = vpop.permute.xlu0 %242
        %246 = vset.pattern.permute.xlu0 8
        %247 = vperm.xlu0 %246, %v177
        %v248 = vpop.permute.xlu0 %247
        %251 = vset.pattern.permute.xlu0 8
        %252 = vperm.xlu0 %251, %v178
        %v253 = vpop.permute.xlu0 %252
        %256 = vset.pattern.permute.xlu0 8
        %257 = vperm.xlu0 %256, %v179
        %v258 = vpop.permute.xlu0 %257
        %261 = vset.pattern.permute.xlu0 8
        %262 = vperm.xlu0 %261, %v180
        %v263 = vpop.permute.xlu0 %262
        %266 = vset.pattern.permute.xlu0 8
        %267 = vperm.xlu0 %266, %v181
        %v268 = vpop.permute.xlu0 %267
        %271 = vset.pattern.permute.xlu0 8
        %272 = vperm.xlu0 %271, %v182
        %v273 = vpop.permute.xlu0 %272
        %276 = vset.pattern.permute.xlu0 8
        %277 = vperm.xlu0 %276, %v183
        %v278 = vpop.permute.xlu0 %277
        %281 = vset.pattern.permute.xlu0 8
        %282 = vperm.xlu0 %281, %v184
        %v283 = vpop.permute.xlu0 %282
        %286 = vset.pattern.permute.xlu0 8
        %287 = vperm.xlu0 %286, %v185
        %v288 = vpop.permute.xlu0 %287
        %291 = vset.pattern.permute.xlu0 8
        %292 = vperm.xlu0 %291, %v186
        %v293 = vpop.permute.xlu0 %292
        %296 = vset.pattern.permute.xlu0 8
        %297 = vperm.xlu0 %296, %v187
        %v298 = vpop.permute.xlu0 %297
        %301 = vset.pattern.permute.xlu0 8
        %302 = vperm.xlu0 %301, %v188
        %v303 = vpop.permute.xlu0 %302
        %306 = vset.pattern.permute.xlu0 8
        %307 = vperm.xlu0 %306, %v189
        %v308 = vpop.permute.xlu0 %307
        %311 = vset.pattern.permute.xlu0 8
        %312 = vperm.xlu0 %311, %v190
        %v313 = vpop.permute.xlu0 %312
        %316 = vset.pattern.permute.xlu0 8
        %317 = vperm.xlu0 %316, %v191
        %v318 = vpop.permute.xlu0 %317
        %321 = vset.pattern.permute.xlu0 8
        %322 = vperm.xlu0 %321, %v192
        %v323 = vpop.permute.xlu0 %322
        %326 = vset.pattern.permute.xlu0 8
        %327 = vperm.xlu0 %326, %v193
        %v328 = vpop.permute.xlu0 %327
        %331 = vset.pattern.permute.xlu0 8
        %332 = vperm.xlu0 %331, %v194
        %v333 = vpop.permute.xlu0 %332
        %336 = vset.pattern.permute.xlu0 8
        %337 = vperm.xlu0 %336, %v195
        %v338 = vpop.permute.xlu0 %337
        %341 = vset.pattern.permute.xlu0 8
        %342 = vperm.xlu0 %341, %v196
        %v343 = vpop.permute.xlu0 %342
        %346 = vset.pattern.permute.xlu0 8
        %347 = vperm.xlu0 %346, %v197
        %v348 = vpop.permute.xlu0 %347
        %351 = vset.pattern.permute.xlu0 8
        %352 = vperm.xlu0 %351, %v198
        %v353 = vpop.permute.xlu0 %352
        %356 = vset.pattern.permute.xlu0 8
        %357 = vperm.xlu0 %356, %v199
        %v358 = vpop.permute.xlu0 %357
        %v361 = vlaneseq
        %v362 = vshrl.u32 %v361, 7
        %v363 = vsub.s32 0, %v362
        %v364 = vrot.slane %v165, %v363
        %v365 = vlaneseq
        %v366 = vshrl.u32 %v365, 7
        %v367 = vsub.s32 1, %v366
        %v368 = vrot.slane %v165, %v367
        %v371 = vsub.f32 %v203, %v364
        %v372 = vsub.f32 %v203, %v368
        %v373 = vsub.f32 %v208, %v364
        %v374 = vsub.f32 %v208, %v368
        %v375 = vsub.f32 %v213, %v364
        %v376 = vsub.f32 %v213, %v368
        %v377 = vsub.f32 %v218, %v364
        %v378 = vsub.f32 %v218, %v368
        %v379 = vsub.f32 %v223, %v364
        %v380 = vsub.f32 %v223, %v368
        %v381 = vsub.f32 %v228, %v364
        %v382 = vsub.f32 %v228, %v368
        %v383 = vsub.f32 %v233, %v364
        %v384 = vsub.f32 %v233, %v368
        %v385 = vsub.f32 %v238, %v364
        %v386 = vsub.f32 %v238, %v368
        %v387 = vsub.f32 %v243, %v364
        %v388 = vsub.f32 %v243, %v368
        %v389 = vsub.f32 %v248, %v364
        %v390 = vsub.f32 %v248, %v368
        %v391 = vsub.f32 %v253, %v364
        %v392 = vsub.f32 %v253, %v368
        %v393 = vsub.f32 %v258, %v364
        %v394 = vsub.f32 %v258, %v368
        %v395 = vsub.f32 %v263, %v364
        %v396 = vsub.f32 %v263, %v368
        %v397 = vsub.f32 %v268, %v364
        %v398 = vsub.f32 %v268, %v368
        %v399 = vsub.f32 %v273, %v364
        %v400 = vsub.f32 %v273, %v368
        %v401 = vsub.f32 %v278, %v364
        %v402 = vsub.f32 %v278, %v368
        %v403 = vsub.f32 %v283, %v364
        %v404 = vsub.f32 %v283, %v368
        %v405 = vsub.f32 %v288, %v364
        %v406 = vsub.f32 %v288, %v368
        %v407 = vsub.f32 %v293, %v364
        %v408 = vsub.f32 %v293, %v368
        %v409 = vsub.f32 %v298, %v364
        %v410 = vsub.f32 %v298, %v368
        %v411 = vsub.f32 %v303, %v364
        %v412 = vsub.f32 %v303, %v368
        %v413 = vsub.f32 %v308, %v364
        %v414 = vsub.f32 %v308, %v368
        %v415 = vsub.f32 %v313, %v364
        %v416 = vsub.f32 %v313, %v368
        %v417 = vsub.f32 %v318, %v364
        %v418 = vsub.f32 %v318, %v368
        %v419 = vsub.f32 %v323, %v364
        %v420 = vsub.f32 %v323, %v368
        %v421 = vsub.f32 %v328, %v364
        %v422 = vsub.f32 %v328, %v368
        %v423 = vsub.f32 %v333, %v364
        %v424 = vsub.f32 %v333, %v368
        %v425 = vsub.f32 %v338, %v364
        %v426 = vsub.f32 %v338, %v368
        %v427 = vsub.f32 %v343, %v364
        %v428 = vsub.f32 %v343, %v368
        %v429 = vsub.f32 %v348, %v364
        %v430 = vsub.f32 %v348, %v368
        %v431 = vsub.f32 %v353, %v364
        %v432 = vsub.f32 %v353, %v368
        %v433 = vsub.f32 %v358, %v364
        %v434 = vsub.f32 %v358, %v368
        %435 = vset.pattern.permute.xlu0 9
        %436 = vperm.xlu0 %435, %v168
        %v437 = vpop.permute.xlu0 %436
        %439 = vset.pattern.permute.xlu0 9
        %440 = vperm.xlu0 %439, %v169
        %v441 = vpop.permute.xlu0 %440
        %443 = vset.pattern.permute.xlu0 9
        %444 = vperm.xlu0 %443, %v170
        %v445 = vpop.permute.xlu0 %444
        %447 = vset.pattern.permute.xlu0 9
        %448 = vperm.xlu0 %447, %v171
        %v449 = vpop.permute.xlu0 %448
        %451 = vset.pattern.permute.xlu0 9
        %452 = vperm.xlu0 %451, %v172
        %v453 = vpop.permute.xlu0 %452
        %455 = vset.pattern.permute.xlu0 9
        %456 = vperm.xlu0 %455, %v173
        %v457 = vpop.permute.xlu0 %456
        %459 = vset.pattern.permute.xlu0 9
        %460 = vperm.xlu0 %459, %v174
        %v461 = vpop.permute.xlu0 %460
        %463 = vset.pattern.permute.xlu0 9
        %464 = vperm.xlu0 %463, %v175
        %v465 = vpop.permute.xlu0 %464
        %467 = vset.pattern.permute.xlu0 9
        %468 = vperm.xlu0 %467, %v176
        %v469 = vpop.permute.xlu0 %468
        %471 = vset.pattern.permute.xlu0 9
        %472 = vperm.xlu0 %471, %v177
        %v473 = vpop.permute.xlu0 %472
        %475 = vset.pattern.permute.xlu0 9
        %476 = vperm.xlu0 %475, %v178
        %v477 = vpop.permute.xlu0 %476
        %479 = vset.pattern.permute.xlu0 9
        %480 = vperm.xlu0 %479, %v179
        %v481 = vpop.permute.xlu0 %480
        %483 = vset.pattern.permute.xlu0 9
        %484 = vperm.xlu0 %483, %v180
        %v485 = vpop.permute.xlu0 %484
        %487 = vset.pattern.permute.xlu0 9
        %488 = vperm.xlu0 %487, %v181
        %v489 = vpop.permute.xlu0 %488
        %491 = vset.pattern.permute.xlu0 9
        %492 = vperm.xlu0 %491, %v182
        %v493 = vpop.permute.xlu0 %492
        %495 = vset.pattern.permute.xlu0 9
        %496 = vperm.xlu0 %495, %v183
        %v497 = vpop.permute.xlu0 %496
        %499 = vset.pattern.permute.xlu0 9
        %500 = vperm.xlu0 %499, %v184
        %v501 = vpop.permute.xlu0 %500
        %503 = vset.pattern.permute.xlu0 9
        %504 = vperm.xlu0 %503, %v185
        %v505 = vpop.permute.xlu0 %504
        %507 = vset.pattern.permute.xlu0 9
        %508 = vperm.xlu0 %507, %v186
        %v509 = vpop.permute.xlu0 %508
        %511 = vset.pattern.permute.xlu0 9
        %512 = vperm.xlu0 %511, %v187
        %v513 = vpop.permute.xlu0 %512
        %515 = vset.pattern.permute.xlu0 9
        %516 = vperm.xlu0 %515, %v188
        %v517 = vpop.permute.xlu0 %516
        %519 = vset.pattern.permute.xlu0 9
        %520 = vperm.xlu0 %519, %v189
        %v521 = vpop.permute.xlu0 %520
        %523 = vset.pattern.permute.xlu0 9
        %524 = vperm.xlu0 %523, %v190
        %v525 = vpop.permute.xlu0 %524
        %527 = vset.pattern.permute.xlu0 9
        %528 = vperm.xlu0 %527, %v191
        %v529 = vpop.permute.xlu0 %528
        %531 = vset.pattern.permute.xlu0 9
        %532 = vperm.xlu0 %531, %v192
        %v533 = vpop.permute.xlu0 %532
        %535 = vset.pattern.permute.xlu0 9
        %536 = vperm.xlu0 %535, %v193
        %v537 = vpop.permute.xlu0 %536
        %539 = vset.pattern.permute.xlu0 9
        %540 = vperm.xlu0 %539, %v194
        %v541 = vpop.permute.xlu0 %540
        %543 = vset.pattern.permute.xlu0 9
        %544 = vperm.xlu0 %543, %v195
        %v545 = vpop.permute.xlu0 %544
        %547 = vset.pattern.permute.xlu0 9
        %548 = vperm.xlu0 %547, %v196
        %v549 = vpop.permute.xlu0 %548
        %551 = vset.pattern.permute.xlu0 9
        %552 = vperm.xlu0 %551, %v197
        %v553 = vpop.permute.xlu0 %552
        %555 = vset.pattern.permute.xlu0 9
        %556 = vperm.xlu0 %555, %v198
        %v557 = vpop.permute.xlu0 %556
        %559 = vset.pattern.permute.xlu0 9
        %560 = vperm.xlu0 %559, %v199
        %v561 = vpop.permute.xlu0 %560
        %v564 = vlaneseq
        %v565 = vshrl.u32 %v564, 7
        %v566 = vsub.s32 0, %v565
        %v567 = vrot.slane %v167, %v566
        %v568 = vlaneseq
        %v569 = vshrl.u32 %v568, 7
        %v570 = vsub.s32 1, %v569
        %v571 = vrot.slane %v167, %v570
        %v574 = vsub.f32 %v437, %v567
        %v575 = vsub.f32 %v437, %v571
        %v576 = vsub.f32 %v441, %v567
        %v577 = vsub.f32 %v441, %v571
        %v578 = vsub.f32 %v445, %v567
        %v579 = vsub.f32 %v445, %v571
        %v580 = vsub.f32 %v449, %v567
        %v581 = vsub.f32 %v449, %v571
        %v582 = vsub.f32 %v453, %v567
        %v583 = vsub.f32 %v453, %v571
        %v584 = vsub.f32 %v457, %v567
        %v585 = vsub.f32 %v457, %v571
        %v586 = vsub.f32 %v461, %v567
        %v587 = vsub.f32 %v461, %v571
        %v588 = vsub.f32 %v465, %v567
        %v589 = vsub.f32 %v465, %v571
        %v590 = vsub.f32 %v469, %v567
        %v591 = vsub.f32 %v469, %v571
        %v592 = vsub.f32 %v473, %v567
        %v593 = vsub.f32 %v473, %v571
        %v594 = vsub.f32 %v477, %v567
        %v595 = vsub.f32 %v477, %v571
        %v596 = vsub.f32 %v481, %v567
        %v597 = vsub.f32 %v481, %v571
        %v598 = vsub.f32 %v485, %v567
        %v599 = vsub.f32 %v485, %v571
        %v600 = vsub.f32 %v489, %v567
        %v601 = vsub.f32 %v489, %v571
        %v602 = vsub.f32 %v493, %v567
        %v603 = vsub.f32 %v493, %v571
        %v604 = vsub.f32 %v497, %v567
        %v605 = vsub.f32 %v497, %v571
        %v606 = vsub.f32 %v501, %v567
        %v607 = vsub.f32 %v501, %v571
        %v608 = vsub.f32 %v505, %v567
        %v609 = vsub.f32 %v505, %v571
        %v610 = vsub.f32 %v509, %v567
        %v611 = vsub.f32 %v509, %v571
        %v612 = vsub.f32 %v513, %v567
        %v613 = vsub.f32 %v513, %v571
        %v614 = vsub.f32 %v517, %v567
        %v615 = vsub.f32 %v517, %v571
        %v616 = vsub.f32 %v521, %v567
        %v617 = vsub.f32 %v521, %v571
        %v618 = vsub.f32 %v525, %v567
        %v619 = vsub.f32 %v525, %v571
        %v620 = vsub.f32 %v529, %v567
        %v621 = vsub.f32 %v529, %v571
        %v622 = vsub.f32 %v533, %v567
        %v623 = vsub.f32 %v533, %v571
        %v624 = vsub.f32 %v537, %v567
        %v625 = vsub.f32 %v537, %v571
        %v626 = vsub.f32 %v541, %v567
        %v627 = vsub.f32 %v541, %v571
        %v628 = vsub.f32 %v545, %v567
        %v629 = vsub.f32 %v545, %v571
        %v630 = vsub.f32 %v549, %v567
        %v631 = vsub.f32 %v549, %v571
        %v632 = vsub.f32 %v553, %v567
        %v633 = vsub.f32 %v553, %v571
        %v634 = vsub.f32 %v557, %v567
        %v635 = vsub.f32 %v557, %v571
        %v636 = vsub.f32 %v561, %v567
        %v637 = vsub.f32 %v561, %v571
        %v638 = vmul.f32 %v371, %v371
        %v639 = vmul.f32 %v372, %v372
        %v640 = vmul.f32 %v373, %v373
        %v641 = vmul.f32 %v374, %v374
        %v642 = vmul.f32 %v375, %v375
        %v643 = vmul.f32 %v376, %v376
        %v644 = vmul.f32 %v377, %v377
        %v645 = vmul.f32 %v378, %v378
        %v646 = vmul.f32 %v379, %v379
        %v647 = vmul.f32 %v380, %v380
        %v648 = vmul.f32 %v381, %v381
        %v649 = vmul.f32 %v382, %v382
        %v650 = vmul.f32 %v383, %v383
        %v651 = vmul.f32 %v384, %v384
        %v652 = vmul.f32 %v385, %v385
        %v653 = vmul.f32 %v386, %v386
        %v654 = vmul.f32 %v387, %v387
        %v655 = vmul.f32 %v388, %v388
        %v656 = vmul.f32 %v389, %v389
        %v657 = vmul.f32 %v390, %v390
        %v658 = vmul.f32 %v391, %v391
        %v659 = vmul.f32 %v392, %v392
        %v660 = vmul.f32 %v393, %v393
        %v661 = vmul.f32 %v394, %v394
        %v662 = vmul.f32 %v395, %v395
        %v663 = vmul.f32 %v396, %v396
        %v664 = vmul.f32 %v397, %v397
        %v665 = vmul.f32 %v398, %v398
        %v666 = vmul.f32 %v399, %v399
        %v667 = vmul.f32 %v400, %v400
        %v668 = vmul.f32 %v401, %v401
        %v669 = vmul.f32 %v402, %v402
        %v670 = vmul.f32 %v403, %v403
        %v671 = vmul.f32 %v404, %v404
        %v672 = vmul.f32 %v405, %v405
        %v673 = vmul.f32 %v406, %v406
        %v674 = vmul.f32 %v407, %v407
        %v675 = vmul.f32 %v408, %v408
        %v676 = vmul.f32 %v409, %v409
        %v677 = vmul.f32 %v410, %v410
        %v678 = vmul.f32 %v411, %v411
        %v679 = vmul.f32 %v412, %v412
        %v680 = vmul.f32 %v413, %v413
        %v681 = vmul.f32 %v414, %v414
        %v682 = vmul.f32 %v415, %v415
        %v683 = vmul.f32 %v416, %v416
        %v684 = vmul.f32 %v417, %v417
        %v685 = vmul.f32 %v418, %v418
        %v686 = vmul.f32 %v419, %v419
        %v687 = vmul.f32 %v420, %v420
        %v688 = vmul.f32 %v421, %v421
        %v689 = vmul.f32 %v422, %v422
        %v690 = vmul.f32 %v423, %v423
        %v691 = vmul.f32 %v424, %v424
        %v692 = vmul.f32 %v425, %v425
        %v693 = vmul.f32 %v426, %v426
        %v694 = vmul.f32 %v427, %v427
        %v695 = vmul.f32 %v428, %v428
        %v696 = vmul.f32 %v429, %v429
        %v697 = vmul.f32 %v430, %v430
        %v698 = vmul.f32 %v431, %v431
        %v699 = vmul.f32 %v432, %v432
        %v700 = vmul.f32 %v433, %v433
        %v701 = vmul.f32 %v434, %v434
        %v702 = vmul.f32 %v574, %v574
        %v703 = vmul.f32 %v575, %v575
        %v704 = vmul.f32 %v576, %v576
        %v705 = vmul.f32 %v577, %v577
        %v706 = vmul.f32 %v578, %v578
        %v707 = vmul.f32 %v579, %v579
        %v708 = vmul.f32 %v580, %v580
        %v709 = vmul.f32 %v581, %v581
        %v710 = vmul.f32 %v582, %v582
        %v711 = vmul.f32 %v583, %v583
        %v712 = vmul.f32 %v584, %v584
        %v713 = vmul.f32 %v585, %v585
        %v714 = vmul.f32 %v586, %v586
        %v715 = vmul.f32 %v587, %v587
        %v716 = vmul.f32 %v588, %v588
        %v717 = vmul.f32 %v589, %v589
        %v718 = vmul.f32 %v590, %v590
        %v719 = vmul.f32 %v591, %v591
        %v720 = vmul.f32 %v592, %v592
        %v721 = vmul.f32 %v593, %v593
        %v722 = vmul.f32 %v594, %v594
        %v723 = vmul.f32 %v595, %v595
        %v724 = vmul.f32 %v596, %v596
        %v725 = vmul.f32 %v597, %v597
        %v726 = vmul.f32 %v598, %v598
        %v727 = vmul.f32 %v599, %v599
        %v728 = vmul.f32 %v600, %v600
        %v729 = vmul.f32 %v601, %v601
        %v730 = vmul.f32 %v602, %v602
        %v731 = vmul.f32 %v603, %v603
        %v732 = vmul.f32 %v604, %v604
        %v733 = vmul.f32 %v605, %v605
        %v734 = vmul.f32 %v606, %v606
        %v735 = vmul.f32 %v607, %v607
        %v736 = vmul.f32 %v608, %v608
        %v737 = vmul.f32 %v609, %v609
        %v738 = vmul.f32 %v610, %v610
        %v739 = vmul.f32 %v611, %v611
        %v740 = vmul.f32 %v612, %v612
        %v741 = vmul.f32 %v613, %v613
        %v742 = vmul.f32 %v614, %v614
        %v743 = vmul.f32 %v615, %v615
        %v744 = vmul.f32 %v616, %v616
        %v745 = vmul.f32 %v617, %v617
        %v746 = vmul.f32 %v618, %v618
        %v747 = vmul.f32 %v619, %v619
        %v748 = vmul.f32 %v620, %v620
        %v749 = vmul.f32 %v621, %v621
        %v750 = vmul.f32 %v622, %v622
        %v751 = vmul.f32 %v623, %v623
        %v752 = vmul.f32 %v624, %v624
        %v753 = vmul.f32 %v625, %v625
        %v754 = vmul.f32 %v626, %v626
        %v755 = vmul.f32 %v627, %v627
        %v756 = vmul.f32 %v628, %v628
        %v757 = vmul.f32 %v629, %v629
        %v758 = vmul.f32 %v630, %v630
        %v759 = vmul.f32 %v631, %v631
        %v760 = vmul.f32 %v632, %v632
        %v761 = vmul.f32 %v633, %v633
        %v762 = vmul.f32 %v634, %v634
        %v763 = vmul.f32 %v635, %v635
        %v764 = vmul.f32 %v636, %v636
        %v765 = vmul.f32 %v637, %v637
        %v766 = vadd.f32 %v638, %v702
        %v767 = vadd.f32 %v639, %v703
        %v768 = vadd.f32 %v640, %v704
        %v769 = vadd.f32 %v641, %v705
        %v770 = vadd.f32 %v642, %v706
        %v771 = vadd.f32 %v643, %v707
        %v772 = vadd.f32 %v644, %v708
        %v773 = vadd.f32 %v645, %v709
        %v774 = vadd.f32 %v646, %v710
        %v775 = vadd.f32 %v647, %v711
        %v776 = vadd.f32 %v648, %v712
        %v777 = vadd.f32 %v649, %v713
        %v778 = vadd.f32 %v650, %v714
        %v779 = vadd.f32 %v651, %v715
        %v780 = vadd.f32 %v652, %v716
        %v781 = vadd.f32 %v653, %v717
        %v782 = vadd.f32 %v654, %v718
        %v783 = vadd.f32 %v655, %v719
        %v784 = vadd.f32 %v656, %v720
        %v785 = vadd.f32 %v657, %v721
        %v786 = vadd.f32 %v658, %v722
        %v787 = vadd.f32 %v659, %v723
        %v788 = vadd.f32 %v660, %v724
        %v789 = vadd.f32 %v661, %v725
        %v790 = vadd.f32 %v662, %v726
        %v791 = vadd.f32 %v663, %v727
        %v792 = vadd.f32 %v664, %v728
        %v793 = vadd.f32 %v665, %v729
        %v794 = vadd.f32 %v666, %v730
        %v795 = vadd.f32 %v667, %v731
        %v796 = vadd.f32 %v668, %v732
        %v797 = vadd.f32 %v669, %v733
        %v798 = vadd.f32 %v670, %v734
        %v799 = vadd.f32 %v671, %v735
        %v800 = vadd.f32 %v672, %v736
        %v801 = vadd.f32 %v673, %v737
        %v802 = vadd.f32 %v674, %v738
        %v803 = vadd.f32 %v675, %v739
        %v804 = vadd.f32 %v676, %v740
        %v805 = vadd.f32 %v677, %v741
        %v806 = vadd.f32 %v678, %v742
        %v807 = vadd.f32 %v679, %v743
        %v808 = vadd.f32 %v680, %v744
        %v809 = vadd.f32 %v681, %v745
        %v810 = vadd.f32 %v682, %v746
        %v811 = vadd.f32 %v683, %v747
        %v812 = vadd.f32 %v684, %v748
        %v813 = vadd.f32 %v685, %v749
        %v814 = vadd.f32 %v686, %v750
        %v815 = vadd.f32 %v687, %v751
        %v816 = vadd.f32 %v688, %v752
        %v817 = vadd.f32 %v689, %v753
        %v818 = vadd.f32 %v690, %v754
        %v819 = vadd.f32 %v691, %v755
        %v820 = vadd.f32 %v692, %v756
        %v821 = vadd.f32 %v693, %v757
        %v822 = vadd.f32 %v694, %v758
        %v823 = vadd.f32 %v695, %v759
        %v824 = vadd.f32 %v696, %v760
        %v825 = vadd.f32 %v697, %v761
        %v826 = vadd.f32 %v698, %v762
        %v827 = vadd.f32 %v699, %v763
        %v828 = vadd.f32 %v700, %v764
        %v829 = vadd.f32 %v701, %v765
        %830 = vset.pattern.permute.xlu0 2
        %831 = vperm.xlu0 %830, %v168
        %v832 = vpop.permute.xlu0 %831
        %834 = vset.pattern.permute.xlu0 2
        %835 = vperm.xlu0 %834, %v169
        %v836 = vpop.permute.xlu0 %835
        %838 = vset.pattern.permute.xlu0 2
        %839 = vperm.xlu0 %838, %v170
        %v840 = vpop.permute.xlu0 %839
        %842 = vset.pattern.permute.xlu0 2
        %843 = vperm.xlu0 %842, %v171
        %v844 = vpop.permute.xlu0 %843
        %846 = vset.pattern.permute.xlu0 2
        %847 = vperm.xlu0 %846, %v172
        %v848 = vpop.permute.xlu0 %847
        %850 = vset.pattern.permute.xlu0 2
        %851 = vperm.xlu0 %850, %v173
        %v852 = vpop.permute.xlu0 %851
        %854 = vset.pattern.permute.xlu0 2
        %855 = vperm.xlu0 %854, %v174
        %v856 = vpop.permute.xlu0 %855
        %858 = vset.pattern.permute.xlu0 2
        %859 = vperm.xlu0 %858, %v175
        %v860 = vpop.permute.xlu0 %859
        %862 = vset.pattern.permute.xlu0 2
        %863 = vperm.xlu0 %862, %v176
        %v864 = vpop.permute.xlu0 %863
        %866 = vset.pattern.permute.xlu0 2
        %867 = vperm.xlu0 %866, %v177
        %v868 = vpop.permute.xlu0 %867
        %870 = vset.pattern.permute.xlu0 2
        %871 = vperm.xlu0 %870, %v178
        %v872 = vpop.permute.xlu0 %871
        %874 = vset.pattern.permute.xlu0 2
        %875 = vperm.xlu0 %874, %v179
        %v876 = vpop.permute.xlu0 %875
        %878 = vset.pattern.permute.xlu0 2
        %879 = vperm.xlu0 %878, %v180
        %v880 = vpop.permute.xlu0 %879
        %882 = vset.pattern.permute.xlu0 2
        %883 = vperm.xlu0 %882, %v181
        %v884 = vpop.permute.xlu0 %883
        %886 = vset.pattern.permute.xlu0 2
        %887 = vperm.xlu0 %886, %v182
        %v888 = vpop.permute.xlu0 %887
        %890 = vset.pattern.permute.xlu0 2
        %891 = vperm.xlu0 %890, %v183
        %v892 = vpop.permute.xlu0 %891
        %894 = vset.pattern.permute.xlu0 2
        %895 = vperm.xlu0 %894, %v184
        %v896 = vpop.permute.xlu0 %895
        %898 = vset.pattern.permute.xlu0 2
        %899 = vperm.xlu0 %898, %v185
        %v900 = vpop.permute.xlu0 %899
        %902 = vset.pattern.permute.xlu0 2
        %903 = vperm.xlu0 %902, %v186
        %v904 = vpop.permute.xlu0 %903
        %906 = vset.pattern.permute.xlu0 2
        %907 = vperm.xlu0 %906, %v187
        %v908 = vpop.permute.xlu0 %907
        %910 = vset.pattern.permute.xlu0 2
        %911 = vperm.xlu0 %910, %v188
        %v912 = vpop.permute.xlu0 %911
        %914 = vset.pattern.permute.xlu0 2
        %915 = vperm.xlu0 %914, %v189
        %v916 = vpop.permute.xlu0 %915
        %918 = vset.pattern.permute.xlu0 2
        %919 = vperm.xlu0 %918, %v190
        %v920 = vpop.permute.xlu0 %919
        %922 = vset.pattern.permute.xlu0 2
        %923 = vperm.xlu0 %922, %v191
        %v924 = vpop.permute.xlu0 %923
        %926 = vset.pattern.permute.xlu0 2
        %927 = vperm.xlu0 %926, %v192
        %v928 = vpop.permute.xlu0 %927
        %930 = vset.pattern.permute.xlu0 2
        %931 = vperm.xlu0 %930, %v193
        %v932 = vpop.permute.xlu0 %931
        %934 = vset.pattern.permute.xlu0 2
        %935 = vperm.xlu0 %934, %v194
        %v936 = vpop.permute.xlu0 %935
        %938 = vset.pattern.permute.xlu0 2
        %939 = vperm.xlu0 %938, %v195
        %v940 = vpop.permute.xlu0 %939
        %942 = vset.pattern.permute.xlu0 2
        %943 = vperm.xlu0 %942, %v196
        %v944 = vpop.permute.xlu0 %943
        %946 = vset.pattern.permute.xlu0 2
        %947 = vperm.xlu0 %946, %v197
        %v948 = vpop.permute.xlu0 %947
        %950 = vset.pattern.permute.xlu0 2
        %951 = vperm.xlu0 %950, %v198
        %v952 = vpop.permute.xlu0 %951
        %954 = vset.pattern.permute.xlu0 2
        %955 = vperm.xlu0 %954, %v199
        %v956 = vpop.permute.xlu0 %955
        %v958 = vadd.f32 %v766, %v832
        %v959 = vadd.f32 %v767, %v832
        %v960 = vadd.f32 %v768, %v836
        %v961 = vadd.f32 %v769, %v836
        %v962 = vadd.f32 %v770, %v840
        %v963 = vadd.f32 %v771, %v840
        %v964 = vadd.f32 %v772, %v844
        %v965 = vadd.f32 %v773, %v844
        %v966 = vadd.f32 %v774, %v848
        %v967 = vadd.f32 %v775, %v848
        %v968 = vadd.f32 %v776, %v852
        %v969 = vadd.f32 %v777, %v852
        %v970 = vadd.f32 %v778, %v856
        %v971 = vadd.f32 %v779, %v856
        %v972 = vadd.f32 %v780, %v860
        %v973 = vadd.f32 %v781, %v860
        %v974 = vadd.f32 %v782, %v864
        %v975 = vadd.f32 %v783, %v864
        %v976 = vadd.f32 %v784, %v868
        %v977 = vadd.f32 %v785, %v868
        %v978 = vadd.f32 %v786, %v872
        %v979 = vadd.f32 %v787, %v872
        %v980 = vadd.f32 %v788, %v876
        %v981 = vadd.f32 %v789, %v876
        %v982 = vadd.f32 %v790, %v880
        %v983 = vadd.f32 %v791, %v880
        %v984 = vadd.f32 %v792, %v884
        %v985 = vadd.f32 %v793, %v884
        %v986 = vadd.f32 %v794, %v888
        %v987 = vadd.f32 %v795, %v888
        %v988 = vadd.f32 %v796, %v892
        %v989 = vadd.f32 %v797, %v892
        %v990 = vadd.f32 %v798, %v896
        %v991 = vadd.f32 %v799, %v896
        %v992 = vadd.f32 %v800, %v900
        %v993 = vadd.f32 %v801, %v900
        %v994 = vadd.f32 %v802, %v904
        %v995 = vadd.f32 %v803, %v904
        %v996 = vadd.f32 %v804, %v908
        %v997 = vadd.f32 %v805, %v908
        %v998 = vadd.f32 %v806, %v912
        %v999 = vadd.f32 %v807, %v912
        %v1000 = vadd.f32 %v808, %v916
        %v1001 = vadd.f32 %v809, %v916
        %v1002 = vadd.f32 %v810, %v920
        %v1003 = vadd.f32 %v811, %v920
        %v1004 = vadd.f32 %v812, %v924
        %v1005 = vadd.f32 %v813, %v924
        %v1006 = vadd.f32 %v814, %v928
        %v1007 = vadd.f32 %v815, %v928
        %v1008 = vadd.f32 %v816, %v932
        %v1009 = vadd.f32 %v817, %v932
        %v1010 = vadd.f32 %v818, %v936
        %v1011 = vadd.f32 %v819, %v936
        %v1012 = vadd.f32 %v820, %v940
        %v1013 = vadd.f32 %v821, %v940
        %v1014 = vadd.f32 %v822, %v944
        %v1015 = vadd.f32 %v823, %v944
        %v1016 = vadd.f32 %v824, %v948
        %v1017 = vadd.f32 %v825, %v948
        %v1018 = vadd.f32 %v826, %v952
        %v1019 = vadd.f32 %v827, %v952
        %v1020 = vadd.f32 %v828, %v956
        %v1021 = vadd.f32 %v829, %v956
        %v1022 = vmin.f32 %v958, %v962
        %v1023 = vmin.f32 %v960, %v964
        %v1024 = vmin.f32 %v1022, %v966
        %v1025 = vmin.f32 %v1023, %v968
        %v1026 = vmin.f32 %v1024, %v970
        %v1027 = vmin.f32 %v1025, %v972
        %v1028 = vmin.f32 %v1026, %v974
        %v1029 = vmin.f32 %v1027, %v976
        %v1030 = vmin.f32 %v1028, %v978
        %v1031 = vmin.f32 %v1029, %v980
        %v1032 = vmin.f32 %v1030, %v982
        %v1033 = vmin.f32 %v1031, %v984
        %v1034 = vmin.f32 %v1032, %v986
        %v1035 = vmin.f32 %v1033, %v988
        %v1036 = vmin.f32 %v1034, %v990
        %v1037 = vmin.f32 %v1035, %v992
        %v1038 = vmin.f32 %v1036, %v994
        %v1039 = vmin.f32 %v1037, %v996
        %v1040 = vmin.f32 %v1038, %v998
        %v1041 = vmin.f32 %v1039, %v1000
        %v1042 = vmin.f32 %v1040, %v1002
        %v1043 = vmin.f32 %v1041, %v1004
        %v1044 = vmin.f32 %v1042, %v1006
        %v1045 = vmin.f32 %v1043, %v1008
        %v1046 = vmin.f32 %v1044, %v1010
        %v1047 = vmin.f32 %v1045, %v1012
        %v1048 = vmin.f32 %v1046, %v1014
        %v1049 = vmin.f32 %v1047, %v1016
        %v1050 = vmin.f32 %v1048, %v1018
        %v1051 = vmin.f32 %v1049, %v1020
        %v1052 = vmin.f32 %v1050, %v1051
        %v1053 = vrot.slane %v1052, 4
        %v1054 = vmin.f32 %v1052, %v1053
        %v1055 = vrot.slane %v1054, 2
        %v1056 = vmin.f32 %v1054, %v1055
        %v1057 = vrot.slane %v1056, 1
        %v1058 = vmin.f32 %v1056, %v1057
        %v1059 = vmin.f32 %v959, %v963
        %v1060 = vmin.f32 %v961, %v965
        %v1061 = vmin.f32 %v1059, %v967
        %v1062 = vmin.f32 %v1060, %v969
        %v1063 = vmin.f32 %v1061, %v971
        %v1064 = vmin.f32 %v1062, %v973
        %v1065 = vmin.f32 %v1063, %v975
        %v1066 = vmin.f32 %v1064, %v977
        %v1067 = vmin.f32 %v1065, %v979
        %v1068 = vmin.f32 %v1066, %v981
        %v1069 = vmin.f32 %v1067, %v983
        %v1070 = vmin.f32 %v1068, %v985
        %v1071 = vmin.f32 %v1069, %v987
        %v1072 = vmin.f32 %v1070, %v989
        %v1073 = vmin.f32 %v1071, %v991
        %v1074 = vmin.f32 %v1072, %v993
        %v1075 = vmin.f32 %v1073, %v995
        %v1076 = vmin.f32 %v1074, %v997
        %v1077 = vmin.f32 %v1075, %v999
        %v1078 = vmin.f32 %v1076, %v1001
        %v1079 = vmin.f32 %v1077, %v1003
        %v1080 = vmin.f32 %v1078, %v1005
        %v1081 = vmin.f32 %v1079, %v1007
        %v1082 = vmin.f32 %v1080, %v1009
        %v1083 = vmin.f32 %v1081, %v1011
        %v1084 = vmin.f32 %v1082, %v1013
        %v1085 = vmin.f32 %v1083, %v1015
        %v1086 = vmin.f32 %v1084, %v1017
        %v1087 = vmin.f32 %v1085, %v1019
        %v1088 = vmin.f32 %v1086, %v1021
        %v1089 = vmin.f32 %v1087, %v1088
        %v1090 = vrot.slane %v1089, 4
        %v1091 = vmin.f32 %v1089, %v1090
        %v1092 = vrot.slane %v1091, 2
        %v1093 = vmin.f32 %v1091, %v1092
        %v1094 = vrot.slane %v1093, 1
        %v1095 = vmin.f32 %v1093, %v1094
        %1096 = vset.pattern.permute.xlu0 3
        %1097 = vperm.xlu0 %1096, %v168
        %v1098 = vpop.permute.xlu0 %1097
        %1100 = vset.pattern.permute.xlu0 3
        %1101 = vperm.xlu0 %1100, %v169
        %v1102 = vpop.permute.xlu0 %1101
        %1104 = vset.pattern.permute.xlu0 3
        %1105 = vperm.xlu0 %1104, %v170
        %v1106 = vpop.permute.xlu0 %1105
        %1108 = vset.pattern.permute.xlu0 3
        %1109 = vperm.xlu0 %1108, %v171
        %v1110 = vpop.permute.xlu0 %1109
        %1112 = vset.pattern.permute.xlu0 3
        %1113 = vperm.xlu0 %1112, %v172
        %v1114 = vpop.permute.xlu0 %1113
        %1116 = vset.pattern.permute.xlu0 3
        %1117 = vperm.xlu0 %1116, %v173
        %v1118 = vpop.permute.xlu0 %1117
        %1120 = vset.pattern.permute.xlu0 3
        %1121 = vperm.xlu0 %1120, %v174
        %v1122 = vpop.permute.xlu0 %1121
        %1124 = vset.pattern.permute.xlu0 3
        %1125 = vperm.xlu0 %1124, %v175
        %v1126 = vpop.permute.xlu0 %1125
        %1128 = vset.pattern.permute.xlu0 3
        %1129 = vperm.xlu0 %1128, %v176
        %v1130 = vpop.permute.xlu0 %1129
        %1132 = vset.pattern.permute.xlu0 3
        %1133 = vperm.xlu0 %1132, %v177
        %v1134 = vpop.permute.xlu0 %1133
        %1136 = vset.pattern.permute.xlu0 3
        %1137 = vperm.xlu0 %1136, %v178
        %v1138 = vpop.permute.xlu0 %1137
        %1140 = vset.pattern.permute.xlu0 3
        %1141 = vperm.xlu0 %1140, %v179
        %v1142 = vpop.permute.xlu0 %1141
        %1144 = vset.pattern.permute.xlu0 3
        %1145 = vperm.xlu0 %1144, %v180
        %v1146 = vpop.permute.xlu0 %1145
        %1148 = vset.pattern.permute.xlu0 3
        %1149 = vperm.xlu0 %1148, %v181
        %v1150 = vpop.permute.xlu0 %1149
        %1152 = vset.pattern.permute.xlu0 3
        %1153 = vperm.xlu0 %1152, %v182
        %v1154 = vpop.permute.xlu0 %1153
        %1156 = vset.pattern.permute.xlu0 3
        %1157 = vperm.xlu0 %1156, %v183
        %v1158 = vpop.permute.xlu0 %1157
        %1160 = vset.pattern.permute.xlu0 3
        %1161 = vperm.xlu0 %1160, %v184
        %v1162 = vpop.permute.xlu0 %1161
        %1164 = vset.pattern.permute.xlu0 3
        %1165 = vperm.xlu0 %1164, %v185
        %v1166 = vpop.permute.xlu0 %1165
        %1168 = vset.pattern.permute.xlu0 3
        %1169 = vperm.xlu0 %1168, %v186
        %v1170 = vpop.permute.xlu0 %1169
        %1172 = vset.pattern.permute.xlu0 3
        %1173 = vperm.xlu0 %1172, %v187
        %v1174 = vpop.permute.xlu0 %1173
        %1176 = vset.pattern.permute.xlu0 3
        %1177 = vperm.xlu0 %1176, %v188
        %v1178 = vpop.permute.xlu0 %1177
        %1180 = vset.pattern.permute.xlu0 3
        %1181 = vperm.xlu0 %1180, %v189
        %v1182 = vpop.permute.xlu0 %1181
        %1184 = vset.pattern.permute.xlu0 3
        %1185 = vperm.xlu0 %1184, %v190
        %v1186 = vpop.permute.xlu0 %1185
        %1188 = vset.pattern.permute.xlu0 3
        %1189 = vperm.xlu0 %1188, %v191
        %v1190 = vpop.permute.xlu0 %1189
        %1192 = vset.pattern.permute.xlu0 3
        %1193 = vperm.xlu0 %1192, %v192
        %v1194 = vpop.permute.xlu0 %1193
        %1196 = vset.pattern.permute.xlu0 3
        %1197 = vperm.xlu0 %1196, %v193
        %v1198 = vpop.permute.xlu0 %1197
        %1200 = vset.pattern.permute.xlu0 3
        %1201 = vperm.xlu0 %1200, %v194
        %v1202 = vpop.permute.xlu0 %1201
        %1204 = vset.pattern.permute.xlu0 3
        %1205 = vperm.xlu0 %1204, %v195
        %v1206 = vpop.permute.xlu0 %1205
        %1208 = vset.pattern.permute.xlu0 3
        %1209 = vperm.xlu0 %1208, %v196
        %v1210 = vpop.permute.xlu0 %1209
        %1212 = vset.pattern.permute.xlu0 3
        %1213 = vperm.xlu0 %1212, %v197
        %v1214 = vpop.permute.xlu0 %1213
        %1216 = vset.pattern.permute.xlu0 3
        %1217 = vperm.xlu0 %1216, %v198
        %v1218 = vpop.permute.xlu0 %1217
        %1220 = vset.pattern.permute.xlu0 3
        %1221 = vperm.xlu0 %1220, %v199
        %v1222 = vpop.permute.xlu0 %1221
        %v1224 = vadd.f32 %v766, %v1098
        %v1225 = vadd.f32 %v767, %v1098
        %v1226 = vadd.f32 %v768, %v1102
        %v1227 = vadd.f32 %v769, %v1102
        %v1228 = vadd.f32 %v770, %v1106
        %v1229 = vadd.f32 %v771, %v1106
        %v1230 = vadd.f32 %v772, %v1110
        %v1231 = vadd.f32 %v773, %v1110
        %v1232 = vadd.f32 %v774, %v1114
        %v1233 = vadd.f32 %v775, %v1114
        %v1234 = vadd.f32 %v776, %v1118
        %v1235 = vadd.f32 %v777, %v1118
        %v1236 = vadd.f32 %v778, %v1122
        %v1237 = vadd.f32 %v779, %v1122
        %v1238 = vadd.f32 %v780, %v1126
        %v1239 = vadd.f32 %v781, %v1126
        %v1240 = vadd.f32 %v782, %v1130
        %v1241 = vadd.f32 %v783, %v1130
        %v1242 = vadd.f32 %v784, %v1134
        %v1243 = vadd.f32 %v785, %v1134
        %v1244 = vadd.f32 %v786, %v1138
        %v1245 = vadd.f32 %v787, %v1138
        %v1246 = vadd.f32 %v788, %v1142
        %v1247 = vadd.f32 %v789, %v1142
        %v1248 = vadd.f32 %v790, %v1146
        %v1249 = vadd.f32 %v791, %v1146
        %v1250 = vadd.f32 %v792, %v1150
        %v1251 = vadd.f32 %v793, %v1150
        %v1252 = vadd.f32 %v794, %v1154
        %v1253 = vadd.f32 %v795, %v1154
        %v1254 = vadd.f32 %v796, %v1158
        %v1255 = vadd.f32 %v797, %v1158
        %v1256 = vadd.f32 %v798, %v1162
        %v1257 = vadd.f32 %v799, %v1162
        %v1258 = vadd.f32 %v800, %v1166
        %v1259 = vadd.f32 %v801, %v1166
        %v1260 = vadd.f32 %v802, %v1170
        %v1261 = vadd.f32 %v803, %v1170
        %v1262 = vadd.f32 %v804, %v1174
        %v1263 = vadd.f32 %v805, %v1174
        %v1264 = vadd.f32 %v806, %v1178
        %v1265 = vadd.f32 %v807, %v1178
        %v1266 = vadd.f32 %v808, %v1182
        %v1267 = vadd.f32 %v809, %v1182
        %v1268 = vadd.f32 %v810, %v1186
        %v1269 = vadd.f32 %v811, %v1186
        %v1270 = vadd.f32 %v812, %v1190
        %v1271 = vadd.f32 %v813, %v1190
        %v1272 = vadd.f32 %v814, %v1194
        %v1273 = vadd.f32 %v815, %v1194
        %v1274 = vadd.f32 %v816, %v1198
        %v1275 = vadd.f32 %v817, %v1198
        %v1276 = vadd.f32 %v818, %v1202
        %v1277 = vadd.f32 %v819, %v1202
        %v1278 = vadd.f32 %v820, %v1206
        %v1279 = vadd.f32 %v821, %v1206
        %v1280 = vadd.f32 %v822, %v1210
        %v1281 = vadd.f32 %v823, %v1210
        %v1282 = vadd.f32 %v824, %v1214
        %v1283 = vadd.f32 %v825, %v1214
        %v1284 = vadd.f32 %v826, %v1218
        %v1285 = vadd.f32 %v827, %v1218
        %v1286 = vadd.f32 %v828, %v1222
        %v1287 = vadd.f32 %v829, %v1222
        %v1288 = vmin.f32 %v1224, %v1228
        %v1289 = vmin.f32 %v1226, %v1230
        %v1290 = vmin.f32 %v1288, %v1232
        %v1291 = vmin.f32 %v1289, %v1234
        %v1292 = vmin.f32 %v1290, %v1236
        %v1293 = vmin.f32 %v1291, %v1238
        %v1294 = vmin.f32 %v1292, %v1240
        %v1295 = vmin.f32 %v1293, %v1242
        %v1296 = vmin.f32 %v1294, %v1244
        %v1297 = vmin.f32 %v1295, %v1246
        %v1298 = vmin.f32 %v1296, %v1248
        %v1299 = vmin.f32 %v1297, %v1250
        %v1300 = vmin.f32 %v1298, %v1252
        %v1301 = vmin.f32 %v1299, %v1254
        %v1302 = vmin.f32 %v1300, %v1256
        %v1303 = vmin.f32 %v1301, %v1258
        %v1304 = vmin.f32 %v1302, %v1260
        %v1305 = vmin.f32 %v1303, %v1262
        %v1306 = vmin.f32 %v1304, %v1264
        %v1307 = vmin.f32 %v1305, %v1266
        %v1308 = vmin.f32 %v1306, %v1268
        %v1309 = vmin.f32 %v1307, %v1270
        %v1310 = vmin.f32 %v1308, %v1272
        %v1311 = vmin.f32 %v1309, %v1274
        %v1312 = vmin.f32 %v1310, %v1276
        %v1313 = vmin.f32 %v1311, %v1278
        %v1314 = vmin.f32 %v1312, %v1280
        %v1315 = vmin.f32 %v1313, %v1282
        %v1316 = vmin.f32 %v1314, %v1284
        %v1317 = vmin.f32 %v1315, %v1286
        %v1318 = vmin.f32 %v1316, %v1317
        %v1319 = vrot.slane %v1318, 4
        %v1320 = vmin.f32 %v1318, %v1319
        %v1321 = vrot.slane %v1320, 2
        %v1322 = vmin.f32 %v1320, %v1321
        %v1323 = vrot.slane %v1322, 1
        %v1324 = vmin.f32 %v1322, %v1323
        %v1325 = vmin.f32 %v1225, %v1229
        %v1326 = vmin.f32 %v1227, %v1231
        %v1327 = vmin.f32 %v1325, %v1233
        %v1328 = vmin.f32 %v1326, %v1235
        %v1329 = vmin.f32 %v1327, %v1237
        %v1330 = vmin.f32 %v1328, %v1239
        %v1331 = vmin.f32 %v1329, %v1241
        %v1332 = vmin.f32 %v1330, %v1243
        %v1333 = vmin.f32 %v1331, %v1245
        %v1334 = vmin.f32 %v1332, %v1247
        %v1335 = vmin.f32 %v1333, %v1249
        %v1336 = vmin.f32 %v1334, %v1251
        %v1337 = vmin.f32 %v1335, %v1253
        %v1338 = vmin.f32 %v1336, %v1255
        %v1339 = vmin.f32 %v1337, %v1257
        %v1340 = vmin.f32 %v1338, %v1259
        %v1341 = vmin.f32 %v1339, %v1261
        %v1342 = vmin.f32 %v1340, %v1263
        %v1343 = vmin.f32 %v1341, %v1265
        %v1344 = vmin.f32 %v1342, %v1267
        %v1345 = vmin.f32 %v1343, %v1269
        %v1346 = vmin.f32 %v1344, %v1271
        %v1347 = vmin.f32 %v1345, %v1273
        %v1348 = vmin.f32 %v1346, %v1275
        %v1349 = vmin.f32 %v1347, %v1277
        %v1350 = vmin.f32 %v1348, %v1279
        %v1351 = vmin.f32 %v1349, %v1281
        %v1352 = vmin.f32 %v1350, %v1283
        %v1353 = vmin.f32 %v1351, %v1285
        %v1354 = vmin.f32 %v1352, %v1287
        %v1355 = vmin.f32 %v1353, %v1354
        %v1356 = vrot.slane %v1355, 4
        %v1357 = vmin.f32 %v1355, %v1356
        %v1358 = vrot.slane %v1357, 2
        %v1359 = vmin.f32 %v1357, %v1358
        %v1360 = vrot.slane %v1359, 1
        %v1361 = vmin.f32 %v1359, %v1360
        %s1362 = scalar_lea.vmem [#allocation2], 2
        %v1363 = vld [vmem:[%s1362] ss:$8 sm:$0x3]
        %v1366 = vcombine.low %v1058, %v1095
        %v1368 = vunpack.c.l.s4 1966171168
        %v1369 = vunpack.c.0.s8 %v1368
        %v1370 = vlaneseq
        %v1371 = vshrl.u32 %v1370, 7
        %v1372 = vsub.s32 %v1369, %v1371
        %v1373 = vrot.slane %v1366, %v1372
        %v1375 = vunpack.c.l.s4 1966171168
        %v1376 = vunpack.c.0.s8 %v1375
        %v1377 = vlaneseq
        %v1378 = vshrl.u32 %v1377, 7
        %v1379 = vsub.s32 %v1376, %v1378
        %v1380 = vrot.slane %v1373, %v1379
        %v1382 = vmin.f32 %v1363, %v1380
        %v1383 = vlaneseq
        %vm1384 = vcmp.ge.s32.totalorder %v1383, 0
        %vm1385 = vcmp.lt.s32.totalorder %v1383, 256
        %vm1386 = vmand %vm1384, %vm1385
        %1387 = vst.msk [vmem:[%s1362] ss:$8 sm:$0x3] %vm1386, %v1382
        %1388 = vst.msk [vmem:[%s1362] ss:$8 sm:$0x0] %vm1386, %v1382
        %s1389 = scalar_lea.vmem [#allocation2], 3
        %v1390 = vld [vmem:[%s1389] ss:$8 sm:$0x3]
        %v1393 = vcombine.low %v1324, %v1361
        %v1395 = vunpack.c.l.s4 1966171168
        %v1396 = vunpack.c.0.s8 %v1395
        %v1397 = vlaneseq
        %v1398 = vshrl.u32 %v1397, 7
        %v1399 = vsub.s32 %v1396, %v1398
        %v1400 = vrot.slane %v1393, %v1399
        %v1402 = vunpack.c.l.s4 1966171168
        %v1403 = vunpack.c.0.s8 %v1402
        %v1404 = vlaneseq
        %v1405 = vshrl.u32 %v1404, 7
        %v1406 = vsub.s32 %v1403, %v1405
        %v1407 = vrot.slane %v1400, %v1406
        %v1409 = vmin.f32 %v1390, %v1407
        %1410 = vst.msk [vmem:[%s1389] ss:$8 sm:$0x3] %vm1386, %v1409
        %1411 = vst.msk [vmem:[%s1389] ss:$8 sm:$0x0] %vm1386, %v1409
        %1412 = vset.pattern.permute.xlu0 4
        %1413 = vperm.xlu0 %1412, %v168
        %v1414 = vpop.permute.xlu0 %1413
        %1416 = vset.pattern.permute.xlu0 4
        %1417 = vperm.xlu0 %1416, %v169
        %v1418 = vpop.permute.xlu0 %1417
        %1420 = vset.pattern.permute.xlu0 4
        %1421 = vperm.xlu0 %1420, %v170
        %v1422 = vpop.permute.xlu0 %1421
        %1424 = vset.pattern.permute.xlu0 4
        %1425 = vperm.xlu0 %1424, %v171
        %v1426 = vpop.permute.xlu0 %1425
        %1428 = vset.pattern.permute.xlu0 4
        %1429 = vperm.xlu0 %1428, %v172
        %v1430 = vpop.permute.xlu0 %1429
        %1432 = vset.pattern.permute.xlu0 4
        %1433 = vperm.xlu0 %1432, %v173
        %v1434 = vpop.permute.xlu0 %1433
        %1436 = vset.pattern.permute.xlu0 4
        %1437 = vperm.xlu0 %1436, %v174
        %v1438 = vpop.permute.xlu0 %1437
        %1440 = vset.pattern.permute.xlu0 4
        %1441 = vperm.xlu0 %1440, %v175
        %v1442 = vpop.permute.xlu0 %1441
        %1444 = vset.pattern.permute.xlu0 4
        %1445 = vperm.xlu0 %1444, %v176
        %v1446 = vpop.permute.xlu0 %1445
        %1448 = vset.pattern.permute.xlu0 4
        %1449 = vperm.xlu0 %1448, %v177
        %v1450 = vpop.permute.xlu0 %1449
        %1452 = vset.pattern.permute.xlu0 4
        %1453 = vperm.xlu0 %1452, %v178
        %v1454 = vpop.permute.xlu0 %1453
        %1456 = vset.pattern.permute.xlu0 4
        %1457 = vperm.xlu0 %1456, %v179
        %v1458 = vpop.permute.xlu0 %1457
        %1460 = vset.pattern.permute.xlu0 4
        %1461 = vperm.xlu0 %1460, %v180
        %v1462 = vpop.permute.xlu0 %1461
        %1464 = vset.pattern.permute.xlu0 4
        %1465 = vperm.xlu0 %1464, %v181
        %v1466 = vpop.permute.xlu0 %1465
        %1468 = vset.pattern.permute.xlu0 4
        %1469 = vperm.xlu0 %1468, %v182
        %v1470 = vpop.permute.xlu0 %1469
        %1472 = vset.pattern.permute.xlu0 4
        %1473 = vperm.xlu0 %1472, %v183
        %v1474 = vpop.permute.xlu0 %1473
        %1476 = vset.pattern.permute.xlu0 4
        %1477 = vperm.xlu0 %1476, %v184
        %v1478 = vpop.permute.xlu0 %1477
        %1480 = vset.pattern.permute.xlu0 4
        %1481 = vperm.xlu0 %1480, %v185
        %v1482 = vpop.permute.xlu0 %1481
        %1484 = vset.pattern.permute.xlu0 4
        %1485 = vperm.xlu0 %1484, %v186
        %v1486 = vpop.permute.xlu0 %1485
        %1488 = vset.pattern.permute.xlu0 4
        %1489 = vperm.xlu0 %1488, %v187
        %v1490 = vpop.permute.xlu0 %1489
        %1492 = vset.pattern.permute.xlu0 4
        %1493 = vperm.xlu0 %1492, %v188
        %v1494 = vpop.permute.xlu0 %1493
        %1496 = vset.pattern.permute.xlu0 4
        %1497 = vperm.xlu0 %1496, %v189
        %v1498 = vpop.permute.xlu0 %1497
        %1500 = vset.pattern.permute.xlu0 4
        %1501 = vperm.xlu0 %1500, %v190
        %v1502 = vpop.permute.xlu0 %1501
        %1504 = vset.pattern.permute.xlu0 4
        %1505 = vperm.xlu0 %1504, %v191
        %v1506 = vpop.permute.xlu0 %1505
        %1508 = vset.pattern.permute.xlu0 4
        %1509 = vperm.xlu0 %1508, %v192
        %v1510 = vpop.permute.xlu0 %1509
        %1512 = vset.pattern.permute.xlu0 4
        %1513 = vperm.xlu0 %1512, %v193
        %v1514 = vpop.permute.xlu0 %1513
        %1516 = vset.pattern.permute.xlu0 4
        %1517 = vperm.xlu0 %1516, %v194
        %v1518 = vpop.permute.xlu0 %1517
        %1520 = vset.pattern.permute.xlu0 4
        %1521 = vperm.xlu0 %1520, %v195
        %v1522 = vpop.permute.xlu0 %1521
        %1524 = vset.pattern.permute.xlu0 4
        %1525 = vperm.xlu0 %1524, %v196
        %v1526 = vpop.permute.xlu0 %1525
        %1528 = vset.pattern.permute.xlu0 4
        %1529 = vperm.xlu0 %1528, %v197
        %v1530 = vpop.permute.xlu0 %1529
        %1532 = vset.pattern.permute.xlu0 4
        %1533 = vperm.xlu0 %1532, %v198
        %v1534 = vpop.permute.xlu0 %1533
        %1536 = vset.pattern.permute.xlu0 4
        %1537 = vperm.xlu0 %1536, %v199
        %v1538 = vpop.permute.xlu0 %1537
        %v1540 = vadd.f32 %v766, %v1414
        %v1541 = vadd.f32 %v767, %v1414
        %v1542 = vadd.f32 %v768, %v1418
        %v1543 = vadd.f32 %v769, %v1418
        %v1544 = vadd.f32 %v770, %v1422
        %v1545 = vadd.f32 %v771, %v1422
        %v1546 = vadd.f32 %v772, %v1426
        %v1547 = vadd.f32 %v773, %v1426
        %v1548 = vadd.f32 %v774, %v1430
        %v1549 = vadd.f32 %v775, %v1430
        %v1550 = vadd.f32 %v776, %v1434
        %v1551 = vadd.f32 %v777, %v1434
        %v1552 = vadd.f32 %v778, %v1438
        %v1553 = vadd.f32 %v779, %v1438
        %v1554 = vadd.f32 %v780, %v1442
        %v1555 = vadd.f32 %v781, %v1442
        %v1556 = vadd.f32 %v782, %v1446
        %v1557 = vadd.f32 %v783, %v1446
        %v1558 = vadd.f32 %v784, %v1450
        %v1559 = vadd.f32 %v785, %v1450
        %v1560 = vadd.f32 %v786, %v1454
        %v1561 = vadd.f32 %v787, %v1454
        %v1562 = vadd.f32 %v788, %v1458
        %v1563 = vadd.f32 %v789, %v1458
        %v1564 = vadd.f32 %v790, %v1462
        %v1565 = vadd.f32 %v791, %v1462
        %v1566 = vadd.f32 %v792, %v1466
        %v1567 = vadd.f32 %v793, %v1466
        %v1568 = vadd.f32 %v794, %v1470
        %v1569 = vadd.f32 %v795, %v1470
        %v1570 = vadd.f32 %v796, %v1474
        %v1571 = vadd.f32 %v797, %v1474
        %v1572 = vadd.f32 %v798, %v1478
        %v1573 = vadd.f32 %v799, %v1478
        %v1574 = vadd.f32 %v800, %v1482
        %v1575 = vadd.f32 %v801, %v1482
        %v1576 = vadd.f32 %v802, %v1486
        %v1577 = vadd.f32 %v803, %v1486
        %v1578 = vadd.f32 %v804, %v1490
        %v1579 = vadd.f32 %v805, %v1490
        %v1580 = vadd.f32 %v806, %v1494
        %v1581 = vadd.f32 %v807, %v1494
        %v1582 = vadd.f32 %v808, %v1498
        %v1583 = vadd.f32 %v809, %v1498
        %v1584 = vadd.f32 %v810, %v1502
        %v1585 = vadd.f32 %v811, %v1502
        %v1586 = vadd.f32 %v812, %v1506
        %v1587 = vadd.f32 %v813, %v1506
        %v1588 = vadd.f32 %v814, %v1510
        %v1589 = vadd.f32 %v815, %v1510
        %v1590 = vadd.f32 %v816, %v1514
        %v1591 = vadd.f32 %v817, %v1514
        %v1592 = vadd.f32 %v818, %v1518
        %v1593 = vadd.f32 %v819, %v1518
        %v1594 = vadd.f32 %v820, %v1522
        %v1595 = vadd.f32 %v821, %v1522
        %v1596 = vadd.f32 %v822, %v1526
        %v1597 = vadd.f32 %v823, %v1526
        %v1598 = vadd.f32 %v824, %v1530
        %v1599 = vadd.f32 %v825, %v1530
        %v1600 = vadd.f32 %v826, %v1534
        %v1601 = vadd.f32 %v827, %v1534
        %v1602 = vadd.f32 %v828, %v1538
        %v1603 = vadd.f32 %v829, %v1538
        %v1604 = vmin.f32 %v1540, %v1544
        %v1605 = vmin.f32 %v1542, %v1546
        %v1606 = vmin.f32 %v1604, %v1548
        %v1607 = vmin.f32 %v1605, %v1550
        %v1608 = vmin.f32 %v1606, %v1552
        %v1609 = vmin.f32 %v1607, %v1554
        %v1610 = vmin.f32 %v1608, %v1556
        %v1611 = vmin.f32 %v1609, %v1558
        %v1612 = vmin.f32 %v1610, %v1560
        %v1613 = vmin.f32 %v1611, %v1562
        %v1614 = vmin.f32 %v1612, %v1564
        %v1615 = vmin.f32 %v1613, %v1566
        %v1616 = vmin.f32 %v1614, %v1568
        %v1617 = vmin.f32 %v1615, %v1570
        %v1618 = vmin.f32 %v1616, %v1572
        %v1619 = vmin.f32 %v1617, %v1574
        %v1620 = vmin.f32 %v1618, %v1576
        %v1621 = vmin.f32 %v1619, %v1578
        %v1622 = vmin.f32 %v1620, %v1580
        %v1623 = vmin.f32 %v1621, %v1582
        %v1624 = vmin.f32 %v1622, %v1584
        %v1625 = vmin.f32 %v1623, %v1586
        %v1626 = vmin.f32 %v1624, %v1588
        %v1627 = vmin.f32 %v1625, %v1590
        %v1628 = vmin.f32 %v1626, %v1592
        %v1629 = vmin.f32 %v1627, %v1594
        %v1630 = vmin.f32 %v1628, %v1596
        %v1631 = vmin.f32 %v1629, %v1598
        %v1632 = vmin.f32 %v1630, %v1600
        %v1633 = vmin.f32 %v1631, %v1602
        %v1634 = vmin.f32 %v1632, %v1633
        %v1635 = vrot.slane %v1634, 4
        %v1636 = vmin.f32 %v1634, %v1635
        %v1637 = vrot.slane %v1636, 2
        %v1638 = vmin.f32 %v1636, %v1637
        %v1639 = vrot.slane %v1638, 1
        %v1640 = vmin.f32 %v1638, %v1639
        %v1641 = vmin.f32 %v1541, %v1545
        %v1642 = vmin.f32 %v1543, %v1547
        %v1643 = vmin.f32 %v1641, %v1549
        %v1644 = vmin.f32 %v1642, %v1551
        %v1645 = vmin.f32 %v1643, %v1553
        %v1646 = vmin.f32 %v1644, %v1555
        %v1647 = vmin.f32 %v1645, %v1557
        %v1648 = vmin.f32 %v1646, %v1559
        %v1649 = vmin.f32 %v1647, %v1561
        %v1650 = vmin.f32 %v1648, %v1563
        %v1651 = vmin.f32 %v1649, %v1565
        %v1652 = vmin.f32 %v1650, %v1567
        %v1653 = vmin.f32 %v1651, %v1569
        %v1654 = vmin.f32 %v1652, %v1571
        %v1655 = vmin.f32 %v1653, %v1573
        %v1656 = vmin.f32 %v1654, %v1575
        %v1657 = vmin.f32 %v1655, %v1577
        %v1658 = vmin.f32 %v1656, %v1579
        %v1659 = vmin.f32 %v1657, %v1581
        %v1660 = vmin.f32 %v1658, %v1583
        %v1661 = vmin.f32 %v1659, %v1585
        %v1662 = vmin.f32 %v1660, %v1587
        %v1663 = vmin.f32 %v1661, %v1589
        %v1664 = vmin.f32 %v1662, %v1591
        %v1665 = vmin.f32 %v1663, %v1593
        %v1666 = vmin.f32 %v1664, %v1595
        %v1667 = vmin.f32 %v1665, %v1597
        %v1668 = vmin.f32 %v1666, %v1599
        %v1669 = vmin.f32 %v1667, %v1601
        %v1670 = vmin.f32 %v1668, %v1603
        %v1671 = vmin.f32 %v1669, %v1670
        %v1672 = vrot.slane %v1671, 4
        %v1673 = vmin.f32 %v1671, %v1672
        %v1674 = vrot.slane %v1673, 2
        %v1675 = vmin.f32 %v1673, %v1674
        %v1676 = vrot.slane %v1675, 1
        %v1677 = vmin.f32 %v1675, %v1676
        %1678 = vset.pattern.permute.xlu0 5
        %1679 = vperm.xlu0 %1678, %v168
        %v1680 = vpop.permute.xlu0 %1679
        %1682 = vset.pattern.permute.xlu0 5
        %1683 = vperm.xlu0 %1682, %v169
        %v1684 = vpop.permute.xlu0 %1683
        %1686 = vset.pattern.permute.xlu0 5
        %1687 = vperm.xlu0 %1686, %v170
        %v1688 = vpop.permute.xlu0 %1687
        %1690 = vset.pattern.permute.xlu0 5
        %1691 = vperm.xlu0 %1690, %v171
        %v1692 = vpop.permute.xlu0 %1691
        %1694 = vset.pattern.permute.xlu0 5
        %1695 = vperm.xlu0 %1694, %v172
        %v1696 = vpop.permute.xlu0 %1695
        %1698 = vset.pattern.permute.xlu0 5
        %1699 = vperm.xlu0 %1698, %v173
        %v1700 = vpop.permute.xlu0 %1699
        %1702 = vset.pattern.permute.xlu0 5
        %1703 = vperm.xlu0 %1702, %v174
        %v1704 = vpop.permute.xlu0 %1703
        %1706 = vset.pattern.permute.xlu0 5
        %1707 = vperm.xlu0 %1706, %v175
        %v1708 = vpop.permute.xlu0 %1707
        %1710 = vset.pattern.permute.xlu0 5
        %1711 = vperm.xlu0 %1710, %v176
        %v1712 = vpop.permute.xlu0 %1711
        %1714 = vset.pattern.permute.xlu0 5
        %1715 = vperm.xlu0 %1714, %v177
        %v1716 = vpop.permute.xlu0 %1715
        %1718 = vset.pattern.permute.xlu0 5
        %1719 = vperm.xlu0 %1718, %v178
        %v1720 = vpop.permute.xlu0 %1719
        %1722 = vset.pattern.permute.xlu0 5
        %1723 = vperm.xlu0 %1722, %v179
        %v1724 = vpop.permute.xlu0 %1723
        %1726 = vset.pattern.permute.xlu0 5
        %1727 = vperm.xlu0 %1726, %v180
        %v1728 = vpop.permute.xlu0 %1727
        %1730 = vset.pattern.permute.xlu0 5
        %1731 = vperm.xlu0 %1730, %v181
        %v1732 = vpop.permute.xlu0 %1731
        %1734 = vset.pattern.permute.xlu0 5
        %1735 = vperm.xlu0 %1734, %v182
        %v1736 = vpop.permute.xlu0 %1735
        %1738 = vset.pattern.permute.xlu0 5
        %1739 = vperm.xlu0 %1738, %v183
        %v1740 = vpop.permute.xlu0 %1739
        %1742 = vset.pattern.permute.xlu0 5
        %1743 = vperm.xlu0 %1742, %v184
        %v1744 = vpop.permute.xlu0 %1743
        %1746 = vset.pattern.permute.xlu0 5
        %1747 = vperm.xlu0 %1746, %v185
        %v1748 = vpop.permute.xlu0 %1747
        %1750 = vset.pattern.permute.xlu0 5
        %1751 = vperm.xlu0 %1750, %v186
        %v1752 = vpop.permute.xlu0 %1751
        %1754 = vset.pattern.permute.xlu0 5
        %1755 = vperm.xlu0 %1754, %v187
        %v1756 = vpop.permute.xlu0 %1755
        %1758 = vset.pattern.permute.xlu0 5
        %1759 = vperm.xlu0 %1758, %v188
        %v1760 = vpop.permute.xlu0 %1759
        %1762 = vset.pattern.permute.xlu0 5
        %1763 = vperm.xlu0 %1762, %v189
        %v1764 = vpop.permute.xlu0 %1763
        %1766 = vset.pattern.permute.xlu0 5
        %1767 = vperm.xlu0 %1766, %v190
        %v1768 = vpop.permute.xlu0 %1767
        %1770 = vset.pattern.permute.xlu0 5
        %1771 = vperm.xlu0 %1770, %v191
        %v1772 = vpop.permute.xlu0 %1771
        %1774 = vset.pattern.permute.xlu0 5
        %1775 = vperm.xlu0 %1774, %v192
        %v1776 = vpop.permute.xlu0 %1775
        %1778 = vset.pattern.permute.xlu0 5
        %1779 = vperm.xlu0 %1778, %v193
        %v1780 = vpop.permute.xlu0 %1779
        %1782 = vset.pattern.permute.xlu0 5
        %1783 = vperm.xlu0 %1782, %v194
        %v1784 = vpop.permute.xlu0 %1783
        %1786 = vset.pattern.permute.xlu0 5
        %1787 = vperm.xlu0 %1786, %v195
        %v1788 = vpop.permute.xlu0 %1787
        %1790 = vset.pattern.permute.xlu0 5
        %1791 = vperm.xlu0 %1790, %v196
        %v1792 = vpop.permute.xlu0 %1791
        %1794 = vset.pattern.permute.xlu0 5
        %1795 = vperm.xlu0 %1794, %v197
        %v1796 = vpop.permute.xlu0 %1795
        %1798 = vset.pattern.permute.xlu0 5
        %1799 = vperm.xlu0 %1798, %v198
        %v1800 = vpop.permute.xlu0 %1799
        %1802 = vset.pattern.permute.xlu0 5
        %1803 = vperm.xlu0 %1802, %v199
        %v1804 = vpop.permute.xlu0 %1803
        %v1806 = vadd.f32 %v766, %v1680
        %v1807 = vadd.f32 %v767, %v1680
        %v1808 = vadd.f32 %v768, %v1684
        %v1809 = vadd.f32 %v769, %v1684
        %v1810 = vadd.f32 %v770, %v1688
        %v1811 = vadd.f32 %v771, %v1688
        %v1812 = vadd.f32 %v772, %v1692
        %v1813 = vadd.f32 %v773, %v1692
        %v1814 = vadd.f32 %v774, %v1696
        %v1815 = vadd.f32 %v775, %v1696
        %v1816 = vadd.f32 %v776, %v1700
        %v1817 = vadd.f32 %v777, %v1700
        %v1818 = vadd.f32 %v778, %v1704
        %v1819 = vadd.f32 %v779, %v1704
        %v1820 = vadd.f32 %v780, %v1708
        %v1821 = vadd.f32 %v781, %v1708
        %v1822 = vadd.f32 %v782, %v1712
        %v1823 = vadd.f32 %v783, %v1712
        %v1824 = vadd.f32 %v784, %v1716
        %v1825 = vadd.f32 %v785, %v1716
        %v1826 = vadd.f32 %v786, %v1720
        %v1827 = vadd.f32 %v787, %v1720
        %v1828 = vadd.f32 %v788, %v1724
        %v1829 = vadd.f32 %v789, %v1724
        %v1830 = vadd.f32 %v790, %v1728
        %v1831 = vadd.f32 %v791, %v1728
        %v1832 = vadd.f32 %v792, %v1732
        %v1833 = vadd.f32 %v793, %v1732
        %v1834 = vadd.f32 %v794, %v1736
        %v1835 = vadd.f32 %v795, %v1736
        %v1836 = vadd.f32 %v796, %v1740
        %v1837 = vadd.f32 %v797, %v1740
        %v1838 = vadd.f32 %v798, %v1744
        %v1839 = vadd.f32 %v799, %v1744
        %v1840 = vadd.f32 %v800, %v1748
        %v1841 = vadd.f32 %v801, %v1748
        %v1842 = vadd.f32 %v802, %v1752
        %v1843 = vadd.f32 %v803, %v1752
        %v1844 = vadd.f32 %v804, %v1756
        %v1845 = vadd.f32 %v805, %v1756
        %v1846 = vadd.f32 %v806, %v1760
        %v1847 = vadd.f32 %v807, %v1760
        %v1848 = vadd.f32 %v808, %v1764
        %v1849 = vadd.f32 %v809, %v1764
        %v1850 = vadd.f32 %v810, %v1768
        %v1851 = vadd.f32 %v811, %v1768
        %v1852 = vadd.f32 %v812, %v1772
        %v1853 = vadd.f32 %v813, %v1772
        %v1854 = vadd.f32 %v814, %v1776
        %v1855 = vadd.f32 %v815, %v1776
        %v1856 = vadd.f32 %v816, %v1780
        %v1857 = vadd.f32 %v817, %v1780
        %v1858 = vadd.f32 %v818, %v1784
        %v1859 = vadd.f32 %v819, %v1784
        %v1860 = vadd.f32 %v820, %v1788
        %v1861 = vadd.f32 %v821, %v1788
        %v1862 = vadd.f32 %v822, %v1792
        %v1863 = vadd.f32 %v823, %v1792
        %v1864 = vadd.f32 %v824, %v1796
        %v1865 = vadd.f32 %v825, %v1796
        %v1866 = vadd.f32 %v826, %v1800
        %v1867 = vadd.f32 %v827, %v1800
        %v1868 = vadd.f32 %v828, %v1804
        %v1869 = vadd.f32 %v829, %v1804
        %v1870 = vmin.f32 %v1806, %v1810
        %v1871 = vmin.f32 %v1808, %v1812
        %v1872 = vmin.f32 %v1870, %v1814
        %v1873 = vmin.f32 %v1871, %v1816
        %v1874 = vmin.f32 %v1872, %v1818
        %v1875 = vmin.f32 %v1873, %v1820
        %v1876 = vmin.f32 %v1874, %v1822
        %v1877 = vmin.f32 %v1875, %v1824
        %v1878 = vmin.f32 %v1876, %v1826
        %v1879 = vmin.f32 %v1877, %v1828
        %v1880 = vmin.f32 %v1878, %v1830
        %v1881 = vmin.f32 %v1879, %v1832
        %v1882 = vmin.f32 %v1880, %v1834
        %v1883 = vmin.f32 %v1881, %v1836
        %v1884 = vmin.f32 %v1882, %v1838
        %v1885 = vmin.f32 %v1883, %v1840
        %v1886 = vmin.f32 %v1884, %v1842
        %v1887 = vmin.f32 %v1885, %v1844
        %v1888 = vmin.f32 %v1886, %v1846
        %v1889 = vmin.f32 %v1887, %v1848
        %v1890 = vmin.f32 %v1888, %v1850
        %v1891 = vmin.f32 %v1889, %v1852
        %v1892 = vmin.f32 %v1890, %v1854
        %v1893 = vmin.f32 %v1891, %v1856
        %v1894 = vmin.f32 %v1892, %v1858
        %v1895 = vmin.f32 %v1893, %v1860
        %v1896 = vmin.f32 %v1894, %v1862
        %v1897 = vmin.f32 %v1895, %v1864
        %v1898 = vmin.f32 %v1896, %v1866
        %v1899 = vmin.f32 %v1897, %v1868
        %v1900 = vmin.f32 %v1898, %v1899
        %v1901 = vrot.slane %v1900, 4
        %v1902 = vmin.f32 %v1900, %v1901
        %v1903 = vrot.slane %v1902, 2
        %v1904 = vmin.f32 %v1902, %v1903
        %v1905 = vrot.slane %v1904, 1
        %v1906 = vmin.f32 %v1904, %v1905
        %v1907 = vmin.f32 %v1807, %v1811
        %v1908 = vmin.f32 %v1809, %v1813
        %v1909 = vmin.f32 %v1907, %v1815
        %v1910 = vmin.f32 %v1908, %v1817
        %v1911 = vmin.f32 %v1909, %v1819
        %v1912 = vmin.f32 %v1910, %v1821
        %v1913 = vmin.f32 %v1911, %v1823
        %v1914 = vmin.f32 %v1912, %v1825
        %v1915 = vmin.f32 %v1913, %v1827
        %v1916 = vmin.f32 %v1914, %v1829
        %v1917 = vmin.f32 %v1915, %v1831
        %v1918 = vmin.f32 %v1916, %v1833
        %v1919 = vmin.f32 %v1917, %v1835
        %v1920 = vmin.f32 %v1918, %v1837
        %v1921 = vmin.f32 %v1919, %v1839
        %v1922 = vmin.f32 %v1920, %v1841
        %v1923 = vmin.f32 %v1921, %v1843
        %v1924 = vmin.f32 %v1922, %v1845
        %v1925 = vmin.f32 %v1923, %v1847
        %v1926 = vmin.f32 %v1924, %v1849
        %v1927 = vmin.f32 %v1925, %v1851
        %v1928 = vmin.f32 %v1926, %v1853
        %v1929 = vmin.f32 %v1927, %v1855
        %v1930 = vmin.f32 %v1928, %v1857
        %v1931 = vmin.f32 %v1929, %v1859
        %v1932 = vmin.f32 %v1930, %v1861
        %v1933 = vmin.f32 %v1931, %v1863
        %v1934 = vmin.f32 %v1932, %v1865
        %v1935 = vmin.f32 %v1933, %v1867
        %v1936 = vmin.f32 %v1934, %v1869
        %v1937 = vmin.f32 %v1935, %v1936
        %v1938 = vrot.slane %v1937, 4
        %v1939 = vmin.f32 %v1937, %v1938
        %v1940 = vrot.slane %v1939, 2
        %v1941 = vmin.f32 %v1939, %v1940
        %v1942 = vrot.slane %v1941, 1
        %v1943 = vmin.f32 %v1941, %v1942
        %s1944 = scalar_lea.vmem [#allocation2], 4
        %v1945 = vld [vmem:[%s1944] ss:$8 sm:$0x3]
        %v1948 = vcombine.low %v1640, %v1677
        %v1950 = vunpack.c.l.s4 1966171168
        %v1951 = vunpack.c.0.s8 %v1950
        %v1952 = vlaneseq
        %v1953 = vshrl.u32 %v1952, 7
        %v1954 = vsub.s32 %v1951, %v1953
        %v1955 = vrot.slane %v1948, %v1954
        %v1957 = vunpack.c.l.s4 1966171168
        %v1958 = vunpack.c.0.s8 %v1957
        %v1959 = vlaneseq
        %v1960 = vshrl.u32 %v1959, 7
        %v1961 = vsub.s32 %v1958, %v1960
        %v1962 = vrot.slane %v1955, %v1961
        %v1964 = vmin.f32 %v1945, %v1962
        %1965 = vst.msk [vmem:[%s1944] ss:$8 sm:$0x3] %vm1386, %v1964
        %1966 = vst.msk [vmem:[%s1944] ss:$8 sm:$0x0] %vm1386, %v1964
        %s1967 = scalar_lea.vmem [#allocation2], 5
        %v1968 = vld [vmem:[%s1967] ss:$8 sm:$0x3]
        %v1971 = vcombine.low %v1906, %v1943
        %v1973 = vunpack.c.l.s4 1966171168
        %v1974 = vunpack.c.0.s8 %v1973
        %v1975 = vlaneseq
        %v1976 = vshrl.u32 %v1975, 7
        %v1977 = vsub.s32 %v1974, %v1976
        %v1978 = vrot.slane %v1971, %v1977
        %v1980 = vunpack.c.l.s4 1966171168
        %v1981 = vunpack.c.0.s8 %v1980
        %v1982 = vlaneseq
        %v1983 = vshrl.u32 %v1982, 7
        %v1984 = vsub.s32 %v1981, %v1983
        %v1985 = vrot.slane %v1978, %v1984
        %v1987 = vmin.f32 %v1968, %v1985
        %1988 = vst.msk [vmem:[%s1967] ss:$8 sm:$0x3] %vm1386, %v1987
        %1989 = vst.msk [vmem:[%s1967] ss:$8 sm:$0x0] %vm1386, %v1987
        %1990 = vset.pattern.permute.xlu0 6
        %1991 = vperm.xlu0 %1990, %v168
        %v1992 = vpop.permute.xlu0 %1991
        %1994 = vset.pattern.permute.xlu0 6
        %1995 = vperm.xlu0 %1994, %v169
        %v1996 = vpop.permute.xlu0 %1995
        %1998 = vset.pattern.permute.xlu0 6
        %1999 = vperm.xlu0 %1998, %v170
        %v2000 = vpop.permute.xlu0 %1999
        %2002 = vset.pattern.permute.xlu0 6
        %2003 = vperm.xlu0 %2002, %v171
        %v2004 = vpop.permute.xlu0 %2003
        %2006 = vset.pattern.permute.xlu0 6
        %2007 = vperm.xlu0 %2006, %v172
        %v2008 = vpop.permute.xlu0 %2007
        %2010 = vset.pattern.permute.xlu0 6
        %2011 = vperm.xlu0 %2010, %v173
        %v2012 = vpop.permute.xlu0 %2011
        %2014 = vset.pattern.permute.xlu0 6
        %2015 = vperm.xlu0 %2014, %v174
        %v2016 = vpop.permute.xlu0 %2015
        %2018 = vset.pattern.permute.xlu0 6
        %2019 = vperm.xlu0 %2018, %v175
        %v2020 = vpop.permute.xlu0 %2019
        %2022 = vset.pattern.permute.xlu0 6
        %2023 = vperm.xlu0 %2022, %v176
        %v2024 = vpop.permute.xlu0 %2023
        %2026 = vset.pattern.permute.xlu0 6
        %2027 = vperm.xlu0 %2026, %v177
        %v2028 = vpop.permute.xlu0 %2027
        %2030 = vset.pattern.permute.xlu0 6
        %2031 = vperm.xlu0 %2030, %v178
        %v2032 = vpop.permute.xlu0 %2031
        %2034 = vset.pattern.permute.xlu0 6
        %2035 = vperm.xlu0 %2034, %v179
        %v2036 = vpop.permute.xlu0 %2035
        %2038 = vset.pattern.permute.xlu0 6
        %2039 = vperm.xlu0 %2038, %v180
        %v2040 = vpop.permute.xlu0 %2039
        %2042 = vset.pattern.permute.xlu0 6
        %2043 = vperm.xlu0 %2042, %v181
        %v2044 = vpop.permute.xlu0 %2043
        %2046 = vset.pattern.permute.xlu0 6
        %2047 = vperm.xlu0 %2046, %v182
        %v2048 = vpop.permute.xlu0 %2047
        %2050 = vset.pattern.permute.xlu0 6
        %2051 = vperm.xlu0 %2050, %v183
        %v2052 = vpop.permute.xlu0 %2051
        %2054 = vset.pattern.permute.xlu0 6
        %2055 = vperm.xlu0 %2054, %v184
        %v2056 = vpop.permute.xlu0 %2055
        %2058 = vset.pattern.permute.xlu0 6
        %2059 = vperm.xlu0 %2058, %v185
        %v2060 = vpop.permute.xlu0 %2059
        %2062 = vset.pattern.permute.xlu0 6
        %2063 = vperm.xlu0 %2062, %v186
        %v2064 = vpop.permute.xlu0 %2063
        %2066 = vset.pattern.permute.xlu0 6
        %2067 = vperm.xlu0 %2066, %v187
        %v2068 = vpop.permute.xlu0 %2067
        %2070 = vset.pattern.permute.xlu0 6
        %2071 = vperm.xlu0 %2070, %v188
        %v2072 = vpop.permute.xlu0 %2071
        %2074 = vset.pattern.permute.xlu0 6
        %2075 = vperm.xlu0 %2074, %v189
        %v2076 = vpop.permute.xlu0 %2075
        %2078 = vset.pattern.permute.xlu0 6
        %2079 = vperm.xlu0 %2078, %v190
        %v2080 = vpop.permute.xlu0 %2079
        %2082 = vset.pattern.permute.xlu0 6
        %2083 = vperm.xlu0 %2082, %v191
        %v2084 = vpop.permute.xlu0 %2083
        %2086 = vset.pattern.permute.xlu0 6
        %2087 = vperm.xlu0 %2086, %v192
        %v2088 = vpop.permute.xlu0 %2087
        %2090 = vset.pattern.permute.xlu0 6
        %2091 = vperm.xlu0 %2090, %v193
        %v2092 = vpop.permute.xlu0 %2091
        %2094 = vset.pattern.permute.xlu0 6
        %2095 = vperm.xlu0 %2094, %v194
        %v2096 = vpop.permute.xlu0 %2095
        %2098 = vset.pattern.permute.xlu0 6
        %2099 = vperm.xlu0 %2098, %v195
        %v2100 = vpop.permute.xlu0 %2099
        %2102 = vset.pattern.permute.xlu0 6
        %2103 = vperm.xlu0 %2102, %v196
        %v2104 = vpop.permute.xlu0 %2103
        %2106 = vset.pattern.permute.xlu0 6
        %2107 = vperm.xlu0 %2106, %v197
        %v2108 = vpop.permute.xlu0 %2107
        %2110 = vset.pattern.permute.xlu0 6
        %2111 = vperm.xlu0 %2110, %v198
        %v2112 = vpop.permute.xlu0 %2111
        %2114 = vset.pattern.permute.xlu0 6
        %2115 = vperm.xlu0 %2114, %v199
        %v2116 = vpop.permute.xlu0 %2115
        %v2118 = vadd.f32 %v766, %v1992
        %v2119 = vadd.f32 %v767, %v1992
        %v2120 = vadd.f32 %v768, %v1996
        %v2121 = vadd.f32 %v769, %v1996
        %v2122 = vadd.f32 %v770, %v2000
        %v2123 = vadd.f32 %v771, %v2000
        %v2124 = vadd.f32 %v772, %v2004
        %v2125 = vadd.f32 %v773, %v2004
        %v2126 = vadd.f32 %v774, %v2008
        %v2127 = vadd.f32 %v775, %v2008
        %v2128 = vadd.f32 %v776, %v2012
        %v2129 = vadd.f32 %v777, %v2012
        %v2130 = vadd.f32 %v778, %v2016
        %v2131 = vadd.f32 %v779, %v2016
        %v2132 = vadd.f32 %v780, %v2020
        %v2133 = vadd.f32 %v781, %v2020
        %v2134 = vadd.f32 %v782, %v2024
        %v2135 = vadd.f32 %v783, %v2024
        %v2136 = vadd.f32 %v784, %v2028
        %v2137 = vadd.f32 %v785, %v2028
        %v2138 = vadd.f32 %v786, %v2032
        %v2139 = vadd.f32 %v787, %v2032
        %v2140 = vadd.f32 %v788, %v2036
        %v2141 = vadd.f32 %v789, %v2036
        %v2142 = vadd.f32 %v790, %v2040
        %v2143 = vadd.f32 %v791, %v2040
        %v2144 = vadd.f32 %v792, %v2044
        %v2145 = vadd.f32 %v793, %v2044
        %v2146 = vadd.f32 %v794, %v2048
        %v2147 = vadd.f32 %v795, %v2048
        %v2148 = vadd.f32 %v796, %v2052
        %v2149 = vadd.f32 %v797, %v2052
        %v2150 = vadd.f32 %v798, %v2056
        %v2151 = vadd.f32 %v799, %v2056
        %v2152 = vadd.f32 %v800, %v2060
        %v2153 = vadd.f32 %v801, %v2060
        %v2154 = vadd.f32 %v802, %v2064
        %v2155 = vadd.f32 %v803, %v2064
        %v2156 = vadd.f32 %v804, %v2068
        %v2157 = vadd.f32 %v805, %v2068
        %v2158 = vadd.f32 %v806, %v2072
        %v2159 = vadd.f32 %v807, %v2072
        %v2160 = vadd.f32 %v808, %v2076
        %v2161 = vadd.f32 %v809, %v2076
        %v2162 = vadd.f32 %v810, %v2080
        %v2163 = vadd.f32 %v811, %v2080
        %v2164 = vadd.f32 %v812, %v2084
        %v2165 = vadd.f32 %v813, %v2084
        %v2166 = vadd.f32 %v814, %v2088
        %v2167 = vadd.f32 %v815, %v2088
        %v2168 = vadd.f32 %v816, %v2092
        %v2169 = vadd.f32 %v817, %v2092
        %v2170 = vadd.f32 %v818, %v2096
        %v2171 = vadd.f32 %v819, %v2096
        %v2172 = vadd.f32 %v820, %v2100
        %v2173 = vadd.f32 %v821, %v2100
        %v2174 = vadd.f32 %v822, %v2104
        %v2175 = vadd.f32 %v823, %v2104
        %v2176 = vadd.f32 %v824, %v2108
        %v2177 = vadd.f32 %v825, %v2108
        %v2178 = vadd.f32 %v826, %v2112
        %v2179 = vadd.f32 %v827, %v2112
        %v2180 = vadd.f32 %v828, %v2116
        %v2181 = vadd.f32 %v829, %v2116
        %v2182 = vmin.f32 %v2118, %v2122
        %v2183 = vmin.f32 %v2120, %v2124
        %v2184 = vmin.f32 %v2182, %v2126
        %v2185 = vmin.f32 %v2183, %v2128
        %v2186 = vmin.f32 %v2184, %v2130
        %v2187 = vmin.f32 %v2185, %v2132
        %v2188 = vmin.f32 %v2186, %v2134
        %v2189 = vmin.f32 %v2187, %v2136
        %v2190 = vmin.f32 %v2188, %v2138
        %v2191 = vmin.f32 %v2189, %v2140
        %v2192 = vmin.f32 %v2190, %v2142
        %v2193 = vmin.f32 %v2191, %v2144
        %v2194 = vmin.f32 %v2192, %v2146
        %v2195 = vmin.f32 %v2193, %v2148
        %v2196 = vmin.f32 %v2194, %v2150
        %v2197 = vmin.f32 %v2195, %v2152
        %v2198 = vmin.f32 %v2196, %v2154
        %v2199 = vmin.f32 %v2197, %v2156
        %v2200 = vmin.f32 %v2198, %v2158
        %v2201 = vmin.f32 %v2199, %v2160
        %v2202 = vmin.f32 %v2200, %v2162
        %v2203 = vmin.f32 %v2201, %v2164
        %v2204 = vmin.f32 %v2202, %v2166
        %v2205 = vmin.f32 %v2203, %v2168
        %v2206 = vmin.f32 %v2204, %v2170
        %v2207 = vmin.f32 %v2205, %v2172
        %v2208 = vmin.f32 %v2206, %v2174
        %v2209 = vmin.f32 %v2207, %v2176
        %v2210 = vmin.f32 %v2208, %v2178
        %v2211 = vmin.f32 %v2209, %v2180
        %v2212 = vmin.f32 %v2210, %v2211
        %v2213 = vrot.slane %v2212, 4
        %v2214 = vmin.f32 %v2212, %v2213
        %v2215 = vrot.slane %v2214, 2
        %v2216 = vmin.f32 %v2214, %v2215
        %v2217 = vrot.slane %v2216, 1
        %v2218 = vmin.f32 %v2216, %v2217
        %v2219 = vmin.f32 %v2119, %v2123
        %v2220 = vmin.f32 %v2121, %v2125
        %v2221 = vmin.f32 %v2219, %v2127
        %v2222 = vmin.f32 %v2220, %v2129
        %v2223 = vmin.f32 %v2221, %v2131
        %v2224 = vmin.f32 %v2222, %v2133
        %v2225 = vmin.f32 %v2223, %v2135
        %v2226 = vmin.f32 %v2224, %v2137
        %v2227 = vmin.f32 %v2225, %v2139
        %v2228 = vmin.f32 %v2226, %v2141
        %v2229 = vmin.f32 %v2227, %v2143
        %v2230 = vmin.f32 %v2228, %v2145
        %v2231 = vmin.f32 %v2229, %v2147
        %v2232 = vmin.f32 %v2230, %v2149
        %v2233 = vmin.f32 %v2231, %v2151
        %v2234 = vmin.f32 %v2232, %v2153
        %v2235 = vmin.f32 %v2233, %v2155
        %v2236 = vmin.f32 %v2234, %v2157
        %v2237 = vmin.f32 %v2235, %v2159
        %v2238 = vmin.f32 %v2236, %v2161
        %v2239 = vmin.f32 %v2237, %v2163
        %v2240 = vmin.f32 %v2238, %v2165
        %v2241 = vmin.f32 %v2239, %v2167
        %v2242 = vmin.f32 %v2240, %v2169
        %v2243 = vmin.f32 %v2241, %v2171
        %v2244 = vmin.f32 %v2242, %v2173
        %v2245 = vmin.f32 %v2243, %v2175
        %v2246 = vmin.f32 %v2244, %v2177
        %v2247 = vmin.f32 %v2245, %v2179
        %v2248 = vmin.f32 %v2246, %v2181
        %v2249 = vmin.f32 %v2247, %v2248
        %v2250 = vrot.slane %v2249, 4
        %v2251 = vmin.f32 %v2249, %v2250
        %v2252 = vrot.slane %v2251, 2
        %v2253 = vmin.f32 %v2251, %v2252
        %v2254 = vrot.slane %v2253, 1
        %v2255 = vmin.f32 %v2253, %v2254
        %2256 = vset.pattern.permute.xlu0 7
        %2257 = vperm.xlu0 %2256, %v168
        %v2258 = vpop.permute.xlu0 %2257
        %2260 = vset.pattern.permute.xlu0 7
        %2261 = vperm.xlu0 %2260, %v169
        %v2262 = vpop.permute.xlu0 %2261
        %2264 = vset.pattern.permute.xlu0 7
        %2265 = vperm.xlu0 %2264, %v170
        %v2266 = vpop.permute.xlu0 %2265
        %2268 = vset.pattern.permute.xlu0 7
        %2269 = vperm.xlu0 %2268, %v171
        %v2270 = vpop.permute.xlu0 %2269
        %2272 = vset.pattern.permute.xlu0 7
        %2273 = vperm.xlu0 %2272, %v172
        %v2274 = vpop.permute.xlu0 %2273
        %2276 = vset.pattern.permute.xlu0 7
        %2277 = vperm.xlu0 %2276, %v173
        %v2278 = vpop.permute.xlu0 %2277
        %2280 = vset.pattern.permute.xlu0 7
        %2281 = vperm.xlu0 %2280, %v174
        %v2282 = vpop.permute.xlu0 %2281
        %2284 = vset.pattern.permute.xlu0 7
        %2285 = vperm.xlu0 %2284, %v175
        %v2286 = vpop.permute.xlu0 %2285
        %2288 = vset.pattern.permute.xlu0 7
        %2289 = vperm.xlu0 %2288, %v176
        %v2290 = vpop.permute.xlu0 %2289
        %2292 = vset.pattern.permute.xlu0 7
        %2293 = vperm.xlu0 %2292, %v177
        %v2294 = vpop.permute.xlu0 %2293
        %2296 = vset.pattern.permute.xlu0 7
        %2297 = vperm.xlu0 %2296, %v178
        %v2298 = vpop.permute.xlu0 %2297
        %2300 = vset.pattern.permute.xlu0 7
        %2301 = vperm.xlu0 %2300, %v179
        %v2302 = vpop.permute.xlu0 %2301
        %2304 = vset.pattern.permute.xlu0 7
        %2305 = vperm.xlu0 %2304, %v180
        %v2306 = vpop.permute.xlu0 %2305
        %2308 = vset.pattern.permute.xlu0 7
        %2309 = vperm.xlu0 %2308, %v181
        %v2310 = vpop.permute.xlu0 %2309
        %2312 = vset.pattern.permute.xlu0 7
        %2313 = vperm.xlu0 %2312, %v182
        %v2314 = vpop.permute.xlu0 %2313
        %2316 = vset.pattern.permute.xlu0 7
        %2317 = vperm.xlu0 %2316, %v183
        %v2318 = vpop.permute.xlu0 %2317
        %2320 = vset.pattern.permute.xlu0 7
        %2321 = vperm.xlu0 %2320, %v184
        %v2322 = vpop.permute.xlu0 %2321
        %2324 = vset.pattern.permute.xlu0 7
        %2325 = vperm.xlu0 %2324, %v185
        %v2326 = vpop.permute.xlu0 %2325
        %2328 = vset.pattern.permute.xlu0 7
        %2329 = vperm.xlu0 %2328, %v186
        %v2330 = vpop.permute.xlu0 %2329
        %2332 = vset.pattern.permute.xlu0 7
        %2333 = vperm.xlu0 %2332, %v187
        %v2334 = vpop.permute.xlu0 %2333
        %2336 = vset.pattern.permute.xlu0 7
        %2337 = vperm.xlu0 %2336, %v188
        %v2338 = vpop.permute.xlu0 %2337
        %2340 = vset.pattern.permute.xlu0 7
        %2341 = vperm.xlu0 %2340, %v189
        %v2342 = vpop.permute.xlu0 %2341
        %2344 = vset.pattern.permute.xlu0 7
        %2345 = vperm.xlu0 %2344, %v190
        %v2346 = vpop.permute.xlu0 %2345
        %2348 = vset.pattern.permute.xlu0 7
        %2349 = vperm.xlu0 %2348, %v191
        %v2350 = vpop.permute.xlu0 %2349
        %2352 = vset.pattern.permute.xlu0 7
        %2353 = vperm.xlu0 %2352, %v192
        %v2354 = vpop.permute.xlu0 %2353
        %2356 = vset.pattern.permute.xlu0 7
        %2357 = vperm.xlu0 %2356, %v193
        %v2358 = vpop.permute.xlu0 %2357
        %2360 = vset.pattern.permute.xlu0 7
        %2361 = vperm.xlu0 %2360, %v194
        %v2362 = vpop.permute.xlu0 %2361
        %2364 = vset.pattern.permute.xlu0 7
        %2365 = vperm.xlu0 %2364, %v195
        %v2366 = vpop.permute.xlu0 %2365
        %2368 = vset.pattern.permute.xlu0 7
        %2369 = vperm.xlu0 %2368, %v196
        %v2370 = vpop.permute.xlu0 %2369
        %2372 = vset.pattern.permute.xlu0 7
        %2373 = vperm.xlu0 %2372, %v197
        %v2374 = vpop.permute.xlu0 %2373
        %2376 = vset.pattern.permute.xlu0 7
        %2377 = vperm.xlu0 %2376, %v198
        %v2378 = vpop.permute.xlu0 %2377
        %2380 = vset.pattern.permute.xlu0 7
        %2381 = vperm.xlu0 %2380, %v199
        %v2382 = vpop.permute.xlu0 %2381
        %v2384 = vadd.f32 %v766, %v2258
        %v2385 = vadd.f32 %v767, %v2258
        %v2386 = vadd.f32 %v768, %v2262
        %v2387 = vadd.f32 %v769, %v2262
        %v2388 = vadd.f32 %v770, %v2266
        %v2389 = vadd.f32 %v771, %v2266
        %v2390 = vadd.f32 %v772, %v2270
        %v2391 = vadd.f32 %v773, %v2270
        %v2392 = vadd.f32 %v774, %v2274
        %v2393 = vadd.f32 %v775, %v2274
        %v2394 = vadd.f32 %v776, %v2278
        %v2395 = vadd.f32 %v777, %v2278
        %v2396 = vadd.f32 %v778, %v2282
        %v2397 = vadd.f32 %v779, %v2282
        %v2398 = vadd.f32 %v780, %v2286
        %v2399 = vadd.f32 %v781, %v2286
        %v2400 = vadd.f32 %v782, %v2290
        %v2401 = vadd.f32 %v783, %v2290
        %v2402 = vadd.f32 %v784, %v2294
        %v2403 = vadd.f32 %v785, %v2294
        %v2404 = vadd.f32 %v786, %v2298
        %v2405 = vadd.f32 %v787, %v2298
        %v2406 = vadd.f32 %v788, %v2302
        %v2407 = vadd.f32 %v789, %v2302
        %v2408 = vadd.f32 %v790, %v2306
        %v2409 = vadd.f32 %v791, %v2306
        %v2410 = vadd.f32 %v792, %v2310
        %v2411 = vadd.f32 %v793, %v2310
        %v2412 = vadd.f32 %v794, %v2314
        %v2413 = vadd.f32 %v795, %v2314
        %v2414 = vadd.f32 %v796, %v2318
        %v2415 = vadd.f32 %v797, %v2318
        %v2416 = vadd.f32 %v798, %v2322
        %v2417 = vadd.f32 %v799, %v2322
        %v2418 = vadd.f32 %v800, %v2326
        %v2419 = vadd.f32 %v801, %v2326
        %v2420 = vadd.f32 %v802, %v2330
        %v2421 = vadd.f32 %v803, %v2330
        %v2422 = vadd.f32 %v804, %v2334
        %v2423 = vadd.f32 %v805, %v2334
        %v2424 = vadd.f32 %v806, %v2338
        %v2425 = vadd.f32 %v807, %v2338
        %v2426 = vadd.f32 %v808, %v2342
        %v2427 = vadd.f32 %v809, %v2342
        %v2428 = vadd.f32 %v810, %v2346
        %v2429 = vadd.f32 %v811, %v2346
        %v2430 = vadd.f32 %v812, %v2350
        %v2431 = vadd.f32 %v813, %v2350
        %v2432 = vadd.f32 %v814, %v2354
        %v2433 = vadd.f32 %v815, %v2354
        %v2434 = vadd.f32 %v816, %v2358
        %v2435 = vadd.f32 %v817, %v2358
        %v2436 = vadd.f32 %v818, %v2362
        %v2437 = vadd.f32 %v819, %v2362
        %v2438 = vadd.f32 %v820, %v2366
        %v2439 = vadd.f32 %v821, %v2366
        %v2440 = vadd.f32 %v822, %v2370
        %v2441 = vadd.f32 %v823, %v2370
        %v2442 = vadd.f32 %v824, %v2374
        %v2443 = vadd.f32 %v825, %v2374
        %v2444 = vadd.f32 %v826, %v2378
        %v2445 = vadd.f32 %v827, %v2378
        %v2446 = vadd.f32 %v828, %v2382
        %v2447 = vadd.f32 %v829, %v2382
        %v2448 = vmin.f32 %v2384, %v2388
        %v2449 = vmin.f32 %v2386, %v2390
        %v2450 = vmin.f32 %v2448, %v2392
        %v2451 = vmin.f32 %v2449, %v2394
        %v2452 = vmin.f32 %v2450, %v2396
        %v2453 = vmin.f32 %v2451, %v2398
        %v2454 = vmin.f32 %v2452, %v2400
        %v2455 = vmin.f32 %v2453, %v2402
        %v2456 = vmin.f32 %v2454, %v2404
        %v2457 = vmin.f32 %v2455, %v2406
        %v2458 = vmin.f32 %v2456, %v2408
        %v2459 = vmin.f32 %v2457, %v2410
        %v2460 = vmin.f32 %v2458, %v2412
        %v2461 = vmin.f32 %v2459, %v2414
        %v2462 = vmin.f32 %v2460, %v2416
        %v2463 = vmin.f32 %v2461, %v2418
        %v2464 = vmin.f32 %v2462, %v2420
        %v2465 = vmin.f32 %v2463, %v2422
        %v2466 = vmin.f32 %v2464, %v2424
        %v2467 = vmin.f32 %v2465, %v2426
        %v2468 = vmin.f32 %v2466, %v2428
        %v2469 = vmin.f32 %v2467, %v2430
        %v2470 = vmin.f32 %v2468, %v2432
        %v2471 = vmin.f32 %v2469, %v2434
        %v2472 = vmin.f32 %v2470, %v2436
        %v2473 = vmin.f32 %v2471, %v2438
        %v2474 = vmin.f32 %v2472, %v2440
        %v2475 = vmin.f32 %v2473, %v2442
        %v2476 = vmin.f32 %v2474, %v2444
        %v2477 = vmin.f32 %v2475, %v2446
        %v2478 = vmin.f32 %v2476, %v2477
        %v2479 = vrot.slane %v2478, 4
        %v2480 = vmin.f32 %v2478, %v2479
        %v2481 = vrot.slane %v2480, 2
        %v2482 = vmin.f32 %v2480, %v2481
        %v2483 = vrot.slane %v2482, 1
        %v2484 = vmin.f32 %v2482, %v2483
        %v2485 = vmin.f32 %v2385, %v2389
        %v2486 = vmin.f32 %v2387, %v2391
        %v2487 = vmin.f32 %v2485, %v2393
        %v2488 = vmin.f32 %v2486, %v2395
        %v2489 = vmin.f32 %v2487, %v2397
        %v2490 = vmin.f32 %v2488, %v2399
        %v2491 = vmin.f32 %v2489, %v2401
        %v2492 = vmin.f32 %v2490, %v2403
        %v2493 = vmin.f32 %v2491, %v2405
        %v2494 = vmin.f32 %v2492, %v2407
        %v2495 = vmin.f32 %v2493, %v2409
        %v2496 = vmin.f32 %v2494, %v2411
        %v2497 = vmin.f32 %v2495, %v2413
        %v2498 = vmin.f32 %v2496, %v2415
        %v2499 = vmin.f32 %v2497, %v2417
        %v2500 = vmin.f32 %v2498, %v2419
        %v2501 = vmin.f32 %v2499, %v2421
        %v2502 = vmin.f32 %v2500, %v2423
        %v2503 = vmin.f32 %v2501, %v2425
        %v2504 = vmin.f32 %v2502, %v2427
        %v2505 = vmin.f32 %v2503, %v2429
        %v2506 = vmin.f32 %v2504, %v2431
        %v2507 = vmin.f32 %v2505, %v2433
        %v2508 = vmin.f32 %v2506, %v2435
        %v2509 = vmin.f32 %v2507, %v2437
        %v2510 = vmin.f32 %v2508, %v2439
        %v2511 = vmin.f32 %v2509, %v2441
        %v2512 = vmin.f32 %v2510, %v2443
        %v2513 = vmin.f32 %v2511, %v2445
        %v2514 = vmin.f32 %v2512, %v2447
        %v2515 = vmin.f32 %v2513, %v2514
        %v2516 = vrot.slane %v2515, 4
        %v2517 = vmin.f32 %v2515, %v2516
        %v2518 = vrot.slane %v2517, 2
        %v2519 = vmin.f32 %v2517, %v2518
        %v2520 = vrot.slane %v2519, 1
        %v2521 = vmin.f32 %v2519, %v2520
        %s2522 = scalar_lea.vmem [#allocation2], 6
        %v2523 = vld [vmem:[%s2522] ss:$8 sm:$0x3]
        %v2526 = vcombine.low %v2218, %v2255
        %v2528 = vunpack.c.l.s4 1966171168
        %v2529 = vunpack.c.0.s8 %v2528
        %v2530 = vlaneseq
        %v2531 = vshrl.u32 %v2530, 7
        %v2532 = vsub.s32 %v2529, %v2531
        %v2533 = vrot.slane %v2526, %v2532
        %v2535 = vunpack.c.l.s4 1966171168
        %v2536 = vunpack.c.0.s8 %v2535
        %v2537 = vlaneseq
        %v2538 = vshrl.u32 %v2537, 7
        %v2539 = vsub.s32 %v2536, %v2538
        %v2540 = vrot.slane %v2533, %v2539
        %v2542 = vmin.f32 %v2523, %v2540
        %2543 = vst.msk [vmem:[%s2522] ss:$8 sm:$0x3] %vm1386, %v2542
        %2544 = vst.msk [vmem:[%s2522] ss:$8 sm:$0x0] %vm1386, %v2542
        %s2545 = scalar_lea.vmem [#allocation2], 7
        %v2546 = vld [vmem:[%s2545] ss:$8 sm:$0x3]
        %v2549 = vcombine.low %v2484, %v2521
        %v2551 = vunpack.c.l.s4 1966171168
        %v2552 = vunpack.c.0.s8 %v2551
        %v2553 = vlaneseq
        %v2554 = vshrl.u32 %v2553, 7
        %v2555 = vsub.s32 %v2552, %v2554
        %v2556 = vrot.slane %v2549, %v2555
        %v2558 = vunpack.c.l.s4 1966171168
        %v2559 = vunpack.c.0.s8 %v2558
        %v2560 = vlaneseq
        %v2561 = vshrl.u32 %v2560, 7
        %v2562 = vsub.s32 %v2559, %v2561
        %v2563 = vrot.slane %v2556, %v2562
        %v2565 = vmin.f32 %v2546, %v2563
        %2566 = vst.msk [vmem:[%s2545] ss:$8 sm:$0x3] %vm1386, %v2565
        %2567 = vst.msk [vmem:[%s2545] ss:$8 sm:$0x0] %vm1386, %v2565
        %v2568 = vlaneseq
        %v2569 = vand.u32 %v2568, 127
        %2570 = vst [vmem:[%s151] sm:$0x1] 0.0
        %s2571 = scalar_lea.vmem %s156, 4
        %v2572 = vld [vmem:[%s2571] ss:$8 sm:$0x3]
        %s2573 = scalar_lea.vmem %s156, 5
        %v2574 = vld [vmem:[%s2573] ss:$8 sm:$0x3]
        %s2575 = scalar_lea.vmem %s156, 6
        %v2576 = vld [vmem:[%s2575] ss:$8 sm:$0x3]
        %s2577 = scalar_lea.vmem %s156, 7
        %v2578 = vld [vmem:[%s2577] ss:$8 sm:$0x3]
        %v2579 = vld [vmem:[%s1362] ss:$8 sm:$0x3]
        %v2580 = vrsqrt.pop %v2579
        %v2581 = vmul.f32 %v2579, %v2580
        %vm2582 = vcmp.eq.f32.partialorder %v2579, inf
        %v2583 = vsel %vm2582, %v2579, %v2581
        %vm2584 = vcmp.eq.f32.partialorder %v2579, 0.0
        %v2585 = vand.u32 %v2579, 2147483648
        %v2586 = vsel %vm2584, %v2585, %v2583
        %v2587 = vld [vmem:[%s1389] ss:$8 sm:$0x3]
        %v2588 = vrsqrt.pop %v2587
        %v2589 = vmul.f32 %v2587, %v2588
        %vm2590 = vcmp.eq.f32.partialorder %v2587, inf
        %v2591 = vsel %vm2590, %v2587, %v2589
        %vm2592 = vcmp.eq.f32.partialorder %v2587, 0.0
        %v2593 = vand.u32 %v2587, 2147483648
        %v2594 = vsel %vm2592, %v2593, %v2591
        %v2595 = vsub.f32 1.0, %v2574
        %v2596 = vmul.f32 %v2576, %v2595
        %vm2597 = vcmp.ne.f32.partialorder %v2596, 0.0
        %v2598 = vmul.f32 %v2572, %v2595
        %vm2599 = vcmp.ne.f32.partialorder %v2598, 0.0
        %v2600 = vsub.f32 1.0, %v2572
        %v2601 = vmul.f32 %v2574, %v2600
        %vm2602 = vcmp.ne.f32.partialorder %v2601, 0.0
        %v2603 = vsel %vm2597, 1, 0
        %v2604 = vcvt.s32.f32 %v2603
        %v2606 = vlaneseq
        %v2607 = vshrl.u32 %v2606, 7
        %v2608 = vsub.s32 0, %v2607
        %v2609 = vrot.slane %v2604, %v2608
        %v2610 = vlaneseq
        %v2611 = vshrl.u32 %v2610, 7
        %v2612 = vsub.s32 1, %v2611
        %v2613 = vrot.slane %v2604, %v2612
        %vm2616 = vcmask 1040384
        %v2617 = vsel %vm2616, %v2609, 0.0
        %v2618 = vsel %vm2616, %v2613, 0.0
        %v2619 = vadd.f32 %v2617, %v2618
        %2620 = vadd.xlane.f32.xlu0 %v2619
        %v2621 = vpop.xlane.xlu0 %2620
        %v2622 = vsel %vm2599, 1, 0
        %v2623 = vcvt.s32.f32 %v2622
        %v2625 = vlaneseq
        %v2626 = vshrl.u32 %v2625, 7
        %v2627 = vsub.s32 0, %v2626
        %v2628 = vrot.slane %v2623, %v2627
        %v2629 = vlaneseq
        %v2630 = vshrl.u32 %v2629, 7
        %v2631 = vsub.s32 1, %v2630
        %v2632 = vrot.slane %v2623, %v2631
        %v2635 = vsel %vm2616, %v2628, 0.0
        %v2636 = vsel %vm2616, %v2632, 0.0
        %v2637 = vadd.f32 %v2635, %v2636
        %2638 = vadd.xlane.f32.xlu0 %v2637
        %v2639 = vpop.xlane.xlu0 %2638
        %v2640 = vsel %vm2602, 1, 0
        %v2641 = vcvt.s32.f32 %v2640
        %v2643 = vlaneseq
        %v2644 = vshrl.u32 %v2643, 7
        %v2645 = vsub.s32 0, %v2644
        %v2646 = vrot.slane %v2641, %v2645
        %v2647 = vlaneseq
        %v2648 = vshrl.u32 %v2647, 7
        %v2649 = vsub.s32 1, %v2648
        %v2650 = vrot.slane %v2641, %v2649
        %v2653 = vsel %vm2616, %v2646, 0.0
        %v2654 = vsel %vm2616, %v2650, 0.0
        %v2655 = vadd.f32 %v2653, %v2654
        %2656 = vadd.xlane.f32.xlu0 %v2655
        %v2657 = vpop.xlane.xlu0 %2656
        %vm2658 = vcmp.ne.f32.partialorder %v2578, 0.0
        %v2659 = vsel %vm2658, 1, 0
        %v2660 = vcvt.s32.f32 %v2659
        %v2662 = vlaneseq
        %v2663 = vshrl.u32 %v2662, 7
        %v2664 = vsub.s32 0, %v2663
        %v2665 = vrot.slane %v2660, %v2664
        %v2666 = vlaneseq
        %v2667 = vshrl.u32 %v2666, 7
        %v2668 = vsub.s32 1, %v2667
        %v2669 = vrot.slane %v2660, %v2668
        %v2672 = vsel %vm2616, %v2665, 0.0
        %v2673 = vsel %vm2616, %v2669, 0.0
        %v2674 = vadd.f32 %v2672, %v2673
        %2675 = vadd.xlane.f32.xlu0 %v2674
        %v2676 = vpop.xlane.xlu0 %2675
        %vm2677 = vcmp.ne.f32.partialorder %v2576, 0.0
        %v2678 = vsel %vm2677, 1, 0
        %v2679 = vcvt.s32.f32 %v2678
        %v2681 = vlaneseq
        %v2682 = vshrl.u32 %v2681, 7
        %v2683 = vsub.s32 0, %v2682
        %v2684 = vrot.slane %v2679, %v2683
        %v2685 = vlaneseq
        %v2686 = vshrl.u32 %v2685, 7
        %v2687 = vsub.s32 1, %v2686
        %v2688 = vrot.slane %v2679, %v2687
        %v2691 = vsel %vm2616, %v2684, 0.0
        %v2692 = vsel %vm2616, %v2688, 0.0
        %v2693 = vadd.f32 %v2691, %v2692
        %2694 = vadd.xlane.f32.xlu0 %v2693
        %v2695 = vpop.xlane.xlu0 %2694
        %vm2696 = vcmp.ne.f32.partialorder %v2572, 0.0
        %v2697 = vsel %vm2696, 1, 0
        %v2698 = vcvt.s32.f32 %v2697
        %v2700 = vlaneseq
        %v2701 = vshrl.u32 %v2700, 7
        %v2702 = vsub.s32 0, %v2701
        %v2703 = vrot.slane %v2698, %v2702
        %v2704 = vlaneseq
        %v2705 = vshrl.u32 %v2704, 7
        %v2706 = vsub.s32 1, %v2705
        %v2707 = vrot.slane %v2698, %v2706
        %v2710 = vsel %vm2616, %v2703, 0.0
        %v2711 = vsel %vm2616, %v2707, 0.0
        %v2712 = vadd.f32 %v2710, %v2711
        %2713 = vadd.xlane.f32.xlu0 %v2712
        %v2714 = vpop.xlane.xlu0 %2713
        %vm2715 = vcmp.ne.f32.partialorder %v2574, 0.0
        %v2716 = vsel %vm2715, 1, 0
        %v2717 = vcvt.s32.f32 %v2716
        %v2719 = vlaneseq
        %v2720 = vshrl.u32 %v2719, 7
        %v2721 = vsub.s32 0, %v2720
        %v2722 = vrot.slane %v2717, %v2721
        %v2723 = vlaneseq
        %v2724 = vshrl.u32 %v2723, 7
        %v2725 = vsub.s32 1, %v2724
        %v2726 = vrot.slane %v2717, %v2725
        %v2729 = vsel %vm2616, %v2722, 0.0
        %v2730 = vsel %vm2616, %v2726, 0.0
        %v2731 = vadd.f32 %v2729, %v2730
        %2732 = vadd.xlane.f32.xlu0 %v2731
        %v2733 = vpop.xlane.xlu0 %2732
        %v2734 = vsel %vm2597, %v2586, -1.0
        %v2736 = vlaneseq
        %v2737 = vshrl.u32 %v2736, 7
        %v2738 = vsub.s32 0, %v2737
        %v2739 = vrot.slane %v2734, %v2738
        %v2740 = vlaneseq
        %v2741 = vshrl.u32 %v2740, 7
        %v2742 = vsub.s32 1, %v2741
        %v2743 = vrot.slane %v2734, %v2742
        %v2746 = vsel %vm2616, %v2739, -inf
        %v2747 = vsel %vm2616, %v2743, -inf
        %v2748 = vmax.f32 %v2746, %v2747
        %2749 = vmax.xlane.f32.xlu0 %v2748
        %v2750 = vpop.xlane.xlu0 %2749
        %vm2751 = vcmp.gt.f32.partialorder %v2621, 0.0
        %vm2752 = vcmp.gt.f32.partialorder %v2676, 0.0
        %vm2753 = vmand %vm2751, %vm2752
        %v2754 = vsel %vm2753, %v2750, 8.0
        %v2755 = vsel %vm2599, %v2586, 0.0
        %v2757 = vlaneseq
        %v2758 = vshrl.u32 %v2757, 7
        %v2759 = vsub.s32 0, %v2758
        %v2760 = vrot.slane %v2755, %v2759
        %v2761 = vlaneseq
        %v2762 = vshrl.u32 %v2761, 7
        %v2763 = vsub.s32 1, %v2762
        %v2764 = vrot.slane %v2755, %v2763
        %v2767 = vsel %vm2616, %v2760, 0.0
        %v2768 = vsel %vm2616, %v2764, 0.0
        %v2769 = vadd.f32 %v2767, %v2768
        %2770 = vadd.xlane.f32.xlu0 %v2769
        %v2771 = vpop.xlane.xlu0 %2770
        %v2772 = vsel %vm2602, %v2594, 0.0
        %v2774 = vlaneseq
        %v2775 = vshrl.u32 %v2774, 7
        %v2776 = vsub.s32 0, %v2775
        %v2777 = vrot.slane %v2772, %v2776
        %v2778 = vlaneseq
        %v2779 = vshrl.u32 %v2778, 7
        %v2780 = vsub.s32 1, %v2779
        %v2781 = vrot.slane %v2772, %v2780
        %v2784 = vsel %vm2616, %v2777, 0.0
        %v2785 = vsel %vm2616, %v2781, 0.0
        %v2786 = vadd.f32 %v2784, %v2785
        %2787 = vadd.xlane.f32.xlu0 %v2786
        %v2788 = vpop.xlane.xlu0 %2787
        %vm2789 = vcmp.gt.f32.partialorder %v2639, 0.0
        %vm2790 = vmand %vm2789, %vm2752
        %v2791 = vmax.f32 %v2714, 1.0
        %v2792 = vrcp.pop %v2791
        %v2793 = vmul.f32 %v2771, %v2792
        %v2794 = vsel %vm2790, %v2793, 0.0
        %vm2795 = vcmp.gt.f32.partialorder %v2657, 0.0
        %vm2796 = vcmp.gt.f32.partialorder %v2695, 0.0
        %vm2797 = vmand %vm2795, %vm2796
        %v2798 = vmax.f32 %v2733, 1.0
        %v2799 = vrcp.pop %v2798
        %v2800 = vmul.f32 %v2788, %v2799
        %v2801 = vsel %vm2797, %v2800, 0.0
        %vm2802 = vcmp.gt.f32.partialorder %v2714, 0.0
        %v2803 = vmax.f32 %v2794, %v2801
        %v2804 = vsel %vm2802, %v2803, 8.0
        %vm2805 = vcmp.eq.s32.totalorder %v2569, 0
        %v2806 = vsel %vm2805, %v2754, %v2804
        %2807 = vst [vmem:[%s151 + $0x1] sm:$0x1] %v2806
        %s2808 = scalar_lea.vmem %s156, 16
        %v2809 = vld [vmem:[%s2808] ss:$8 sm:$0x3]
        %s2810 = scalar_lea.vmem %s156, 17
        %v2811 = vld [vmem:[%s2810] ss:$8 sm:$0x3]
        %s2812 = scalar_lea.vmem %s156, 18
        %v2813 = vld [vmem:[%s2812] ss:$8 sm:$0x3]
        %s2814 = scalar_lea.vmem %s156, 19
        %v2815 = vld [vmem:[%s2814] ss:$8 sm:$0x3]
        %v2816 = vld [vmem:[%s1944] ss:$8 sm:$0x3]
        %v2817 = vrsqrt.pop %v2816
        %v2818 = vmul.f32 %v2816, %v2817
        %vm2819 = vcmp.eq.f32.partialorder %v2816, inf
        %v2820 = vsel %vm2819, %v2816, %v2818
        %vm2821 = vcmp.eq.f32.partialorder %v2816, 0.0
        %v2822 = vand.u32 %v2816, 2147483648
        %v2823 = vsel %vm2821, %v2822, %v2820
        %v2824 = vld [vmem:[%s1967] ss:$8 sm:$0x3]
        %v2825 = vrsqrt.pop %v2824
        %v2826 = vmul.f32 %v2824, %v2825
        %vm2827 = vcmp.eq.f32.partialorder %v2824, inf
        %v2828 = vsel %vm2827, %v2824, %v2826
        %vm2829 = vcmp.eq.f32.partialorder %v2824, 0.0
        %v2830 = vand.u32 %v2824, 2147483648
        %v2831 = vsel %vm2829, %v2830, %v2828
        %v2832 = vsub.f32 1.0, %v2811
        %v2833 = vmul.f32 %v2813, %v2832
        %vm2834 = vcmp.ne.f32.partialorder %v2833, 0.0
        %v2835 = vmul.f32 %v2809, %v2832
        %vm2836 = vcmp.ne.f32.partialorder %v2835, 0.0
        %v2837 = vsub.f32 1.0, %v2809
        %v2838 = vmul.f32 %v2811, %v2837
        %vm2839 = vcmp.ne.f32.partialorder %v2838, 0.0
        %v2840 = vsel %vm2834, 1, 0
        %v2841 = vcvt.s32.f32 %v2840
        %v2843 = vlaneseq
        %v2844 = vshrl.u32 %v2843, 7
        %v2845 = vsub.s32 0, %v2844
        %v2846 = vrot.slane %v2841, %v2845
        %v2847 = vlaneseq
        %v2848 = vshrl.u32 %v2847, 7
        %v2849 = vsub.s32 1, %v2848
        %v2850 = vrot.slane %v2841, %v2849
        %v2853 = vsel %vm2616, %v2846, 0.0
        %v2854 = vsel %vm2616, %v2850, 0.0
        %v2855 = vadd.f32 %v2853, %v2854
        %2856 = vadd.xlane.f32.xlu0 %v2855
        %v2857 = vpop.xlane.xlu0 %2856
        %v2858 = vsel %vm2836, 1, 0
        %v2859 = vcvt.s32.f32 %v2858
        %v2861 = vlaneseq
        %v2862 = vshrl.u32 %v2861, 7
        %v2863 = vsub.s32 0, %v2862
        %v2864 = vrot.slane %v2859, %v2863
        %v2865 = vlaneseq
        %v2866 = vshrl.u32 %v2865, 7
        %v2867 = vsub.s32 1, %v2866
        %v2868 = vrot.slane %v2859, %v2867
        %v2871 = vsel %vm2616, %v2864, 0.0
        %v2872 = vsel %vm2616, %v2868, 0.0
        %v2873 = vadd.f32 %v2871, %v2872
        %2874 = vadd.xlane.f32.xlu0 %v2873
        %v2875 = vpop.xlane.xlu0 %2874
        %v2876 = vsel %vm2839, 1, 0
        %v2877 = vcvt.s32.f32 %v2876
        %v2879 = vlaneseq
        %v2880 = vshrl.u32 %v2879, 7
        %v2881 = vsub.s32 0, %v2880
        %v2882 = vrot.slane %v2877, %v2881
        %v2883 = vlaneseq
        %v2884 = vshrl.u32 %v2883, 7
        %v2885 = vsub.s32 1, %v2884
        %v2886 = vrot.slane %v2877, %v2885
        %v2889 = vsel %vm2616, %v2882, 0.0
        %v2890 = vsel %vm2616, %v2886, 0.0
        %v2891 = vadd.f32 %v2889, %v2890
        %2892 = vadd.xlane.f32.xlu0 %v2891
        %v2893 = vpop.xlane.xlu0 %2892
        %vm2894 = vcmp.ne.f32.partialorder %v2815, 0.0
        %v2895 = vsel %vm2894, 1, 0
        %v2896 = vcvt.s32.f32 %v2895
        %v2898 = vlaneseq
        %v2899 = vshrl.u32 %v2898, 7
        %v2900 = vsub.s32 0, %v2899
        %v2901 = vrot.slane %v2896, %v2900
        %v2902 = vlaneseq
        %v2903 = vshrl.u32 %v2902, 7
        %v2904 = vsub.s32 1, %v2903
        %v2905 = vrot.slane %v2896, %v2904
        %v2908 = vsel %vm2616, %v2901, 0.0
        %v2909 = vsel %vm2616, %v2905, 0.0
        %v2910 = vadd.f32 %v2908, %v2909
        %2911 = vadd.xlane.f32.xlu0 %v2910
        %v2912 = vpop.xlane.xlu0 %2911
        %vm2913 = vcmp.ne.f32.partialorder %v2813, 0.0
        %v2914 = vsel %vm2913, 1, 0
        %v2915 = vcvt.s32.f32 %v2914
        %v2917 = vlaneseq
        %v2918 = vshrl.u32 %v2917, 7
        %v2919 = vsub.s32 0, %v2918
        %v2920 = vrot.slane %v2915, %v2919
        %v2921 = vlaneseq
        %v2922 = vshrl.u32 %v2921, 7
        %v2923 = vsub.s32 1, %v2922
        %v2924 = vrot.slane %v2915, %v2923
        %v2927 = vsel %vm2616, %v2920, 0.0
        %v2928 = vsel %vm2616, %v2924, 0.0
        %v2929 = vadd.f32 %v2927, %v2928
        %2930 = vadd.xlane.f32.xlu0 %v2929
        %v2931 = vpop.xlane.xlu0 %2930
        %vm2932 = vcmp.ne.f32.partialorder %v2809, 0.0
        %v2933 = vsel %vm2932, 1, 0
        %v2934 = vcvt.s32.f32 %v2933
        %v2936 = vlaneseq
        %v2937 = vshrl.u32 %v2936, 7
        %v2938 = vsub.s32 0, %v2937
        %v2939 = vrot.slane %v2934, %v2938
        %v2940 = vlaneseq
        %v2941 = vshrl.u32 %v2940, 7
        %v2942 = vsub.s32 1, %v2941
        %v2943 = vrot.slane %v2934, %v2942
        %v2946 = vsel %vm2616, %v2939, 0.0
        %v2947 = vsel %vm2616, %v2943, 0.0
        %v2948 = vadd.f32 %v2946, %v2947
        %2949 = vadd.xlane.f32.xlu0 %v2948
        %v2950 = vpop.xlane.xlu0 %2949
        %vm2951 = vcmp.ne.f32.partialorder %v2811, 0.0
        %v2952 = vsel %vm2951, 1, 0
        %v2953 = vcvt.s32.f32 %v2952
        %v2955 = vlaneseq
        %v2956 = vshrl.u32 %v2955, 7
        %v2957 = vsub.s32 0, %v2956
        %v2958 = vrot.slane %v2953, %v2957
        %v2959 = vlaneseq
        %v2960 = vshrl.u32 %v2959, 7
        %v2961 = vsub.s32 1, %v2960
        %v2962 = vrot.slane %v2953, %v2961
        %v2965 = vsel %vm2616, %v2958, 0.0
        %v2966 = vsel %vm2616, %v2962, 0.0
        %v2967 = vadd.f32 %v2965, %v2966
        %2968 = vadd.xlane.f32.xlu0 %v2967
        %v2969 = vpop.xlane.xlu0 %2968
        %v2970 = vsel %vm2834, %v2823, -1.0
        %v2972 = vlaneseq
        %v2973 = vshrl.u32 %v2972, 7
        %v2974 = vsub.s32 0, %v2973
        %v2975 = vrot.slane %v2970, %v2974
        %v2976 = vlaneseq
        %v2977 = vshrl.u32 %v2976, 7
        %v2978 = vsub.s32 1, %v2977
        %v2979 = vrot.slane %v2970, %v2978
        %v2982 = vsel %vm2616, %v2975, -inf
        %v2983 = vsel %vm2616, %v2979, -inf
        %v2984 = vmax.f32 %v2982, %v2983
        %2985 = vmax.xlane.f32.xlu0 %v2984
        %v2986 = vpop.xlane.xlu0 %2985
        %vm2987 = vcmp.gt.f32.partialorder %v2857, 0.0
        %vm2988 = vcmp.gt.f32.partialorder %v2912, 0.0
        %vm2989 = vmand %vm2987, %vm2988
        %v2990 = vsel %vm2989, %v2986, 8.0
        %v2991 = vsel %vm2836, %v2823, 0.0
        %v2993 = vlaneseq
        %v2994 = vshrl.u32 %v2993, 7
        %v2995 = vsub.s32 0, %v2994
        %v2996 = vrot.slane %v2991, %v2995
        %v2997 = vlaneseq
        %v2998 = vshrl.u32 %v2997, 7
        %v2999 = vsub.s32 1, %v2998
        %v3000 = vrot.slane %v2991, %v2999
        %v3003 = vsel %vm2616, %v2996, 0.0
        %v3004 = vsel %vm2616, %v3000, 0.0
        %v3005 = vadd.f32 %v3003, %v3004
        %3006 = vadd.xlane.f32.xlu0 %v3005
        %v3007 = vpop.xlane.xlu0 %3006
        %v3008 = vsel %vm2839, %v2831, 0.0
        %v3010 = vlaneseq
        %v3011 = vshrl.u32 %v3010, 7
        %v3012 = vsub.s32 0, %v3011
        %v3013 = vrot.slane %v3008, %v3012
        %v3014 = vlaneseq
        %v3015 = vshrl.u32 %v3014, 7
        %v3016 = vsub.s32 1, %v3015
        %v3017 = vrot.slane %v3008, %v3016
        %v3020 = vsel %vm2616, %v3013, 0.0
        %v3021 = vsel %vm2616, %v3017, 0.0
        %v3022 = vadd.f32 %v3020, %v3021
        %3023 = vadd.xlane.f32.xlu0 %v3022
        %v3024 = vpop.xlane.xlu0 %3023
        %vm3025 = vcmp.gt.f32.partialorder %v2875, 0.0
        %vm3026 = vmand %vm3025, %vm2988
        %v3027 = vmax.f32 %v2950, 1.0
        %v3028 = vrcp.pop %v3027
        %v3029 = vmul.f32 %v3007, %v3028
        %v3030 = vsel %vm3026, %v3029, 0.0
        %vm3031 = vcmp.gt.f32.partialorder %v2893, 0.0
        %vm3032 = vcmp.gt.f32.partialorder %v2931, 0.0
        %vm3033 = vmand %vm3031, %vm3032
        %v3034 = vmax.f32 %v2969, 1.0
        %v3035 = vrcp.pop %v3034
        %v3036 = vmul.f32 %v3024, %v3035
        %v3037 = vsel %vm3033, %v3036, 0.0
        %vm3038 = vcmp.gt.f32.partialorder %v2950, 0.0
        %v3039 = vmax.f32 %v3030, %v3037
        %v3040 = vsel %vm3038, %v3039, 8.0
        %v3041 = vsel %vm2805, %v2990, %v3040
        %3042 = vst [vmem:[%s151 + $0x2] sm:$0x1] %v3041
        %s3043 = scalar_lea.vmem %s156, 20
        %v3044 = vld [vmem:[%s3043] ss:$8 sm:$0x3]
        %s3045 = scalar_lea.vmem %s156, 21
        %v3046 = vld [vmem:[%s3045] ss:$8 sm:$0x3]
        %s3047 = scalar_lea.vmem %s156, 22
        %v3048 = vld [vmem:[%s3047] ss:$8 sm:$0x3]
        %s3049 = scalar_lea.vmem %s156, 23
        %v3050 = vld [vmem:[%s3049] ss:$8 sm:$0x3]
        %v3051 = vld [vmem:[%s2522] ss:$8 sm:$0x3]
        %v3052 = vrsqrt.pop %v3051
        %v3053 = vmul.f32 %v3051, %v3052
        %vm3054 = vcmp.eq.f32.partialorder %v3051, inf
        %v3055 = vsel %vm3054, %v3051, %v3053
        %vm3056 = vcmp.eq.f32.partialorder %v3051, 0.0
        %v3057 = vand.u32 %v3051, 2147483648
        %v3058 = vsel %vm3056, %v3057, %v3055
        %v3059 = vld [vmem:[%s2545] ss:$8 sm:$0x3]
        %v3060 = vrsqrt.pop %v3059
        %v3061 = vmul.f32 %v3059, %v3060
        %vm3062 = vcmp.eq.f32.partialorder %v3059, inf
        %v3063 = vsel %vm3062, %v3059, %v3061
        %vm3064 = vcmp.eq.f32.partialorder %v3059, 0.0
        %v3065 = vand.u32 %v3059, 2147483648
        %v3066 = vsel %vm3064, %v3065, %v3063
        %v3067 = vsub.f32 1.0, %v3046
        %v3068 = vmul.f32 %v3048, %v3067
        %vm3069 = vcmp.ne.f32.partialorder %v3068, 0.0
        %v3070 = vmul.f32 %v3044, %v3067
        %vm3071 = vcmp.ne.f32.partialorder %v3070, 0.0
        %v3072 = vsub.f32 1.0, %v3044
        %v3073 = vmul.f32 %v3046, %v3072
        %vm3074 = vcmp.ne.f32.partialorder %v3073, 0.0
        %v3075 = vsel %vm3069, 1, 0
        %v3076 = vcvt.s32.f32 %v3075
        %v3078 = vlaneseq
        %v3079 = vshrl.u32 %v3078, 7
        %v3080 = vsub.s32 0, %v3079
        %v3081 = vrot.slane %v3076, %v3080
        %v3082 = vlaneseq
        %v3083 = vshrl.u32 %v3082, 7
        %v3084 = vsub.s32 1, %v3083
        %v3085 = vrot.slane %v3076, %v3084
        %v3088 = vsel %vm2616, %v3081, 0.0
        %v3089 = vsel %vm2616, %v3085, 0.0
        %v3090 = vadd.f32 %v3088, %v3089
        %3091 = vadd.xlane.f32.xlu0 %v3090
        %v3092 = vpop.xlane.xlu0 %3091
        %v3093 = vsel %vm3071, 1, 0
        %v3094 = vcvt.s32.f32 %v3093
        %v3096 = vlaneseq
        %v3097 = vshrl.u32 %v3096, 7
        %v3098 = vsub.s32 0, %v3097
        %v3099 = vrot.slane %v3094, %v3098
        %v3100 = vlaneseq
        %v3101 = vshrl.u32 %v3100, 7
        %v3102 = vsub.s32 1, %v3101
        %v3103 = vrot.slane %v3094, %v3102
        %v3106 = vsel %vm2616, %v3099, 0.0
        %v3107 = vsel %vm2616, %v3103, 0.0
        %v3108 = vadd.f32 %v3106, %v3107
        %3109 = vadd.xlane.f32.xlu0 %v3108
        %v3110 = vpop.xlane.xlu0 %3109
        %v3111 = vsel %vm3074, 1, 0
        %v3112 = vcvt.s32.f32 %v3111
        %v3114 = vlaneseq
        %v3115 = vshrl.u32 %v3114, 7
        %v3116 = vsub.s32 0, %v3115
        %v3117 = vrot.slane %v3112, %v3116
        %v3118 = vlaneseq
        %v3119 = vshrl.u32 %v3118, 7
        %v3120 = vsub.s32 1, %v3119
        %v3121 = vrot.slane %v3112, %v3120
        %v3124 = vsel %vm2616, %v3117, 0.0
        %v3125 = vsel %vm2616, %v3121, 0.0
        %v3126 = vadd.f32 %v3124, %v3125
        %3127 = vadd.xlane.f32.xlu0 %v3126
        %v3128 = vpop.xlane.xlu0 %3127
        %vm3129 = vcmp.ne.f32.partialorder %v3050, 0.0
        %v3130 = vsel %vm3129, 1, 0
        %v3131 = vcvt.s32.f32 %v3130
        %v3133 = vlaneseq
        %v3134 = vshrl.u32 %v3133, 7
        %v3135 = vsub.s32 0, %v3134
        %v3136 = vrot.slane %v3131, %v3135
        %v3137 = vlaneseq
        %v3138 = vshrl.u32 %v3137, 7
        %v3139 = vsub.s32 1, %v3138
        %v3140 = vrot.slane %v3131, %v3139
        %v3143 = vsel %vm2616, %v3136, 0.0
        %v3144 = vsel %vm2616, %v3140, 0.0
        %v3145 = vadd.f32 %v3143, %v3144
        %3146 = vadd.xlane.f32.xlu0 %v3145
        %v3147 = vpop.xlane.xlu0 %3146
        %vm3148 = vcmp.ne.f32.partialorder %v3048, 0.0
        %v3149 = vsel %vm3148, 1, 0
        %v3150 = vcvt.s32.f32 %v3149
        %v3152 = vlaneseq
        %v3153 = vshrl.u32 %v3152, 7
        %v3154 = vsub.s32 0, %v3153
        %v3155 = vrot.slane %v3150, %v3154
        %v3156 = vlaneseq
        %v3157 = vshrl.u32 %v3156, 7
        %v3158 = vsub.s32 1, %v3157
        %v3159 = vrot.slane %v3150, %v3158
        %v3162 = vsel %vm2616, %v3155, 0.0
        %v3163 = vsel %vm2616, %v3159, 0.0
        %v3164 = vadd.f32 %v3162, %v3163
        %3165 = vadd.xlane.f32.xlu0 %v3164
        %v3166 = vpop.xlane.xlu0 %3165
        %vm3167 = vcmp.ne.f32.partialorder %v3044, 0.0
        %v3168 = vsel %vm3167, 1, 0
        %v3169 = vcvt.s32.f32 %v3168
        %v3171 = vlaneseq
        %v3172 = vshrl.u32 %v3171, 7
        %v3173 = vsub.s32 0, %v3172
        %v3174 = vrot.slane %v3169, %v3173
        %v3175 = vlaneseq
        %v3176 = vshrl.u32 %v3175, 7
        %v3177 = vsub.s32 1, %v3176
        %v3178 = vrot.slane %v3169, %v3177
        %v3181 = vsel %vm2616, %v3174, 0.0
        %v3182 = vsel %vm2616, %v3178, 0.0
        %v3183 = vadd.f32 %v3181, %v3182
        %3184 = vadd.xlane.f32.xlu0 %v3183
        %v3185 = vpop.xlane.xlu0 %3184
        %vm3186 = vcmp.ne.f32.partialorder %v3046, 0.0
        %v3187 = vsel %vm3186, 1, 0
        %v3188 = vcvt.s32.f32 %v3187
        %v3190 = vlaneseq
        %v3191 = vshrl.u32 %v3190, 7
        %v3192 = vsub.s32 0, %v3191
        %v3193 = vrot.slane %v3188, %v3192
        %v3194 = vlaneseq
        %v3195 = vshrl.u32 %v3194, 7
        %v3196 = vsub.s32 1, %v3195
        %v3197 = vrot.slane %v3188, %v3196
        %v3200 = vsel %vm2616, %v3193, 0.0
        %v3201 = vsel %vm2616, %v3197, 0.0
        %v3202 = vadd.f32 %v3200, %v3201
        %3203 = vadd.xlane.f32.xlu0 %v3202
        %v3204 = vpop.xlane.xlu0 %3203
        %v3205 = vsel %vm3069, %v3058, -1.0
        %v3207 = vlaneseq
        %v3208 = vshrl.u32 %v3207, 7
        %v3209 = vsub.s32 0, %v3208
        %v3210 = vrot.slane %v3205, %v3209
        %v3211 = vlaneseq
        %v3212 = vshrl.u32 %v3211, 7
        %v3213 = vsub.s32 1, %v3212
        %v3214 = vrot.slane %v3205, %v3213
        %v3217 = vsel %vm2616, %v3210, -inf
        %v3218 = vsel %vm2616, %v3214, -inf
        %v3219 = vmax.f32 %v3217, %v3218
        %3220 = vmax.xlane.f32.xlu0 %v3219
        %v3221 = vpop.xlane.xlu0 %3220
        %vm3222 = vcmp.gt.f32.partialorder %v3092, 0.0
        %vm3223 = vcmp.gt.f32.partialorder %v3147, 0.0
        %vm3224 = vmand %vm3222, %vm3223
        %v3225 = vsel %vm3224, %v3221, 8.0
        %v3226 = vsel %vm3071, %v3058, 0.0
        %v3228 = vlaneseq
        %v3229 = vshrl.u32 %v3228, 7
        %v3230 = vsub.s32 0, %v3229
        %v3231 = vrot.slane %v3226, %v3230
        %v3232 = vlaneseq
        %v3233 = vshrl.u32 %v3232, 7
        %v3234 = vsub.s32 1, %v3233
        %v3235 = vrot.slane %v3226, %v3234
        %v3238 = vsel %vm2616, %v3231, 0.0
        %v3239 = vsel %vm2616, %v3235, 0.0
        %v3240 = vadd.f32 %v3238, %v3239
        %3241 = vadd.xlane.f32.xlu0 %v3240
        %v3242 = vpop.xlane.xlu0 %3241
        %v3243 = vsel %vm3074, %v3066, 0.0
        %v3245 = vlaneseq
        %v3246 = vshrl.u32 %v3245, 7
        %v3247 = vsub.s32 0, %v3246
        %v3248 = vrot.slane %v3243, %v3247
        %v3249 = vlaneseq
        %v3250 = vshrl.u32 %v3249, 7
        %v3251 = vsub.s32 1, %v3250
        %v3252 = vrot.slane %v3243, %v3251
        %v3255 = vsel %vm2616, %v3248, 0.0
        %v3256 = vsel %vm2616, %v3252, 0.0
        %v3257 = vadd.f32 %v3255, %v3256
        %3258 = vadd.xlane.f32.xlu0 %v3257
        %v3259 = vpop.xlane.xlu0 %3258
        %vm3260 = vcmp.gt.f32.partialorder %v3110, 0.0
        %vm3261 = vmand %vm3260, %vm3223
        %v3262 = vmax.f32 %v3185, 1.0
        %v3263 = vrcp.pop %v3262
        %v3264 = vmul.f32 %v3242, %v3263
        %v3265 = vsel %vm3261, %v3264, 0.0
        %vm3266 = vcmp.gt.f32.partialorder %v3128, 0.0
        %vm3267 = vcmp.gt.f32.partialorder %v3166, 0.0
        %vm3268 = vmand %vm3266, %vm3267
        %v3269 = vmax.f32 %v3204, 1.0
        %v3270 = vrcp.pop %v3269
        %v3271 = vmul.f32 %v3259, %v3270
        %v3272 = vsel %vm3268, %v3271, 0.0
        %vm3273 = vcmp.gt.f32.partialorder %v3185, 0.0
        %v3274 = vmax.f32 %v3265, %v3272
        %v3275 = vsel %vm3273, %v3274, 8.0
        %v3276 = vsel %vm2805, %v3225, %v3275
        %3277 = vst [vmem:[%s151 + $0x3] sm:$0x1] %v3276
        %s3278 = sand.u32 %s76, 1
        %s3279 = scalar_lea.sflag [#allocation4], %s3278
        %s3280 = sand.u32 %s76, 1
        %s3281 = smul.addr %s3280, 4
        %s3282 = scalar_lea.vmem [#allocation3], %s3281
        // Predicated region
        $region29: #{tpu_custom_call.1} parent=27 // pred_check
          %p3283 = pneg %p86
        $region30: #{tpu_custom_call.1} parent=27 // pred_check_branch
          %3285 = sbr.rel (%p3283) target = $region32
        $region31: #{tpu_custom_call.1} parent=27 // pred_region
          %s3287 = ssub.s32 64, 64
          %3288 = vsyncadd %s3279, %s3287
          %s3289 = smul.addr %s16, 64
          %s3290 = scalar_lea.hbm %s2, %s3289
          %s3292 = sshll.u32 %s3282, 4
          %s3293 = int_to_ptr.vmem [resolvable:$true] %s3292
          %3295 = dma.vmem_to_hbm [thread:$0]  %s3293, 64, %s3290, %s3279
        $region32: #{tpu_custom_call.1} parent=27 // pred_fallthru
          _
      $region28: #{tpu_custom_call.1} parent=5 // pred_fallthru
        _
      %p3296 = scmp.le.s32.totalorder 2, %s11
      // Predicated region
      $region33: #{tpu_custom_call.1} parent=5 // pred_check
        %p3297 = pneg %p3296
      $region34: #{tpu_custom_call.1} parent=5 // pred_check_branch
        %3299 = sbr.rel (%p3297) target = $region36
      $region35: #{tpu_custom_call.1} parent=5 // pred_region
        %s3300 = ssub.s32 %s11, 2
        // Predicated region
        $region37: #{tpu_custom_call.1} parent=35 // pred_check
          %p3301 = pneg %p92
        $region38: #{tpu_custom_call.1} parent=35 // pred_check_branch
          %3303 = sbr.rel (%p3301) target = $region40
        $region39: #{tpu_custom_call.1} parent=35 // pred_region
          %s3304 = sand.u32 %s77, 1
          %s3305 = scalar_lea.sflag [#allocation4], %s3304
          %s3306 = sand.u32 %s77, 1
          %s3307 = smul.addr %s3306, 4
          %s3308 = scalar_lea.vmem [#allocation3], %s3307
          %3309 = dma.done %s3305, 64
        $region40: #{tpu_custom_call.1} parent=35 // pred_fallthru
          _
      $region36: #{tpu_custom_call.1} parent=5 // pred_fallthru
        _
    $region6: #{tpu_custom_call.1} parent=1 // loop_footer
      %s15 = sadd.s32 1, %s11
    $region7: #{tpu_custom_call.1} parent=1 // loop_footer_branch
      %10 = sbr.rel target = $region3
    $region8: #{tpu_custom_call.1} parent=1 // loop_exit
      _
    %3310 = vsyncpa [#allocation4], 1
    %s3311 = scalar_lea.sflag [#allocation4], 1
    %3312 = vsyncpa %s3311, 1

</llo_original>
